<compile_context>
chip_gen: v5e
topology: v5e:2x2
jax: 0.10.0
libtpu: 0.0.40
codegen_flags: <defaults>
</compile_context>

<pallas_src>
import functools

import jax
import jax.numpy as jnp
from jax.experimental import pallas as pl
from jax.experimental.pallas import tpu as pltpu

D_IN, D_H1, D_H2, D_OUT = 3072, 512, 256, 10
D_OUT_PAD = 128  # lane-dense padded output width


def mlp_kernel(x_ref, w1_ref, b1_ref, w2_ref, b2_ref, w3_ref, b3_ref, o_ref):
    # Matmuls on the MXU (bf16 operands, f32 accumulation); bias + ReLU on the VPU.
    x = x_ref[...]  # already bf16 (cast in the wrapper before streaming)
    h1 = jnp.dot(x, w1_ref[...], preferred_element_type=jnp.float32) + b1_ref[...]
    h1 = jnp.maximum(h1, 0.0).astype(jnp.bfloat16)
    h2 = jnp.dot(h1, w2_ref[...], preferred_element_type=jnp.float32) + b2_ref[...]
    h2 = jnp.maximum(h2, 0.0).astype(jnp.bfloat16)
    o_ref[...] = jnp.dot(h2, w3_ref[...], preferred_element_type=jnp.float32) + b3_ref[...]


def pack_params(params):
    """One-time packing: cast weights to bf16, pad final layer to 128 lanes.

    Call this ONCE (outside the per-step forward) and pass the result to
    mlp_forward — avoids re-casting ~1.8M weight elements every call.
    """
    w1, b1, w2, b2, w3, b3 = params
    w1b = w1.astype(jnp.bfloat16)
    w2b = w2.astype(jnp.bfloat16)
    w3p = jnp.zeros((D_H2, D_OUT_PAD), jnp.float32).at[:, :D_OUT].set(w3)
    w3b = w3p.astype(jnp.bfloat16)
    b3p = jnp.zeros((1, D_OUT_PAD), jnp.float32).at[:, :D_OUT].set(b3)
    return (w1b, b1.astype(jnp.float32), w2b, b2.astype(jnp.float32), w3b, b3p)


def _pick_tile_b(B):
    """Batch-tile selection: multiples of 16 (bf16 sublane packing); big tiles
    at large B to amortize per-step overhead; >=2 tiles when feasible so the
    'parallel' grid axis can land on both v7x TensorCores."""
    if B >= 1024:
        return 512
    if B >= 512:
        return 256
    if B >= 256:
        return 128
    if B > 16:
        half = -(-B // 2)                 # split into 2 tiles for megacore
        return max(16, -(-half // 16) * 16)
    return 16


@functools.partial(jax.jit, static_argnames=("tile_b",))
def mlp_forward(x, packed_params, tile_b=None):
    """x: (B, 3, 32, 32) float32 (or already-flat (B, 3072)). Returns (B, 10) f32.

    packed_params: output of pack_params(params)."""
    B = x.shape[0]
    x_flat = x.reshape(B, -1).astype(jnp.bfloat16)  # bf16 activations stream from HBM
    assert x_flat.shape[1] == D_IN, f"expected {D_IN} features, got {x_flat.shape[1]}"

    if tile_b is None:
        tile_b = _pick_tile_b(B)
    B_pad = pl.cdiv(B, tile_b) * tile_b
    if B_pad != B:
        x_flat = jnp.pad(x_flat, ((0, B_pad - B), (0, 0)))

    w1b, b1, w2b, b2, w3b, b3p = packed_params

    grid = (B_pad // tile_b,)
    out = pl.pallas_call(
        mlp_kernel,
        out_shape=jax.ShapeDtypeStruct((B_pad, D_OUT_PAD), jnp.float32),
        grid=grid,
        in_specs=[
            # x tiles stream over the batch grid (double-buffered by Pallas).
            pl.BlockSpec((tile_b, D_IN), lambda i: (i, 0)),
            # Weights / biases: constant index_map -> fetched once, VMEM-resident.
            # Buffered(1): no point double-buffering blocks that never change.
            pl.BlockSpec((D_IN, D_H1), lambda i: (0, 0), pipeline_mode=pl.Buffered(1)),
            pl.BlockSpec((1, D_H1), lambda i: (0, 0), pipeline_mode=pl.Buffered(1)),
            pl.BlockSpec((D_H1, D_H2), lambda i: (0, 0), pipeline_mode=pl.Buffered(1)),
            pl.BlockSpec((1, D_H2), lambda i: (0, 0), pipeline_mode=pl.Buffered(1)),
            pl.BlockSpec((D_H2, D_OUT_PAD), lambda i: (0, 0), pipeline_mode=pl.Buffered(1)),
            pl.BlockSpec((1, D_OUT_PAD), lambda i: (0, 0), pipeline_mode=pl.Buffered(1)),
        ],
        out_specs=pl.BlockSpec((tile_b, D_OUT_PAD), lambda i: (i, 0)),
        compiler_params=pltpu.CompilerParams(
            dimension_semantics=("parallel",),   # batch tiles split across TCs (v7x)
            vmem_limit_bytes=32 * 1024 * 1024,   # sized against v7x's 64 MiB physical VMEM
        ),
    )(x_flat, w1b, b1, w2b, b2, w3b, b3p)

    return out[:B, :D_OUT]


def init_params(key):
    """Deterministic init matching nn.Linear shapes (stored transposed, f32)."""
    dims = [(D_IN, D_H1), (D_H1, D_H2), (D_H2, D_OUT)]
    params = []
    for i, (din, dout) in enumerate(dims):
        kw, kb = jax.random.split(jax.random.fold_in(key, i))
        bound = 1.0 / jnp.sqrt(din)
        w = jax.random.uniform(kw, (din, dout), jnp.float32, -bound, bound)
        b = jax.random.uniform(kb, (1, dout), jnp.float32, -bound, bound)
        params.extend([w, b])
    return tuple(params)


if __name__ == "__main__":
    key = jax.random.PRNGKey(0)
    kx, kp = jax.random.split(key)

    # Small CIFAR-like batch: (B, C, H, W) = (2, 3, 32, 32) -> 3072 features
    x = jax.random.normal(kx, (2, 3, 32, 32), dtype=jnp.float32)
    params = init_params(kp)

    # Pack params once (bf16 cast + lane padding), then run the kernel.
    packed = pack_params(params)
    out = mlp_forward(x, packed)
    out = jax.block_until_ready(out)

    # Pure-JAX reference using identical bf16 quantization / f32 accumulation.
    x_flat = x.reshape(x.shape[0], -1).astype(jnp.bfloat16)
    w1, b1, w2, b2, w3, b3 = params
    w1b = w1.astype(jnp.bfloat16)
    w2b = w2.astype(jnp.bfloat16)
    w3b = w3.astype(jnp.bfloat16)
    ref = jnp.maximum(
        jnp.dot(x_flat, w1b, preferred_element_type=jnp.float32) + b1, 0.0)
    ref = jnp.maximum(
        jnp.dot(ref.astype(jnp.bfloat16), w2b, preferred_element_type=jnp.float32) + b2, 0.0)
    ref = jnp.dot(ref.astype(jnp.bfloat16), w3b, preferred_element_type=jnp.float32) + b3

    assert out.shape == (2, 10) and out.dtype == jnp.float32
    assert jnp.allclose(out, ref, atol=2e-2, rtol=2e-2), (
        f"max abs diff {jnp.max(jnp.abs(out - ref))}")

    print("KERNEL_OK")
</pallas_src>

<mosaic_0001>
module attributes {stable_mosaic.version = 11 : i64} {
  func.func @mlp_kernel(%arg0: i32, %arg1: memref<16x3072xbf16, #tpu.memory_space<vmem>>, %arg2: memref<3072x512xbf16, #tpu.memory_space<vmem>>, %arg3: memref<1x512xf32, #tpu.memory_space<vmem>>, %arg4: memref<512x256xbf16, #tpu.memory_space<vmem>>, %arg5: memref<1x256xf32, #tpu.memory_space<vmem>>, %arg6: memref<256x128xbf16, #tpu.memory_space<vmem>>, %arg7: memref<1x128xf32, #tpu.memory_space<vmem>>, %arg8: memref<16x128xf32, #tpu.memory_space<vmem>>) attributes {dimension_semantics = [#tpu.dimension_semantics<parallel>], iteration_bounds = array<i64: 1>, scalar_prefetch = 0 : i64, scratch_operands = 0 : i64, tpu.core_type = #tpu.core_type<tc>, window_params = [{transform_indices = @transform_0, window_bounds = array<i64: 16, 3072>}, {pipeline_mode = #tpu.pipeline_mode<synchronous>, transform_indices = @transform_1, window_bounds = array<i64: 3072, 512>}, {pipeline_mode = #tpu.pipeline_mode<synchronous>, transform_indices = @transform_2, window_bounds = array<i64: 1, 512>}, {pipeline_mode = #tpu.pipeline_mode<synchronous>, transform_indices = @transform_3, window_bounds = array<i64: 512, 256>}, {pipeline_mode = #tpu.pipeline_mode<synchronous>, transform_indices = @transform_4, window_bounds = array<i64: 1, 256>}, {pipeline_mode = #tpu.pipeline_mode<synchronous>, transform_indices = @transform_5, window_bounds = array<i64: 256, 128>}, {pipeline_mode = #tpu.pipeline_mode<synchronous>, transform_indices = @transform_6, window_bounds = array<i64: 1, 128>}, {transform_indices = @transform_7, window_bounds = array<i64: 16, 128>}]} {
    %c0 = arith.constant 0 : index
    %c0_0 = arith.constant 0 : index
    %0 = vector.load %arg1[%c0, %c0_0] : memref<16x3072xbf16, #tpu.memory_space<vmem>>, vector<16x3072xbf16>
    %c0_1 = arith.constant 0 : index
    %c0_2 = arith.constant 0 : index
    %1 = vector.load %arg2[%c0_1, %c0_2] : memref<3072x512xbf16, #tpu.memory_space<vmem>>, vector<3072x512xbf16>
    %cst = arith.constant dense<0.000000e+00> : vector<16x512xf32>
    %2 = tpu.matmul %0, %1, %cst {dimension_numbers = #tpu.dot_dimension_numbers<[1], [0], [0], [1], [0, 0, 1, 1], [], []>} : vector<16x3072xbf16>, vector<3072x512xbf16>, vector<16x512xf32> -> vector<16x512xf32>
    %c0_3 = arith.constant 0 : index
    %c0_4 = arith.constant 0 : index
    %3 = vector.load %arg3[%c0_3, %c0_4] : memref<1x512xf32, #tpu.memory_space<vmem>>, vector<1x512xf32>
    %4 = vector.broadcast %3 : vector<1x512xf32> to vector<16x512xf32>
    %5 = arith.addf %2, %4 : vector<16x512xf32>
    %cst_5 = arith.constant 0.000000e+00 : f32
    %6 = vector.broadcast %cst_5 : f32 to vector<16x512xf32>
    %7 = arith.maximumf %5, %6 : vector<16x512xf32>
    %8 = arith.truncf %7 : vector<16x512xf32> to vector<16x512xbf16>
    %c0_6 = arith.constant 0 : index
    %c0_7 = arith.constant 0 : index
    %9 = vector.load %arg4[%c0_6, %c0_7] : memref<512x256xbf16, #tpu.memory_space<vmem>>, vector<512x256xbf16>
    %cst_8 = arith.constant dense<0.000000e+00> : vector<16x256xf32>
    %10 = tpu.matmul %8, %9, %cst_8 {dimension_numbers = #tpu.dot_dimension_numbers<[1], [0], [0], [1], [0, 0, 1, 1], [], []>} : vector<16x512xbf16>, vector<512x256xbf16>, vector<16x256xf32> -> vector<16x256xf32>
    %c0_9 = arith.constant 0 : index
    %c0_10 = arith.constant 0 : index
    %11 = vector.load %arg5[%c0_9, %c0_10] : memref<1x256xf32, #tpu.memory_space<vmem>>, vector<1x256xf32>
    %12 = vector.broadcast %11 : vector<1x256xf32> to vector<16x256xf32>
    %13 = arith.addf %10, %12 : vector<16x256xf32>
    %cst_11 = arith.constant 0.000000e+00 : f32
    %14 = vector.broadcast %cst_11 : f32 to vector<16x256xf32>
    %15 = arith.maximumf %13, %14 : vector<16x256xf32>
    %16 = arith.truncf %15 : vector<16x256xf32> to vector<16x256xbf16>
    %c0_12 = arith.constant 0 : index
    %c0_13 = arith.constant 0 : index
    %17 = vector.load %arg6[%c0_12, %c0_13] : memref<256x128xbf16, #tpu.memory_space<vmem>>, vector<256x128xbf16>
    %cst_14 = arith.constant dense<0.000000e+00> : vector<16x128xf32>
    %18 = tpu.matmul %16, %17, %cst_14 {dimension_numbers = #tpu.dot_dimension_numbers<[1], [0], [0], [1], [0, 0, 1, 1], [], []>} : vector<16x256xbf16>, vector<256x128xbf16>, vector<16x128xf32> -> vector<16x128xf32>
    %c0_15 = arith.constant 0 : index
    %c0_16 = arith.constant 0 : index
    %19 = vector.load %arg7[%c0_15, %c0_16] : memref<1x128xf32, #tpu.memory_space<vmem>>, vector<1x128xf32>
    %20 = vector.broadcast %19 : vector<1x128xf32> to vector<16x128xf32>
    %21 = arith.addf %18, %20 : vector<16x128xf32>
    %c0_17 = arith.constant 0 : index
    %c0_18 = arith.constant 0 : index
    %22 = vector.load %arg8[%c0_17, %c0_18] : memref<16x128xf32, #tpu.memory_space<vmem>>, vector<16x128xf32>
    tpu.vector_store %arg8[%c0_17, %c0_18], %21 {strides = array<i32>} : memref<16x128xf32, #tpu.memory_space<vmem>>, vector<16x128xf32>,
    return
  }
  func.func @transform_0(%arg0: i32) -> (i32, i32) {
    %c0_i32 = arith.constant 0 : i32
    %c0_i32_0 = arith.constant 0 : i32
    return %arg0, %c0_i32 : i32, i32
  }
  func.func @transform_1(%arg0: i32) -> (i32, i32) {
    %c0_i32 = arith.constant 0 : i32
    %c0_i32_0 = arith.constant 0 : i32
    %c0_i32_1 = arith.constant 0 : i32
    return %c0_i32, %c0_i32_0 : i32, i32
  }
  func.func @transform_2(%arg0: i32) -> (i32, i32) {
    %c0_i32 = arith.constant 0 : i32
    %c0_i32_0 = arith.constant 0 : i32
    %c0_i32_1 = arith.constant 0 : i32
    return %c0_i32, %c0_i32_0 : i32, i32
  }
  func.func @transform_3(%arg0: i32) -> (i32, i32) {
    %c0_i32 = arith.constant 0 : i32
    %c0_i32_0 = arith.constant 0 : i32
    %c0_i32_1 = arith.constant 0 : i32
    return %c0_i32, %c0_i32_0 : i32, i32
  }
  func.func @transform_4(%arg0: i32) -> (i32, i32) {
    %c0_i32 = arith.constant 0 : i32
    %c0_i32_0 = arith.constant 0 : i32
    %c0_i32_1 = arith.constant 0 : i32
    return %c0_i32, %c0_i32_0 : i32, i32
  }
  func.func @transform_5(%arg0: i32) -> (i32, i32) {
    %c0_i32 = arith.constant 0 : i32
    %c0_i32_0 = arith.constant 0 : i32
    %c0_i32_1 = arith.constant 0 : i32
    return %c0_i32, %c0_i32_0 : i32, i32
  }
  func.func @transform_6(%arg0: i32) -> (i32, i32) {
    %c0_i32 = arith.constant 0 : i32
    %c0_i32_0 = arith.constant 0 : i32
    %c0_i32_1 = arith.constant 0 : i32
    return %c0_i32, %c0_i32_0 : i32, i32
  }
  func.func @transform_7(%arg0: i32) -> (i32, i32) {
    %c0_i32 = arith.constant 0 : i32
    %c0_i32_0 = arith.constant 0 : i32
    return %arg0, %c0_i32 : i32, i32
  }
}

</mosaic_0001>

<llo_original>
// kernel: mlp_forward.1
$region0: #{mlp_forward.1}
  #allocation0 [shape = 'u32[]', space=smem, size = 0x4, offset = 0x4, fixed_abs, tag = 'smem constant byte address 0x4 - core index']
  #allocation1 [shape = 'u32[72,128]{1,0:T(1,128)}', space=vmem, size = 0x9000, scoped, tag = 'internal scratch']
  %s0 = inlined_call_operand.vmem [shape: bf16[16,3072], index: 0, kind: input, shape index: {}]
  %s1 = inlined_call_operand.hbm [shape: bf16[3072,512], index: 1, kind: input, shape index: {}]
  %s2 = inlined_call_operand.hbm [shape: f32[1,512], index: 2, kind: input, shape index: {}]
  %s3 = inlined_call_operand.hbm [shape: bf16[512,256], index: 3, kind: input, shape index: {}]
  %s4 = inlined_call_operand.hbm [shape: f32[1,256], index: 4, kind: input, shape index: {}]
  %s5 = inlined_call_operand.hbm [shape: bf16[256,128], index: 5, kind: input, shape index: {}]
  %s6 = inlined_call_operand.hbm [shape: f32[1,128], index: 6, kind: input, shape index: {}]
  %s7 = inlined_call_operand.vmem [shape: f32[16,128], index: 7, kind: output, shape index: {}]
  %s8 = sld [smem:[#allocation0]]
  $region62: #{mlp_forward.1} parent=0
    _
  %s10 = ssub.s32 1, %s8
  %s11 = scalar_select 0, %s10, %s8
  $region1: #{mlp_forward.1} parent=0
    #allocation2 [shape = 'u8[3145728]{0}', space=vmem, size = 0x300000, scoped, tag = 'input window, operand 1, single buffered']
    #allocation3 [shape = 's32[1]{0}', space=sflag, size = 0x4, scoped, tag = 'scoped memory for mlp_forward.1']
    #allocation4 [shape = 'u8[2048]{0}', space=vmem, size = 0x800, scoped, tag = 'input window, operand 2, single buffered']
    #allocation5 [shape = 's32[1]{0}', space=sflag, size = 0x4, scoped, tag = 'scoped memory for mlp_forward.1']
    #allocation6 [shape = 'u8[262144]{0}', space=vmem, size = 0x40000, scoped, tag = 'input window, operand 3, single buffered']
    #allocation7 [shape = 'u8[1024]{0}', space=vmem, size = 0x400, scoped, tag = 'input window, operand 4, single buffered']
    #allocation8 [shape = 's32[1]{0}', space=sflag, size = 0x4, scoped, tag = 'scoped memory for mlp_forward.1']
    #allocation9 [shape = 'u8[65536]{0}', space=vmem, size = 0x10000, scoped, tag = 'input window, operand 5, single buffered']
    #allocation10 [shape = 'u8[512]{0}', space=vmem, size = 0x400, scoped, tag = 'input window, operand 6, single buffered']
    #allocation11 [shape = 's32[1]{0}', space=sflag, size = 0x4, scoped, tag = 'scoped memory for mlp_forward.1']
    %12 = vsyncpa [#allocation3], 0
    %13 = vsyncpa [#allocation5], 0
    %14 = vsyncpa [#allocation8], 0
    %15 = vsyncpa [#allocation11], 0
    // Predicated region
    $region2: #{mlp_forward.1} parent=1 // pred_check
      _
    $region3: #{mlp_forward.1} parent=1 // pred_check_branch
      %17 = sbr.rel (0) target = $region5
    $region4: #{mlp_forward.1} parent=1 // pred_region
      _
    $region5: #{mlp_forward.1} parent=1 // pred_fallthru
      _
    // Predicated region
    $region6: #{mlp_forward.1} parent=1 // pred_check
      _
    $region7: #{mlp_forward.1} parent=1 // pred_check_branch
      %19 = sbr.rel (0) target = $region9
    $region8: #{mlp_forward.1} parent=1 // pred_region
      %21 = vsyncadd [#allocation3], 0
      %s22 = sshll.u32 %s1, 4
      %s23 = int_to_ptr.hbm [resolvable:$true] %s22
      %s24 = sshll.u32 [#allocation2], 4
      %s25 = int_to_ptr.vmem [resolvable:$true] %s24
      %30 = dma.hbm_to_vmem [thread:$0]  %s23, 98304, %s25, [#allocation3], 256, 256, 16
    $region9: #{mlp_forward.1} parent=1 // pred_fallthru
      _
    // Predicated region
    $region10: #{mlp_forward.1} parent=1 // pred_check
      _
    $region11: #{mlp_forward.1} parent=1 // pred_check_branch
      %32 = sbr.rel (0) target = $region13
    $region12: #{mlp_forward.1} parent=1 // pred_region
      %34 = vsyncadd [#allocation5], 0
      %s36 = sshll.u32 %s2, 4
      %s37 = int_to_ptr.hbm [resolvable:$true] %s36
      %s38 = sshll.u32 [#allocation4], 4
      %s39 = int_to_ptr.vmem [resolvable:$true] %s38
      %41 = dma.hbm_to_vmem [thread:$0]  %s37, 64, %s39, [#allocation5]
    $region13: #{mlp_forward.1} parent=1 // pred_fallthru
      _
    // Predicated region
    $region14: #{mlp_forward.1} parent=1 // pred_check
      _
    $region15: #{mlp_forward.1} parent=1 // pred_check_branch
      %43 = sbr.rel (0) target = $region17
    $region16: #{mlp_forward.1} parent=1 // pred_region
      %45 = vsyncadd [#allocation5], 0
      %s46 = sshll.u32 %s3, 4
      %s47 = int_to_ptr.hbm [resolvable:$true] %s46
      %s48 = sshll.u32 [#allocation6], 4
      %s49 = int_to_ptr.vmem [resolvable:$true] %s48
      %54 = dma.hbm_to_vmem [thread:$0]  %s47, 8192, %s49, [#allocation5], 128, 128, 8
    $region17: #{mlp_forward.1} parent=1 // pred_fallthru
      _
    // Predicated region
    $region18: #{mlp_forward.1} parent=1 // pred_check
      _
    $region19: #{mlp_forward.1} parent=1 // pred_check_branch
      %56 = sbr.rel (0) target = $region21
    $region20: #{mlp_forward.1} parent=1 // pred_region
      %58 = vsyncadd [#allocation8], 0
      %s60 = sshll.u32 %s4, 4
      %s61 = int_to_ptr.hbm [resolvable:$true] %s60
      %s62 = sshll.u32 [#allocation7], 4
      %s63 = int_to_ptr.vmem [resolvable:$true] %s62
      %65 = dma.hbm_to_vmem [thread:$0]  %s61, 32, %s63, [#allocation8]
    $region21: #{mlp_forward.1} parent=1 // pred_fallthru
      _
    // Predicated region
    $region22: #{mlp_forward.1} parent=1 // pred_check
      _
    $region23: #{mlp_forward.1} parent=1 // pred_check_branch
      %67 = sbr.rel (0) target = $region25
    $region24: #{mlp_forward.1} parent=1 // pred_region
      %69 = vsyncadd [#allocation8], 0
      %s70 = sshll.u32 %s5, 4
      %s71 = int_to_ptr.hbm [resolvable:$true] %s70
      %s72 = sshll.u32 [#allocation9], 4
      %s73 = int_to_ptr.vmem [resolvable:$true] %s72
      %78 = dma.hbm_to_vmem [thread:$0]  %s71, 2048, %s73, [#allocation8], 64, 64, 4
    $region25: #{mlp_forward.1} parent=1 // pred_fallthru
      _
    // Predicated region
    $region26: #{mlp_forward.1} parent=1 // pred_check
      _
    $region27: #{mlp_forward.1} parent=1 // pred_check_branch
      %80 = sbr.rel (0) target = $region29
    $region28: #{mlp_forward.1} parent=1 // pred_region
      %82 = vsyncadd [#allocation11], 0
      %s84 = sshll.u32 %s6, 4
      %s85 = int_to_ptr.hbm [resolvable:$true] %s84
      %s86 = sshll.u32 [#allocation10], 4
      %s87 = int_to_ptr.vmem [resolvable:$true] %s86
      %89 = dma.hbm_to_vmem [thread:$0]  %s85, 16, %s87, [#allocation11]
    $region29: #{mlp_forward.1} parent=1 // pred_fallthru
      _
    // Predicated region
    $region30: #{mlp_forward.1} parent=1 // pred_check
      _
    $region31: #{mlp_forward.1} parent=1 // pred_check_branch
      %91 = sbr.rel (0) target = $region33
    $region32: #{mlp_forward.1} parent=1 // pred_region
      %93 = dma.done [#allocation3], 98304
    $region33: #{mlp_forward.1} parent=1 // pred_fallthru
      _
    // Predicated region
    $region34: #{mlp_forward.1} parent=1 // pred_check
      _
    $region35: #{mlp_forward.1} parent=1 // pred_check_branch
      %95 = sbr.rel (0) target = $region37
    $region36: #{mlp_forward.1} parent=1 // pred_region
      %97 = dma.done [#allocation5], 64
    $region37: #{mlp_forward.1} parent=1 // pred_fallthru
      _
    // Predicated region
    $region38: #{mlp_forward.1} parent=1 // pred_check
      _
    $region39: #{mlp_forward.1} parent=1 // pred_check_branch
      %99 = sbr.rel (0) target = $region41
    $region40: #{mlp_forward.1} parent=1 // pred_region
      %101 = dma.done [#allocation5], 8192
    $region41: #{mlp_forward.1} parent=1 // pred_fallthru
      _
    // Predicated region
    $region42: #{mlp_forward.1} parent=1 // pred_check
      _
    $region43: #{mlp_forward.1} parent=1 // pred_check_branch
      %103 = sbr.rel (0) target = $region45
    $region44: #{mlp_forward.1} parent=1 // pred_region
      %105 = dma.done [#allocation8], 32
    $region45: #{mlp_forward.1} parent=1 // pred_fallthru
      _
    // Predicated region
    $region46: #{mlp_forward.1} parent=1 // pred_check
      _
    $region47: #{mlp_forward.1} parent=1 // pred_check_branch
      %107 = sbr.rel (0) target = $region49
    $region48: #{mlp_forward.1} parent=1 // pred_region
      %109 = dma.done [#allocation8], 2048
    $region49: #{mlp_forward.1} parent=1 // pred_fallthru
      _
    // Predicated region
    $region50: #{mlp_forward.1} parent=1 // pred_check
      _
    $region51: #{mlp_forward.1} parent=1 // pred_check_branch
      %111 = sbr.rel (0) target = $region53
    $region52: #{mlp_forward.1} parent=1 // pred_region
      %113 = dma.done [#allocation11], 16
    $region53: #{mlp_forward.1} parent=1 // pred_fallthru
      _
    %v114 = vld [vmem:[%s0] sm:$0xff]
    %v115 = vld [vmem:[%s0 + $0x8] sm:$0xff]
    %v116 = vld [vmem:[%s0 + $0x10] sm:$0xff]
    %v117 = vld [vmem:[%s0 + $0x18] sm:$0xff]
    %v118 = vld [vmem:[%s0 + $0x20] sm:$0xff]
    %v119 = vld [vmem:[%s0 + $0x28] sm:$0xff]
    %v120 = vld [vmem:[%s0 + $0x30] sm:$0xff]
    %v121 = vld [vmem:[%s0 + $0x38] sm:$0xff]
    %v122 = vld [vmem:[%s0 + $0x40] sm:$0xff]
    %v123 = vld [vmem:[%s0 + $0x48] sm:$0xff]
    %v124 = vld [vmem:[%s0 + $0x50] sm:$0xff]
    %v125 = vld [vmem:[%s0 + $0x58] sm:$0xff]
    %v126 = vld [vmem:[%s0 + $0x60] sm:$0xff]
    %v127 = vld [vmem:[%s0 + $0x68] sm:$0xff]
    %v128 = vld [vmem:[%s0 + $0x70] sm:$0xff]
    %v129 = vld [vmem:[%s0 + $0x78] sm:$0xff]
    %v130 = vld [vmem:[%s0 + $0x80] sm:$0xff]
    %v131 = vld [vmem:[%s0 + $0x88] sm:$0xff]
    %v132 = vld [vmem:[%s0 + $0x90] sm:$0xff]
    %v133 = vld [vmem:[%s0 + $0x98] sm:$0xff]
    %v134 = vld [vmem:[%s0 + $0xa0] sm:$0xff]
    %v135 = vld [vmem:[%s0 + $0xa8] sm:$0xff]
    %v136 = vld [vmem:[%s0 + $0xb0] sm:$0xff]
    %v137 = vld [vmem:[%s0 + $0xb8] sm:$0xff]
    %v138 = vld [vmem:[#allocation2] sm:$0xff]
    %v139 = vld [vmem:[#allocation2 + $0x8] sm:$0xff]
    %v140 = vld [vmem:[#allocation2 + $0x10] sm:$0xff]
    %v141 = vld [vmem:[#allocation2 + $0x18] sm:$0xff]
    %v142 = vld [vmem:[#allocation2 + $0x20] sm:$0xff]
    %v143 = vld [vmem:[#allocation2 + $0x28] sm:$0xff]
    %v144 = vld [vmem:[#allocation2 + $0x30] sm:$0xff]
    %v145 = vld [vmem:[#allocation2 + $0x38] sm:$0xff]
    %v146 = vld [vmem:[#allocation2 + $0x40] sm:$0xff]
    %v147 = vld [vmem:[#allocation2 + $0x48] sm:$0xff]
    %v148 = vld [vmem:[#allocation2 + $0x50] sm:$0xff]
    %v149 = vld [vmem:[#allocation2 + $0x58] sm:$0xff]
    %v150 = vld [vmem:[#allocation2 + $0x60] sm:$0xff]
    %v151 = vld [vmem:[#allocation2 + $0x68] sm:$0xff]
    %v152 = vld [vmem:[#allocation2 + $0x70] sm:$0xff]
    %v153 = vld [vmem:[#allocation2 + $0x78] sm:$0xff]
    %v154 = vld [vmem:[#allocation2 + $0x80] sm:$0xff]
    %v155 = vld [vmem:[#allocation2 + $0x88] sm:$0xff]
    %v156 = vld [vmem:[#allocation2 + $0x90] sm:$0xff]
    %v157 = vld [vmem:[#allocation2 + $0x98] sm:$0xff]
    %v158 = vld [vmem:[#allocation2 + $0xa0] sm:$0xff]
    %v159 = vld [vmem:[#allocation2 + $0xa8] sm:$0xff]
    %v160 = vld [vmem:[#allocation2 + $0xb0] sm:$0xff]
    %v161 = vld [vmem:[#allocation2 + $0xb8] sm:$0xff]
    %v162 = vld [vmem:[#allocation2 + $0xc0] sm:$0xff]
    %v163 = vld [vmem:[#allocation2 + $0xc8] sm:$0xff]
    %v164 = vld [vmem:[#allocation2 + $0xd0] sm:$0xff]
    %v165 = vld [vmem:[#allocation2 + $0xd8] sm:$0xff]
    %v166 = vld [vmem:[#allocation2 + $0xe0] sm:$0xff]
    %v167 = vld [vmem:[#allocation2 + $0xe8] sm:$0xff]
    %v168 = vld [vmem:[#allocation2 + $0xf0] sm:$0xff]
    %v169 = vld [vmem:[#allocation2 + $0xf8] sm:$0xff]
    %v170 = vld [vmem:[#allocation2 + $0x100] sm:$0xff]
    %v171 = vld [vmem:[#allocation2 + $0x108] sm:$0xff]
    %v172 = vld [vmem:[#allocation2 + $0x110] sm:$0xff]
    %v173 = vld [vmem:[#allocation2 + $0x118] sm:$0xff]
    %v174 = vld [vmem:[#allocation2 + $0x120] sm:$0xff]
    %v175 = vld [vmem:[#allocation2 + $0x128] sm:$0xff]
    %v176 = vld [vmem:[#allocation2 + $0x130] sm:$0xff]
    %v177 = vld [vmem:[#allocation2 + $0x138] sm:$0xff]
    %v178 = vld [vmem:[#allocation2 + $0x140] sm:$0xff]
    %v179 = vld [vmem:[#allocation2 + $0x148] sm:$0xff]
    %v180 = vld [vmem:[#allocation2 + $0x150] sm:$0xff]
    %v181 = vld [vmem:[#allocation2 + $0x158] sm:$0xff]
    %v182 = vld [vmem:[#allocation2 + $0x160] sm:$0xff]
    %v183 = vld [vmem:[#allocation2 + $0x168] sm:$0xff]
    %v184 = vld [vmem:[#allocation2 + $0x170] sm:$0xff]
    %v185 = vld [vmem:[#allocation2 + $0x178] sm:$0xff]
    %v186 = vld [vmem:[#allocation2 + $0x180] sm:$0xff]
    %v187 = vld [vmem:[#allocation2 + $0x188] sm:$0xff]
    %v188 = vld [vmem:[#allocation2 + $0x190] sm:$0xff]
    %v189 = vld [vmem:[#allocation2 + $0x198] sm:$0xff]
    %v190 = vld [vmem:[#allocation2 + $0x1a0] sm:$0xff]
    %v191 = vld [vmem:[#allocation2 + $0x1a8] sm:$0xff]
    %v192 = vld [vmem:[#allocation2 + $0x1b0] sm:$0xff]
    %v193 = vld [vmem:[#allocation2 + $0x1b8] sm:$0xff]
    %v194 = vld [vmem:[#allocation2 + $0x1c0] sm:$0xff]
    %v195 = vld [vmem:[#allocation2 + $0x1c8] sm:$0xff]
    %v196 = vld [vmem:[#allocation2 + $0x1d0] sm:$0xff]
    %v197 = vld [vmem:[#allocation2 + $0x1d8] sm:$0xff]
    %v198 = vld [vmem:[#allocation2 + $0x1e0] sm:$0xff]
    %v199 = vld [vmem:[#allocation2 + $0x1e8] sm:$0xff]
    %v200 = vld [vmem:[#allocation2 + $0x1f0] sm:$0xff]
    %v201 = vld [vmem:[#allocation2 + $0x1f8] sm:$0xff]
    %v202 = vld [vmem:[#allocation2 + $0x200] sm:$0xff]
    %v203 = vld [vmem:[#allocation2 + $0x208] sm:$0xff]
    %v204 = vld [vmem:[#allocation2 + $0x210] sm:$0xff]
    %v205 = vld [vmem:[#allocation2 + $0x218] sm:$0xff]
    %v206 = vld [vmem:[#allocation2 + $0x220] sm:$0xff]
    %v207 = vld [vmem:[#allocation2 + $0x228] sm:$0xff]
    %v208 = vld [vmem:[#allocation2 + $0x230] sm:$0xff]
    %v209 = vld [vmem:[#allocation2 + $0x238] sm:$0xff]
    %v210 = vld [vmem:[#allocation2 + $0x240] sm:$0xff]
    %v211 = vld [vmem:[#allocation2 + $0x248] sm:$0xff]
    %v212 = vld [vmem:[#allocation2 + $0x250] sm:$0xff]
    %v213 = vld [vmem:[#allocation2 + $0x258] sm:$0xff]
    %v214 = vld [vmem:[#allocation2 + $0x260] sm:$0xff]
    %v215 = vld [vmem:[#allocation2 + $0x268] sm:$0xff]
    %v216 = vld [vmem:[#allocation2 + $0x270] sm:$0xff]
    %v217 = vld [vmem:[#allocation2 + $0x278] sm:$0xff]
    %v218 = vld [vmem:[#allocation2 + $0x280] sm:$0xff]
    %v219 = vld [vmem:[#allocation2 + $0x288] sm:$0xff]
    %v220 = vld [vmem:[#allocation2 + $0x290] sm:$0xff]
    %v221 = vld [vmem:[#allocation2 + $0x298] sm:$0xff]
    %v222 = vld [vmem:[#allocation2 + $0x2a0] sm:$0xff]
    %v223 = vld [vmem:[#allocation2 + $0x2a8] sm:$0xff]
    %v224 = vld [vmem:[#allocation2 + $0x2b0] sm:$0xff]
    %v225 = vld [vmem:[#allocation2 + $0x2b8] sm:$0xff]
    %v226 = vld [vmem:[#allocation2 + $0x2c0] sm:$0xff]
    %v227 = vld [vmem:[#allocation2 + $0x2c8] sm:$0xff]
    %v228 = vld [vmem:[#allocation2 + $0x2d0] sm:$0xff]
    %v229 = vld [vmem:[#allocation2 + $0x2d8] sm:$0xff]
    %v230 = vld [vmem:[#allocation2 + $0x2e0] sm:$0xff]
    %v231 = vld [vmem:[#allocation2 + $0x2e8] sm:$0xff]
    %v232 = vld [vmem:[#allocation2 + $0x2f0] sm:$0xff]
    %v233 = vld [vmem:[#allocation2 + $0x2f8] sm:$0xff]
    %v234 = vld [vmem:[#allocation2 + $0x300] sm:$0xff]
    %v235 = vld [vmem:[#allocation2 + $0x308] sm:$0xff]
    %v236 = vld [vmem:[#allocation2 + $0x310] sm:$0xff]
    %v237 = vld [vmem:[#allocation2 + $0x318] sm:$0xff]
    %v238 = vld [vmem:[#allocation2 + $0x320] sm:$0xff]
    %v239 = vld [vmem:[#allocation2 + $0x328] sm:$0xff]
    %v240 = vld [vmem:[#allocation2 + $0x330] sm:$0xff]
    %v241 = vld [vmem:[#allocation2 + $0x338] sm:$0xff]
    %v242 = vld [vmem:[#allocation2 + $0x340] sm:$0xff]
    %v243 = vld [vmem:[#allocation2 + $0x348] sm:$0xff]
    %v244 = vld [vmem:[#allocation2 + $0x350] sm:$0xff]
    %v245 = vld [vmem:[#allocation2 + $0x358] sm:$0xff]
    %v246 = vld [vmem:[#allocation2 + $0x360] sm:$0xff]
    %v247 = vld [vmem:[#allocation2 + $0x368] sm:$0xff]
    %v248 = vld [vmem:[#allocation2 + $0x370] sm:$0xff]
    %v249 = vld [vmem:[#allocation2 + $0x378] sm:$0xff]
    %v250 = vld [vmem:[#allocation2 + $0x380] sm:$0xff]
    %v251 = vld [vmem:[#allocation2 + $0x388] sm:$0xff]
    %v252 = vld [vmem:[#allocation2 + $0x390] sm:$0xff]
    %v253 = vld [vmem:[#allocation2 + $0x398] sm:$0xff]
    %v254 = vld [vmem:[#allocation2 + $0x3a0] sm:$0xff]
    %v255 = vld [vmem:[#allocation2 + $0x3a8] sm:$0xff]
    %v256 = vld [vmem:[#allocation2 + $0x3b0] sm:$0xff]
    %v257 = vld [vmem:[#allocation2 + $0x3b8] sm:$0xff]
    %v258 = vld [vmem:[#allocation2 + $0x3c0] sm:$0xff]
    %v259 = vld [vmem:[#allocation2 + $0x3c8] sm:$0xff]
    %v260 = vld [vmem:[#allocation2 + $0x3d0] sm:$0xff]
    %v261 = vld [vmem:[#allocation2 + $0x3d8] sm:$0xff]
    %v262 = vld [vmem:[#allocation2 + $0x3e0] sm:$0xff]
    %v263 = vld [vmem:[#allocation2 + $0x3e8] sm:$0xff]
    %v264 = vld [vmem:[#allocation2 + $0x3f0] sm:$0xff]
    %v265 = vld [vmem:[#allocation2 + $0x3f8] sm:$0xff]
    %v266 = vld [vmem:[#allocation2 + $0x400] sm:$0xff]
    %v267 = vld [vmem:[#allocation2 + $0x408] sm:$0xff]
    %v268 = vld [vmem:[#allocation2 + $0x410] sm:$0xff]
    %v269 = vld [vmem:[#allocation2 + $0x418] sm:$0xff]
    %v270 = vld [vmem:[#allocation2 + $0x420] sm:$0xff]
    %v271 = vld [vmem:[#allocation2 + $0x428] sm:$0xff]
    %v272 = vld [vmem:[#allocation2 + $0x430] sm:$0xff]
    %v273 = vld [vmem:[#allocation2 + $0x438] sm:$0xff]
    %v274 = vld [vmem:[#allocation2 + $0x440] sm:$0xff]
    %v275 = vld [vmem:[#allocation2 + $0x448] sm:$0xff]
    %v276 = vld [vmem:[#allocation2 + $0x450] sm:$0xff]
    %v277 = vld [vmem:[#allocation2 + $0x458] sm:$0xff]
    %v278 = vld [vmem:[#allocation2 + $0x460] sm:$0xff]
    %v279 = vld [vmem:[#allocation2 + $0x468] sm:$0xff]
    %v280 = vld [vmem:[#allocation2 + $0x470] sm:$0xff]
    %v281 = vld [vmem:[#allocation2 + $0x478] sm:$0xff]
    %v282 = vld [vmem:[#allocation2 + $0x480] sm:$0xff]
    %v283 = vld [vmem:[#allocation2 + $0x488] sm:$0xff]
    %v284 = vld [vmem:[#allocation2 + $0x490] sm:$0xff]
    %v285 = vld [vmem:[#allocation2 + $0x498] sm:$0xff]
    %v286 = vld [vmem:[#allocation2 + $0x4a0] sm:$0xff]
    %v287 = vld [vmem:[#allocation2 + $0x4a8] sm:$0xff]
    %v288 = vld [vmem:[#allocation2 + $0x4b0] sm:$0xff]
    %v289 = vld [vmem:[#allocation2 + $0x4b8] sm:$0xff]
    %v290 = vld [vmem:[#allocation2 + $0x4c0] sm:$0xff]
    %v291 = vld [vmem:[#allocation2 + $0x4c8] sm:$0xff]
    %v292 = vld [vmem:[#allocation2 + $0x4d0] sm:$0xff]
    %v293 = vld [vmem:[#allocation2 + $0x4d8] sm:$0xff]
    %v294 = vld [vmem:[#allocation2 + $0x4e0] sm:$0xff]
    %v295 = vld [vmem:[#allocation2 + $0x4e8] sm:$0xff]
    %v296 = vld [vmem:[#allocation2 + $0x4f0] sm:$0xff]
    %v297 = vld [vmem:[#allocation2 + $0x4f8] sm:$0xff]
    %v298 = vld [vmem:[#allocation2 + $0x500] sm:$0xff]
    %v299 = vld [vmem:[#allocation2 + $0x508] sm:$0xff]
    %v300 = vld [vmem:[#allocation2 + $0x510] sm:$0xff]
    %v301 = vld [vmem:[#allocation2 + $0x518] sm:$0xff]
    %v302 = vld [vmem:[#allocation2 + $0x520] sm:$0xff]
    %v303 = vld [vmem:[#allocation2 + $0x528] sm:$0xff]
    %v304 = vld [vmem:[#allocation2 + $0x530] sm:$0xff]
    %v305 = vld [vmem:[#allocation2 + $0x538] sm:$0xff]
    %v306 = vld [vmem:[#allocation2 + $0x540] sm:$0xff]
    %v307 = vld [vmem:[#allocation2 + $0x548] sm:$0xff]
    %v308 = vld [vmem:[#allocation2 + $0x550] sm:$0xff]
    %v309 = vld [vmem:[#allocation2 + $0x558] sm:$0xff]
    %v310 = vld [vmem:[#allocation2 + $0x560] sm:$0xff]
    %v311 = vld [vmem:[#allocation2 + $0x568] sm:$0xff]
    %v312 = vld [vmem:[#allocation2 + $0x570] sm:$0xff]
    %v313 = vld [vmem:[#allocation2 + $0x578] sm:$0xff]
    %v314 = vld [vmem:[#allocation2 + $0x580] sm:$0xff]
    %v315 = vld [vmem:[#allocation2 + $0x588] sm:$0xff]
    %v316 = vld [vmem:[#allocation2 + $0x590] sm:$0xff]
    %v317 = vld [vmem:[#allocation2 + $0x598] sm:$0xff]
    %v318 = vld [vmem:[#allocation2 + $0x5a0] sm:$0xff]
    %v319 = vld [vmem:[#allocation2 + $0x5a8] sm:$0xff]
    %v320 = vld [vmem:[#allocation2 + $0x5b0] sm:$0xff]
    %v321 = vld [vmem:[#allocation2 + $0x5b8] sm:$0xff]
    %v322 = vld [vmem:[#allocation2 + $0x5c0] sm:$0xff]
    %v323 = vld [vmem:[#allocation2 + $0x5c8] sm:$0xff]
    %v324 = vld [vmem:[#allocation2 + $0x5d0] sm:$0xff]
    %v325 = vld [vmem:[#allocation2 + $0x5d8] sm:$0xff]
    %v326 = vld [vmem:[#allocation2 + $0x5e0] sm:$0xff]
    %v327 = vld [vmem:[#allocation2 + $0x5e8] sm:$0xff]
    %v328 = vld [vmem:[#allocation2 + $0x5f0] sm:$0xff]
    %v329 = vld [vmem:[#allocation2 + $0x5f8] sm:$0xff]
    %v330 = vld [vmem:[#allocation2 + $0x600] sm:$0xff]
    %v331 = vld [vmem:[#allocation2 + $0x608] sm:$0xff]
    %v332 = vld [vmem:[#allocation2 + $0x610] sm:$0xff]
    %v333 = vld [vmem:[#allocation2 + $0x618] sm:$0xff]
    %v334 = vld [vmem:[#allocation2 + $0x620] sm:$0xff]
    %v335 = vld [vmem:[#allocation2 + $0x628] sm:$0xff]
    %v336 = vld [vmem:[#allocation2 + $0x630] sm:$0xff]
    %v337 = vld [vmem:[#allocation2 + $0x638] sm:$0xff]
    %v338 = vld [vmem:[#allocation2 + $0x640] sm:$0xff]
    %v339 = vld [vmem:[#allocation2 + $0x648] sm:$0xff]
    %v340 = vld [vmem:[#allocation2 + $0x650] sm:$0xff]
    %v341 = vld [vmem:[#allocation2 + $0x658] sm:$0xff]
    %v342 = vld [vmem:[#allocation2 + $0x660] sm:$0xff]
    %v343 = vld [vmem:[#allocation2 + $0x668] sm:$0xff]
    %v344 = vld [vmem:[#allocation2 + $0x670] sm:$0xff]
    %v345 = vld [vmem:[#allocation2 + $0x678] sm:$0xff]
    %v346 = vld [vmem:[#allocation2 + $0x680] sm:$0xff]
    %v347 = vld [vmem:[#allocation2 + $0x688] sm:$0xff]
    %v348 = vld [vmem:[#allocation2 + $0x690] sm:$0xff]
    %v349 = vld [vmem:[#allocation2 + $0x698] sm:$0xff]
    %v350 = vld [vmem:[#allocation2 + $0x6a0] sm:$0xff]
    %v351 = vld [vmem:[#allocation2 + $0x6a8] sm:$0xff]
    %v352 = vld [vmem:[#allocation2 + $0x6b0] sm:$0xff]
    %v353 = vld [vmem:[#allocation2 + $0x6b8] sm:$0xff]
    %v354 = vld [vmem:[#allocation2 + $0x6c0] sm:$0xff]
    %v355 = vld [vmem:[#allocation2 + $0x6c8] sm:$0xff]
    %v356 = vld [vmem:[#allocation2 + $0x6d0] sm:$0xff]
    %v357 = vld [vmem:[#allocation2 + $0x6d8] sm:$0xff]
    %v358 = vld [vmem:[#allocation2 + $0x6e0] sm:$0xff]
    %v359 = vld [vmem:[#allocation2 + $0x6e8] sm:$0xff]
    %v360 = vld [vmem:[#allocation2 + $0x6f0] sm:$0xff]
    %v361 = vld [vmem:[#allocation2 + $0x6f8] sm:$0xff]
    %v362 = vld [vmem:[#allocation2 + $0x700] sm:$0xff]
    %v363 = vld [vmem:[#allocation2 + $0x708] sm:$0xff]
    %v364 = vld [vmem:[#allocation2 + $0x710] sm:$0xff]
    %v365 = vld [vmem:[#allocation2 + $0x718] sm:$0xff]
    %v366 = vld [vmem:[#allocation2 + $0x720] sm:$0xff]
    %v367 = vld [vmem:[#allocation2 + $0x728] sm:$0xff]
    %v368 = vld [vmem:[#allocation2 + $0x730] sm:$0xff]
    %v369 = vld [vmem:[#allocation2 + $0x738] sm:$0xff]
    %v370 = vld [vmem:[#allocation2 + $0x740] sm:$0xff]
    %v371 = vld [vmem:[#allocation2 + $0x748] sm:$0xff]
    %v372 = vld [vmem:[#allocation2 + $0x750] sm:$0xff]
    %v373 = vld [vmem:[#allocation2 + $0x758] sm:$0xff]
    %v374 = vld [vmem:[#allocation2 + $0x760] sm:$0xff]
    %v375 = vld [vmem:[#allocation2 + $0x768] sm:$0xff]
    %v376 = vld [vmem:[#allocation2 + $0x770] sm:$0xff]
    %v377 = vld [vmem:[#allocation2 + $0x778] sm:$0xff]
    %v378 = vld [vmem:[#allocation2 + $0x780] sm:$0xff]
    %v379 = vld [vmem:[#allocation2 + $0x788] sm:$0xff]
    %v380 = vld [vmem:[#allocation2 + $0x790] sm:$0xff]
    %v381 = vld [vmem:[#allocation2 + $0x798] sm:$0xff]
    %v382 = vld [vmem:[#allocation2 + $0x7a0] sm:$0xff]
    %v383 = vld [vmem:[#allocation2 + $0x7a8] sm:$0xff]
    %v384 = vld [vmem:[#allocation2 + $0x7b0] sm:$0xff]
    %v385 = vld [vmem:[#allocation2 + $0x7b8] sm:$0xff]
    %v386 = vld [vmem:[#allocation2 + $0x7c0] sm:$0xff]
    %v387 = vld [vmem:[#allocation2 + $0x7c8] sm:$0xff]
    %v388 = vld [vmem:[#allocation2 + $0x7d0] sm:$0xff]
    %v389 = vld [vmem:[#allocation2 + $0x7d8] sm:$0xff]
    %v390 = vld [vmem:[#allocation2 + $0x7e0] sm:$0xff]
    %v391 = vld [vmem:[#allocation2 + $0x7e8] sm:$0xff]
    %v392 = vld [vmem:[#allocation2 + $0x7f0] sm:$0xff]
    %v393 = vld [vmem:[#allocation2 + $0x7f8] sm:$0xff]
    %v394 = vld [vmem:[#allocation2 + $0x800] sm:$0xff]
    %v395 = vld [vmem:[#allocation2 + $0x808] sm:$0xff]
    %v396 = vld [vmem:[#allocation2 + $0x810] sm:$0xff]
    %v397 = vld [vmem:[#allocation2 + $0x818] sm:$0xff]
    %v398 = vld [vmem:[#allocation2 + $0x820] sm:$0xff]
    %v399 = vld [vmem:[#allocation2 + $0x828] sm:$0xff]
    %v400 = vld [vmem:[#allocation2 + $0x830] sm:$0xff]
    %v401 = vld [vmem:[#allocation2 + $0x838] sm:$0xff]
    %v402 = vld [vmem:[#allocation2 + $0x840] sm:$0xff]
    %v403 = vld [vmem:[#allocation2 + $0x848] sm:$0xff]
    %v404 = vld [vmem:[#allocation2 + $0x850] sm:$0xff]
    %v405 = vld [vmem:[#allocation2 + $0x858] sm:$0xff]
    %v406 = vld [vmem:[#allocation2 + $0x860] sm:$0xff]
    %v407 = vld [vmem:[#allocation2 + $0x868] sm:$0xff]
    %v408 = vld [vmem:[#allocation2 + $0x870] sm:$0xff]
    %v409 = vld [vmem:[#allocation2 + $0x878] sm:$0xff]
    %v410 = vld [vmem:[#allocation2 + $0x880] sm:$0xff]
    %v411 = vld [vmem:[#allocation2 + $0x888] sm:$0xff]
    %v412 = vld [vmem:[#allocation2 + $0x890] sm:$0xff]
    %v413 = vld [vmem:[#allocation2 + $0x898] sm:$0xff]
    %v414 = vld [vmem:[#allocation2 + $0x8a0] sm:$0xff]
    %v415 = vld [vmem:[#allocation2 + $0x8a8] sm:$0xff]
    %v416 = vld [vmem:[#allocation2 + $0x8b0] sm:$0xff]
    %v417 = vld [vmem:[#allocation2 + $0x8b8] sm:$0xff]
    %v418 = vld [vmem:[#allocation2 + $0x8c0] sm:$0xff]
    %v419 = vld [vmem:[#allocation2 + $0x8c8] sm:$0xff]
    %v420 = vld [vmem:[#allocation2 + $0x8d0] sm:$0xff]
    %v421 = vld [vmem:[#allocation2 + $0x8d8] sm:$0xff]
    %v422 = vld [vmem:[#allocation2 + $0x8e0] sm:$0xff]
    %v423 = vld [vmem:[#allocation2 + $0x8e8] sm:$0xff]
    %v424 = vld [vmem:[#allocation2 + $0x8f0] sm:$0xff]
    %v425 = vld [vmem:[#allocation2 + $0x8f8] sm:$0xff]
    %v426 = vld [vmem:[#allocation2 + $0x900] sm:$0xff]
    %v427 = vld [vmem:[#allocation2 + $0x908] sm:$0xff]
    %v428 = vld [vmem:[#allocation2 + $0x910] sm:$0xff]
    %v429 = vld [vmem:[#allocation2 + $0x918] sm:$0xff]
    %v430 = vld [vmem:[#allocation2 + $0x920] sm:$0xff]
    %v431 = vld [vmem:[#allocation2 + $0x928] sm:$0xff]
    %v432 = vld [vmem:[#allocation2 + $0x930] sm:$0xff]
    %v433 = vld [vmem:[#allocation2 + $0x938] sm:$0xff]
    %v434 = vld [vmem:[#allocation2 + $0x940] sm:$0xff]
    %v435 = vld [vmem:[#allocation2 + $0x948] sm:$0xff]
    %v436 = vld [vmem:[#allocation2 + $0x950] sm:$0xff]
    %v437 = vld [vmem:[#allocation2 + $0x958] sm:$0xff]
    %v438 = vld [vmem:[#allocation2 + $0x960] sm:$0xff]
    %v439 = vld [vmem:[#allocation2 + $0x968] sm:$0xff]
    %v440 = vld [vmem:[#allocation2 + $0x970] sm:$0xff]
    %v441 = vld [vmem:[#allocation2 + $0x978] sm:$0xff]
    %v442 = vld [vmem:[#allocation2 + $0x980] sm:$0xff]
    %v443 = vld [vmem:[#allocation2 + $0x988] sm:$0xff]
    %v444 = vld [vmem:[#allocation2 + $0x990] sm:$0xff]
    %v445 = vld [vmem:[#allocation2 + $0x998] sm:$0xff]
    %v446 = vld [vmem:[#allocation2 + $0x9a0] sm:$0xff]
    %v447 = vld [vmem:[#allocation2 + $0x9a8] sm:$0xff]
    %v448 = vld [vmem:[#allocation2 + $0x9b0] sm:$0xff]
    %v449 = vld [vmem:[#allocation2 + $0x9b8] sm:$0xff]
    %v450 = vld [vmem:[#allocation2 + $0x9c0] sm:$0xff]
    %v451 = vld [vmem:[#allocation2 + $0x9c8] sm:$0xff]
    %v452 = vld [vmem:[#allocation2 + $0x9d0] sm:$0xff]
    %v453 = vld [vmem:[#allocation2 + $0x9d8] sm:$0xff]
    %v454 = vld [vmem:[#allocation2 + $0x9e0] sm:$0xff]
    %v455 = vld [vmem:[#allocation2 + $0x9e8] sm:$0xff]
    %v456 = vld [vmem:[#allocation2 + $0x9f0] sm:$0xff]
    %v457 = vld [vmem:[#allocation2 + $0x9f8] sm:$0xff]
    %v458 = vld [vmem:[#allocation2 + $0xa00] sm:$0xff]
    %v459 = vld [vmem:[#allocation2 + $0xa08] sm:$0xff]
    %v460 = vld [vmem:[#allocation2 + $0xa10] sm:$0xff]
    %v461 = vld [vmem:[#allocation2 + $0xa18] sm:$0xff]
    %v462 = vld [vmem:[#allocation2 + $0xa20] sm:$0xff]
    %v463 = vld [vmem:[#allocation2 + $0xa28] sm:$0xff]
    %v464 = vld [vmem:[#allocation2 + $0xa30] sm:$0xff]
    %v465 = vld [vmem:[#allocation2 + $0xa38] sm:$0xff]
    %v466 = vld [vmem:[#allocation2 + $0xa40] sm:$0xff]
    %v467 = vld [vmem:[#allocation2 + $0xa48] sm:$0xff]
    %v468 = vld [vmem:[#allocation2 + $0xa50] sm:$0xff]
    %v469 = vld [vmem:[#allocation2 + $0xa58] sm:$0xff]
    %v470 = vld [vmem:[#allocation2 + $0xa60] sm:$0xff]
    %v471 = vld [vmem:[#allocation2 + $0xa68] sm:$0xff]
    %v472 = vld [vmem:[#allocation2 + $0xa70] sm:$0xff]
    %v473 = vld [vmem:[#allocation2 + $0xa78] sm:$0xff]
    %v474 = vld [vmem:[#allocation2 + $0xa80] sm:$0xff]
    %v475 = vld [vmem:[#allocation2 + $0xa88] sm:$0xff]
    %v476 = vld [vmem:[#allocation2 + $0xa90] sm:$0xff]
    %v477 = vld [vmem:[#allocation2 + $0xa98] sm:$0xff]
    %v478 = vld [vmem:[#allocation2 + $0xaa0] sm:$0xff]
    %v479 = vld [vmem:[#allocation2 + $0xaa8] sm:$0xff]
    %v480 = vld [vmem:[#allocation2 + $0xab0] sm:$0xff]
    %v481 = vld [vmem:[#allocation2 + $0xab8] sm:$0xff]
    %v482 = vld [vmem:[#allocation2 + $0xac0] sm:$0xff]
    %v483 = vld [vmem:[#allocation2 + $0xac8] sm:$0xff]
    %v484 = vld [vmem:[#allocation2 + $0xad0] sm:$0xff]
    %v485 = vld [vmem:[#allocation2 + $0xad8] sm:$0xff]
    %v486 = vld [vmem:[#allocation2 + $0xae0] sm:$0xff]
    %v487 = vld [vmem:[#allocation2 + $0xae8] sm:$0xff]
    %v488 = vld [vmem:[#allocation2 + $0xaf0] sm:$0xff]
    %v489 = vld [vmem:[#allocation2 + $0xaf8] sm:$0xff]
    %v490 = vld [vmem:[#allocation2 + $0xb00] sm:$0xff]
    %v491 = vld [vmem:[#allocation2 + $0xb08] sm:$0xff]
    %v492 = vld [vmem:[#allocation2 + $0xb10] sm:$0xff]
    %v493 = vld [vmem:[#allocation2 + $0xb18] sm:$0xff]
    %v494 = vld [vmem:[#allocation2 + $0xb20] sm:$0xff]
    %v495 = vld [vmem:[#allocation2 + $0xb28] sm:$0xff]
    %v496 = vld [vmem:[#allocation2 + $0xb30] sm:$0xff]
    %v497 = vld [vmem:[#allocation2 + $0xb38] sm:$0xff]
    %v498 = vld [vmem:[#allocation2 + $0xb40] sm:$0xff]
    %v499 = vld [vmem:[#allocation2 + $0xb48] sm:$0xff]
    %v500 = vld [vmem:[#allocation2 + $0xb50] sm:$0xff]
    %v501 = vld [vmem:[#allocation2 + $0xb58] sm:$0xff]
    %v502 = vld [vmem:[#allocation2 + $0xb60] sm:$0xff]
    %v503 = vld [vmem:[#allocation2 + $0xb68] sm:$0xff]
    %v504 = vld [vmem:[#allocation2 + $0xb70] sm:$0xff]
    %v505 = vld [vmem:[#allocation2 + $0xb78] sm:$0xff]
    %v506 = vld [vmem:[#allocation2 + $0xb80] sm:$0xff]
    %v507 = vld [vmem:[#allocation2 + $0xb88] sm:$0xff]
    %v508 = vld [vmem:[#allocation2 + $0xb90] sm:$0xff]
    %v509 = vld [vmem:[#allocation2 + $0xb98] sm:$0xff]
    %v510 = vld [vmem:[#allocation2 + $0xba0] sm:$0xff]
    %v511 = vld [vmem:[#allocation2 + $0xba8] sm:$0xff]
    %v512 = vld [vmem:[#allocation2 + $0xbb0] sm:$0xff]
    %v513 = vld [vmem:[#allocation2 + $0xbb8] sm:$0xff]
    %v514 = vld [vmem:[#allocation2 + $0xbc0] sm:$0xff]
    %v515 = vld [vmem:[#allocation2 + $0xbc8] sm:$0xff]
    %v516 = vld [vmem:[#allocation2 + $0xbd0] sm:$0xff]
    %v517 = vld [vmem:[#allocation2 + $0xbd8] sm:$0xff]
    %v518 = vld [vmem:[#allocation2 + $0xbe0] sm:$0xff]
    %v519 = vld [vmem:[#allocation2 + $0xbe8] sm:$0xff]
    %v520 = vld [vmem:[#allocation2 + $0xbf0] sm:$0xff]
    %v521 = vld [vmem:[#allocation2 + $0xbf8] sm:$0xff]
    %v522 = vld [vmem:[#allocation2 + $0xc00] sm:$0xff]
    %v523 = vld [vmem:[#allocation2 + $0xc08] sm:$0xff]
    %v524 = vld [vmem:[#allocation2 + $0xc10] sm:$0xff]
    %v525 = vld [vmem:[#allocation2 + $0xc18] sm:$0xff]
    %v526 = vld [vmem:[#allocation2 + $0xc20] sm:$0xff]
    %v527 = vld [vmem:[#allocation2 + $0xc28] sm:$0xff]
    %v528 = vld [vmem:[#allocation2 + $0xc30] sm:$0xff]
    %v529 = vld [vmem:[#allocation2 + $0xc38] sm:$0xff]
    %v530 = vld [vmem:[#allocation2 + $0xc40] sm:$0xff]
    %v531 = vld [vmem:[#allocation2 + $0xc48] sm:$0xff]
    %v532 = vld [vmem:[#allocation2 + $0xc50] sm:$0xff]
    %v533 = vld [vmem:[#allocation2 + $0xc58] sm:$0xff]
    %v534 = vld [vmem:[#allocation2 + $0xc60] sm:$0xff]
    %v535 = vld [vmem:[#allocation2 + $0xc68] sm:$0xff]
    %v536 = vld [vmem:[#allocation2 + $0xc70] sm:$0xff]
    %v537 = vld [vmem:[#allocation2 + $0xc78] sm:$0xff]
    %v538 = vld [vmem:[#allocation2 + $0xc80] sm:$0xff]
    %v539 = vld [vmem:[#allocation2 + $0xc88] sm:$0xff]
    %v540 = vld [vmem:[#allocation2 + $0xc90] sm:$0xff]
    %v541 = vld [vmem:[#allocation2 + $0xc98] sm:$0xff]
    %v542 = vld [vmem:[#allocation2 + $0xca0] sm:$0xff]
    %v543 = vld [vmem:[#allocation2 + $0xca8] sm:$0xff]
    %v544 = vld [vmem:[#allocation2 + $0xcb0] sm:$0xff]
    %v545 = vld [vmem:[#allocation2 + $0xcb8] sm:$0xff]
    %v546 = vld [vmem:[#allocation2 + $0xcc0] sm:$0xff]
    %v547 = vld [vmem:[#allocation2 + $0xcc8] sm:$0xff]
    %v548 = vld [vmem:[#allocation2 + $0xcd0] sm:$0xff]
    %v549 = vld [vmem:[#allocation2 + $0xcd8] sm:$0xff]
    %v550 = vld [vmem:[#allocation2 + $0xce0] sm:$0xff]
    %v551 = vld [vmem:[#allocation2 + $0xce8] sm:$0xff]
    %v552 = vld [vmem:[#allocation2 + $0xcf0] sm:$0xff]
    %v553 = vld [vmem:[#allocation2 + $0xcf8] sm:$0xff]
    %v554 = vld [vmem:[#allocation2 + $0xd00] sm:$0xff]
    %v555 = vld [vmem:[#allocation2 + $0xd08] sm:$0xff]
    %v556 = vld [vmem:[#allocation2 + $0xd10] sm:$0xff]
    %v557 = vld [vmem:[#allocation2 + $0xd18] sm:$0xff]
    %v558 = vld [vmem:[#allocation2 + $0xd20] sm:$0xff]
    %v559 = vld [vmem:[#allocation2 + $0xd28] sm:$0xff]
    %v560 = vld [vmem:[#allocation2 + $0xd30] sm:$0xff]
    %v561 = vld [vmem:[#allocation2 + $0xd38] sm:$0xff]
    %v562 = vld [vmem:[#allocation2 + $0xd40] sm:$0xff]
    %v563 = vld [vmem:[#allocation2 + $0xd48] sm:$0xff]
    %v564 = vld [vmem:[#allocation2 + $0xd50] sm:$0xff]
    %v565 = vld [vmem:[#allocation2 + $0xd58] sm:$0xff]
    %v566 = vld [vmem:[#allocation2 + $0xd60] sm:$0xff]
    %v567 = vld [vmem:[#allocation2 + $0xd68] sm:$0xff]
    %v568 = vld [vmem:[#allocation2 + $0xd70] sm:$0xff]
    %v569 = vld [vmem:[#allocation2 + $0xd78] sm:$0xff]
    %v570 = vld [vmem:[#allocation2 + $0xd80] sm:$0xff]
    %v571 = vld [vmem:[#allocation2 + $0xd88] sm:$0xff]
    %v572 = vld [vmem:[#allocation2 + $0xd90] sm:$0xff]
    %v573 = vld [vmem:[#allocation2 + $0xd98] sm:$0xff]
    %v574 = vld [vmem:[#allocation2 + $0xda0] sm:$0xff]
    %v575 = vld [vmem:[#allocation2 + $0xda8] sm:$0xff]
    %v576 = vld [vmem:[#allocation2 + $0xdb0] sm:$0xff]
    %v577 = vld [vmem:[#allocation2 + $0xdb8] sm:$0xff]
    %v578 = vld [vmem:[#allocation2 + $0xdc0] sm:$0xff]
    %v579 = vld [vmem:[#allocation2 + $0xdc8] sm:$0xff]
    %v580 = vld [vmem:[#allocation2 + $0xdd0] sm:$0xff]
    %v581 = vld [vmem:[#allocation2 + $0xdd8] sm:$0xff]
    %v582 = vld [vmem:[#allocation2 + $0xde0] sm:$0xff]
    %v583 = vld [vmem:[#allocation2 + $0xde8] sm:$0xff]
    %v584 = vld [vmem:[#allocation2 + $0xdf0] sm:$0xff]
    %v585 = vld [vmem:[#allocation2 + $0xdf8] sm:$0xff]
    %v586 = vld [vmem:[#allocation2 + $0xe00] sm:$0xff]
    %v587 = vld [vmem:[#allocation2 + $0xe08] sm:$0xff]
    %v588 = vld [vmem:[#allocation2 + $0xe10] sm:$0xff]
    %v589 = vld [vmem:[#allocation2 + $0xe18] sm:$0xff]
    %v590 = vld [vmem:[#allocation2 + $0xe20] sm:$0xff]
    %v591 = vld [vmem:[#allocation2 + $0xe28] sm:$0xff]
    %v592 = vld [vmem:[#allocation2 + $0xe30] sm:$0xff]
    %v593 = vld [vmem:[#allocation2 + $0xe38] sm:$0xff]
    %v594 = vld [vmem:[#allocation2 + $0xe40] sm:$0xff]
    %v595 = vld [vmem:[#allocation2 + $0xe48] sm:$0xff]
    %v596 = vld [vmem:[#allocation2 + $0xe50] sm:$0xff]
    %v597 = vld [vmem:[#allocation2 + $0xe58] sm:$0xff]
    %v598 = vld [vmem:[#allocation2 + $0xe60] sm:$0xff]
    %v599 = vld [vmem:[#allocation2 + $0xe68] sm:$0xff]
    %v600 = vld [vmem:[#allocation2 + $0xe70] sm:$0xff]
    %v601 = vld [vmem:[#allocation2 + $0xe78] sm:$0xff]
    %v602 = vld [vmem:[#allocation2 + $0xe80] sm:$0xff]
    %v603 = vld [vmem:[#allocation2 + $0xe88] sm:$0xff]
    %v604 = vld [vmem:[#allocation2 + $0xe90] sm:$0xff]
    %v605 = vld [vmem:[#allocation2 + $0xe98] sm:$0xff]
    %v606 = vld [vmem:[#allocation2 + $0xea0] sm:$0xff]
    %v607 = vld [vmem:[#allocation2 + $0xea8] sm:$0xff]
    %v608 = vld [vmem:[#allocation2 + $0xeb0] sm:$0xff]
    %v609 = vld [vmem:[#allocation2 + $0xeb8] sm:$0xff]
    %v610 = vld [vmem:[#allocation2 + $0xec0] sm:$0xff]
    %v611 = vld [vmem:[#allocation2 + $0xec8] sm:$0xff]
    %v612 = vld [vmem:[#allocation2 + $0xed0] sm:$0xff]
    %v613 = vld [vmem:[#allocation2 + $0xed8] sm:$0xff]
    %v614 = vld [vmem:[#allocation2 + $0xee0] sm:$0xff]
    %v615 = vld [vmem:[#allocation2 + $0xee8] sm:$0xff]
    %v616 = vld [vmem:[#allocation2 + $0xef0] sm:$0xff]
    %v617 = vld [vmem:[#allocation2 + $0xef8] sm:$0xff]
    %v618 = vld [vmem:[#allocation2 + $0xf00] sm:$0xff]
    %v619 = vld [vmem:[#allocation2 + $0xf08] sm:$0xff]
    %v620 = vld [vmem:[#allocation2 + $0xf10] sm:$0xff]
    %v621 = vld [vmem:[#allocation2 + $0xf18] sm:$0xff]
    %v622 = vld [vmem:[#allocation2 + $0xf20] sm:$0xff]
    %v623 = vld [vmem:[#allocation2 + $0xf28] sm:$0xff]
    %v624 = vld [vmem:[#allocation2 + $0xf30] sm:$0xff]
    %v625 = vld [vmem:[#allocation2 + $0xf38] sm:$0xff]
    %v626 = vld [vmem:[#allocation2 + $0xf40] sm:$0xff]
    %v627 = vld [vmem:[#allocation2 + $0xf48] sm:$0xff]
    %v628 = vld [vmem:[#allocation2 + $0xf50] sm:$0xff]
    %v629 = vld [vmem:[#allocation2 + $0xf58] sm:$0xff]
    %v630 = vld [vmem:[#allocation2 + $0xf60] sm:$0xff]
    %v631 = vld [vmem:[#allocation2 + $0xf68] sm:$0xff]
    %v632 = vld [vmem:[#allocation2 + $0xf70] sm:$0xff]
    %v633 = vld [vmem:[#allocation2 + $0xf78] sm:$0xff]
    %v634 = vld [vmem:[#allocation2 + $0xf80] sm:$0xff]
    %v635 = vld [vmem:[#allocation2 + $0xf88] sm:$0xff]
    %v636 = vld [vmem:[#allocation2 + $0xf90] sm:$0xff]
    %v637 = vld [vmem:[#allocation2 + $0xf98] sm:$0xff]
    %v638 = vld [vmem:[#allocation2 + $0xfa0] sm:$0xff]
    %v639 = vld [vmem:[#allocation2 + $0xfa8] sm:$0xff]
    %v640 = vld [vmem:[#allocation2 + $0xfb0] sm:$0xff]
    %v641 = vld [vmem:[#allocation2 + $0xfb8] sm:$0xff]
    %v642 = vld [vmem:[#allocation2 + $0xfc0] sm:$0xff]
    %v643 = vld [vmem:[#allocation2 + $0xfc8] sm:$0xff]
    %v644 = vld [vmem:[#allocation2 + $0xfd0] sm:$0xff]
    %v645 = vld [vmem:[#allocation2 + $0xfd8] sm:$0xff]
    %v646 = vld [vmem:[#allocation2 + $0xfe0] sm:$0xff]
    %v647 = vld [vmem:[#allocation2 + $0xfe8] sm:$0xff]
    %v648 = vld [vmem:[#allocation2 + $0xff0] sm:$0xff]
    %v649 = vld [vmem:[#allocation2 + $0xff8] sm:$0xff]
    %v650 = vld [vmem:[#allocation2 + $0x1000] sm:$0xff]
    %v651 = vld [vmem:[#allocation2 + $0x1008] sm:$0xff]
    %v652 = vld [vmem:[#allocation2 + $0x1010] sm:$0xff]
    %v653 = vld [vmem:[#allocation2 + $0x1018] sm:$0xff]
    %v654 = vld [vmem:[#allocation2 + $0x1020] sm:$0xff]
    %v655 = vld [vmem:[#allocation2 + $0x1028] sm:$0xff]
    %v656 = vld [vmem:[#allocation2 + $0x1030] sm:$0xff]
    %v657 = vld [vmem:[#allocation2 + $0x1038] sm:$0xff]
    %v658 = vld [vmem:[#allocation2 + $0x1040] sm:$0xff]
    %v659 = vld [vmem:[#allocation2 + $0x1048] sm:$0xff]
    %v660 = vld [vmem:[#allocation2 + $0x1050] sm:$0xff]
    %v661 = vld [vmem:[#allocation2 + $0x1058] sm:$0xff]
    %v662 = vld [vmem:[#allocation2 + $0x1060] sm:$0xff]
    %v663 = vld [vmem:[#allocation2 + $0x1068] sm:$0xff]
    %v664 = vld [vmem:[#allocation2 + $0x1070] sm:$0xff]
    %v665 = vld [vmem:[#allocation2 + $0x1078] sm:$0xff]
    %v666 = vld [vmem:[#allocation2 + $0x1080] sm:$0xff]
    %v667 = vld [vmem:[#allocation2 + $0x1088] sm:$0xff]
    %v668 = vld [vmem:[#allocation2 + $0x1090] sm:$0xff]
    %v669 = vld [vmem:[#allocation2 + $0x1098] sm:$0xff]
    %v670 = vld [vmem:[#allocation2 + $0x10a0] sm:$0xff]
    %v671 = vld [vmem:[#allocation2 + $0x10a8] sm:$0xff]
    %v672 = vld [vmem:[#allocation2 + $0x10b0] sm:$0xff]
    %v673 = vld [vmem:[#allocation2 + $0x10b8] sm:$0xff]
    %v674 = vld [vmem:[#allocation2 + $0x10c0] sm:$0xff]
    %v675 = vld [vmem:[#allocation2 + $0x10c8] sm:$0xff]
    %v676 = vld [vmem:[#allocation2 + $0x10d0] sm:$0xff]
    %v677 = vld [vmem:[#allocation2 + $0x10d8] sm:$0xff]
    %v678 = vld [vmem:[#allocation2 + $0x10e0] sm:$0xff]
    %v679 = vld [vmem:[#allocation2 + $0x10e8] sm:$0xff]
    %v680 = vld [vmem:[#allocation2 + $0x10f0] sm:$0xff]
    %v681 = vld [vmem:[#allocation2 + $0x10f8] sm:$0xff]
    %v682 = vld [vmem:[#allocation2 + $0x1100] sm:$0xff]
    %v683 = vld [vmem:[#allocation2 + $0x1108] sm:$0xff]
    %v684 = vld [vmem:[#allocation2 + $0x1110] sm:$0xff]
    %v685 = vld [vmem:[#allocation2 + $0x1118] sm:$0xff]
    %v686 = vld [vmem:[#allocation2 + $0x1120] sm:$0xff]
    %v687 = vld [vmem:[#allocation2 + $0x1128] sm:$0xff]
    %v688 = vld [vmem:[#allocation2 + $0x1130] sm:$0xff]
    %v689 = vld [vmem:[#allocation2 + $0x1138] sm:$0xff]
    %v690 = vld [vmem:[#allocation2 + $0x1140] sm:$0xff]
    %v691 = vld [vmem:[#allocation2 + $0x1148] sm:$0xff]
    %v692 = vld [vmem:[#allocation2 + $0x1150] sm:$0xff]
    %v693 = vld [vmem:[#allocation2 + $0x1158] sm:$0xff]
    %v694 = vld [vmem:[#allocation2 + $0x1160] sm:$0xff]
    %v695 = vld [vmem:[#allocation2 + $0x1168] sm:$0xff]
    %v696 = vld [vmem:[#allocation2 + $0x1170] sm:$0xff]
    %v697 = vld [vmem:[#allocation2 + $0x1178] sm:$0xff]
    %v698 = vld [vmem:[#allocation2 + $0x1180] sm:$0xff]
    %v699 = vld [vmem:[#allocation2 + $0x1188] sm:$0xff]
    %v700 = vld [vmem:[#allocation2 + $0x1190] sm:$0xff]
    %v701 = vld [vmem:[#allocation2 + $0x1198] sm:$0xff]
    %v702 = vld [vmem:[#allocation2 + $0x11a0] sm:$0xff]
    %v703 = vld [vmem:[#allocation2 + $0x11a8] sm:$0xff]
    %v704 = vld [vmem:[#allocation2 + $0x11b0] sm:$0xff]
    %v705 = vld [vmem:[#allocation2 + $0x11b8] sm:$0xff]
    %v706 = vld [vmem:[#allocation2 + $0x11c0] sm:$0xff]
    %v707 = vld [vmem:[#allocation2 + $0x11c8] sm:$0xff]
    %v708 = vld [vmem:[#allocation2 + $0x11d0] sm:$0xff]
    %v709 = vld [vmem:[#allocation2 + $0x11d8] sm:$0xff]
    %v710 = vld [vmem:[#allocation2 + $0x11e0] sm:$0xff]
    %v711 = vld [vmem:[#allocation2 + $0x11e8] sm:$0xff]
    %v712 = vld [vmem:[#allocation2 + $0x11f0] sm:$0xff]
    %v713 = vld [vmem:[#allocation2 + $0x11f8] sm:$0xff]
    %v714 = vld [vmem:[#allocation2 + $0x1200] sm:$0xff]
    %v715 = vld [vmem:[#allocation2 + $0x1208] sm:$0xff]
    %v716 = vld [vmem:[#allocation2 + $0x1210] sm:$0xff]
    %v717 = vld [vmem:[#allocation2 + $0x1218] sm:$0xff]
    %v718 = vld [vmem:[#allocation2 + $0x1220] sm:$0xff]
    %v719 = vld [vmem:[#allocation2 + $0x1228] sm:$0xff]
    %v720 = vld [vmem:[#allocation2 + $0x1230] sm:$0xff]
    %v721 = vld [vmem:[#allocation2 + $0x1238] sm:$0xff]
    %v722 = vld [vmem:[#allocation2 + $0x1240] sm:$0xff]
    %v723 = vld [vmem:[#allocation2 + $0x1248] sm:$0xff]
    %v724 = vld [vmem:[#allocation2 + $0x1250] sm:$0xff]
    %v725 = vld [vmem:[#allocation2 + $0x1258] sm:$0xff]
    %v726 = vld [vmem:[#allocation2 + $0x1260] sm:$0xff]
    %v727 = vld [vmem:[#allocation2 + $0x1268] sm:$0xff]
    %v728 = vld [vmem:[#allocation2 + $0x1270] sm:$0xff]
    %v729 = vld [vmem:[#allocation2 + $0x1278] sm:$0xff]
    %v730 = vld [vmem:[#allocation2 + $0x1280] sm:$0xff]
    %v731 = vld [vmem:[#allocation2 + $0x1288] sm:$0xff]
    %v732 = vld [vmem:[#allocation2 + $0x1290] sm:$0xff]
    %v733 = vld [vmem:[#allocation2 + $0x1298] sm:$0xff]
    %v734 = vld [vmem:[#allocation2 + $0x12a0] sm:$0xff]
    %v735 = vld [vmem:[#allocation2 + $0x12a8] sm:$0xff]
    %v736 = vld [vmem:[#allocation2 + $0x12b0] sm:$0xff]
    %v737 = vld [vmem:[#allocation2 + $0x12b8] sm:$0xff]
    %v738 = vld [vmem:[#allocation2 + $0x12c0] sm:$0xff]
    %v739 = vld [vmem:[#allocation2 + $0x12c8] sm:$0xff]
    %v740 = vld [vmem:[#allocation2 + $0x12d0] sm:$0xff]
    %v741 = vld [vmem:[#allocation2 + $0x12d8] sm:$0xff]
    %v742 = vld [vmem:[#allocation2 + $0x12e0] sm:$0xff]
    %v743 = vld [vmem:[#allocation2 + $0x12e8] sm:$0xff]
    %v744 = vld [vmem:[#allocation2 + $0x12f0] sm:$0xff]
    %v745 = vld [vmem:[#allocation2 + $0x12f8] sm:$0xff]
    %v746 = vld [vmem:[#allocation2 + $0x1300] sm:$0xff]
    %v747 = vld [vmem:[#allocation2 + $0x1308] sm:$0xff]
    %v748 = vld [vmem:[#allocation2 + $0x1310] sm:$0xff]
    %v749 = vld [vmem:[#allocation2 + $0x1318] sm:$0xff]
    %v750 = vld [vmem:[#allocation2 + $0x1320] sm:$0xff]
    %v751 = vld [vmem:[#allocation2 + $0x1328] sm:$0xff]
    %v752 = vld [vmem:[#allocation2 + $0x1330] sm:$0xff]
    %v753 = vld [vmem:[#allocation2 + $0x1338] sm:$0xff]
    %v754 = vld [vmem:[#allocation2 + $0x1340] sm:$0xff]
    %v755 = vld [vmem:[#allocation2 + $0x1348] sm:$0xff]
    %v756 = vld [vmem:[#allocation2 + $0x1350] sm:$0xff]
    %v757 = vld [vmem:[#allocation2 + $0x1358] sm:$0xff]
    %v758 = vld [vmem:[#allocation2 + $0x1360] sm:$0xff]
    %v759 = vld [vmem:[#allocation2 + $0x1368] sm:$0xff]
    %v760 = vld [vmem:[#allocation2 + $0x1370] sm:$0xff]
    %v761 = vld [vmem:[#allocation2 + $0x1378] sm:$0xff]
    %v762 = vld [vmem:[#allocation2 + $0x1380] sm:$0xff]
    %v763 = vld [vmem:[#allocation2 + $0x1388] sm:$0xff]
    %v764 = vld [vmem:[#allocation2 + $0x1390] sm:$0xff]
    %v765 = vld [vmem:[#allocation2 + $0x1398] sm:$0xff]
    %v766 = vld [vmem:[#allocation2 + $0x13a0] sm:$0xff]
    %v767 = vld [vmem:[#allocation2 + $0x13a8] sm:$0xff]
    %v768 = vld [vmem:[#allocation2 + $0x13b0] sm:$0xff]
    %v769 = vld [vmem:[#allocation2 + $0x13b8] sm:$0xff]
    %v770 = vld [vmem:[#allocation2 + $0x13c0] sm:$0xff]
    %v771 = vld [vmem:[#allocation2 + $0x13c8] sm:$0xff]
    %v772 = vld [vmem:[#allocation2 + $0x13d0] sm:$0xff]
    %v773 = vld [vmem:[#allocation2 + $0x13d8] sm:$0xff]
    %v774 = vld [vmem:[#allocation2 + $0x13e0] sm:$0xff]
    %v775 = vld [vmem:[#allocation2 + $0x13e8] sm:$0xff]
    %v776 = vld [vmem:[#allocation2 + $0x13f0] sm:$0xff]
    %v777 = vld [vmem:[#allocation2 + $0x13f8] sm:$0xff]
    %v778 = vld [vmem:[#allocation2 + $0x1400] sm:$0xff]
    %v779 = vld [vmem:[#allocation2 + $0x1408] sm:$0xff]
    %v780 = vld [vmem:[#allocation2 + $0x1410] sm:$0xff]
    %v781 = vld [vmem:[#allocation2 + $0x1418] sm:$0xff]
    %v782 = vld [vmem:[#allocation2 + $0x1420] sm:$0xff]
    %v783 = vld [vmem:[#allocation2 + $0x1428] sm:$0xff]
    %v784 = vld [vmem:[#allocation2 + $0x1430] sm:$0xff]
    %v785 = vld [vmem:[#allocation2 + $0x1438] sm:$0xff]
    %v786 = vld [vmem:[#allocation2 + $0x1440] sm:$0xff]
    %v787 = vld [vmem:[#allocation2 + $0x1448] sm:$0xff]
    %v788 = vld [vmem:[#allocation2 + $0x1450] sm:$0xff]
    %v789 = vld [vmem:[#allocation2 + $0x1458] sm:$0xff]
    %v790 = vld [vmem:[#allocation2 + $0x1460] sm:$0xff]
    %v791 = vld [vmem:[#allocation2 + $0x1468] sm:$0xff]
    %v792 = vld [vmem:[#allocation2 + $0x1470] sm:$0xff]
    %v793 = vld [vmem:[#allocation2 + $0x1478] sm:$0xff]
    %v794 = vld [vmem:[#allocation2 + $0x1480] sm:$0xff]
    %v795 = vld [vmem:[#allocation2 + $0x1488] sm:$0xff]
    %v796 = vld [vmem:[#allocation2 + $0x1490] sm:$0xff]
    %v797 = vld [vmem:[#allocation2 + $0x1498] sm:$0xff]
    %v798 = vld [vmem:[#allocation2 + $0x14a0] sm:$0xff]
    %v799 = vld [vmem:[#allocation2 + $0x14a8] sm:$0xff]
    %v800 = vld [vmem:[#allocation2 + $0x14b0] sm:$0xff]
    %v801 = vld [vmem:[#allocation2 + $0x14b8] sm:$0xff]
    %v802 = vld [vmem:[#allocation2 + $0x14c0] sm:$0xff]
    %v803 = vld [vmem:[#allocation2 + $0x14c8] sm:$0xff]
    %v804 = vld [vmem:[#allocation2 + $0x14d0] sm:$0xff]
    %v805 = vld [vmem:[#allocation2 + $0x14d8] sm:$0xff]
    %v806 = vld [vmem:[#allocation2 + $0x14e0] sm:$0xff]
    %v807 = vld [vmem:[#allocation2 + $0x14e8] sm:$0xff]
    %v808 = vld [vmem:[#allocation2 + $0x14f0] sm:$0xff]
    %v809 = vld [vmem:[#allocation2 + $0x14f8] sm:$0xff]
    %v810 = vld [vmem:[#allocation2 + $0x1500] sm:$0xff]
    %v811 = vld [vmem:[#allocation2 + $0x1508] sm:$0xff]
    %v812 = vld [vmem:[#allocation2 + $0x1510] sm:$0xff]
    %v813 = vld [vmem:[#allocation2 + $0x1518] sm:$0xff]
    %v814 = vld [vmem:[#allocation2 + $0x1520] sm:$0xff]
    %v815 = vld [vmem:[#allocation2 + $0x1528] sm:$0xff]
    %v816 = vld [vmem:[#allocation2 + $0x1530] sm:$0xff]
    %v817 = vld [vmem:[#allocation2 + $0x1538] sm:$0xff]
    %v818 = vld [vmem:[#allocation2 + $0x1540] sm:$0xff]
    %v819 = vld [vmem:[#allocation2 + $0x1548] sm:$0xff]
    %v820 = vld [vmem:[#allocation2 + $0x1550] sm:$0xff]
    %v821 = vld [vmem:[#allocation2 + $0x1558] sm:$0xff]
    %v822 = vld [vmem:[#allocation2 + $0x1560] sm:$0xff]
    %v823 = vld [vmem:[#allocation2 + $0x1568] sm:$0xff]
    %v824 = vld [vmem:[#allocation2 + $0x1570] sm:$0xff]
    %v825 = vld [vmem:[#allocation2 + $0x1578] sm:$0xff]
    %v826 = vld [vmem:[#allocation2 + $0x1580] sm:$0xff]
    %v827 = vld [vmem:[#allocation2 + $0x1588] sm:$0xff]
    %v828 = vld [vmem:[#allocation2 + $0x1590] sm:$0xff]
    %v829 = vld [vmem:[#allocation2 + $0x1598] sm:$0xff]
    %v830 = vld [vmem:[#allocation2 + $0x15a0] sm:$0xff]
    %v831 = vld [vmem:[#allocation2 + $0x15a8] sm:$0xff]
    %v832 = vld [vmem:[#allocation2 + $0x15b0] sm:$0xff]
    %v833 = vld [vmem:[#allocation2 + $0x15b8] sm:$0xff]
    %v834 = vld [vmem:[#allocation2 + $0x15c0] sm:$0xff]
    %v835 = vld [vmem:[#allocation2 + $0x15c8] sm:$0xff]
    %v836 = vld [vmem:[#allocation2 + $0x15d0] sm:$0xff]
    %v837 = vld [vmem:[#allocation2 + $0x15d8] sm:$0xff]
    %v838 = vld [vmem:[#allocation2 + $0x15e0] sm:$0xff]
    %v839 = vld [vmem:[#allocation2 + $0x15e8] sm:$0xff]
    %v840 = vld [vmem:[#allocation2 + $0x15f0] sm:$0xff]
    %v841 = vld [vmem:[#allocation2 + $0x15f8] sm:$0xff]
    %v842 = vld [vmem:[#allocation2 + $0x1600] sm:$0xff]
    %v843 = vld [vmem:[#allocation2 + $0x1608] sm:$0xff]
    %v844 = vld [vmem:[#allocation2 + $0x1610] sm:$0xff]
    %v845 = vld [vmem:[#allocation2 + $0x1618] sm:$0xff]
    %v846 = vld [vmem:[#allocation2 + $0x1620] sm:$0xff]
    %v847 = vld [vmem:[#allocation2 + $0x1628] sm:$0xff]
    %v848 = vld [vmem:[#allocation2 + $0x1630] sm:$0xff]
    %v849 = vld [vmem:[#allocation2 + $0x1638] sm:$0xff]
    %v850 = vld [vmem:[#allocation2 + $0x1640] sm:$0xff]
    %v851 = vld [vmem:[#allocation2 + $0x1648] sm:$0xff]
    %v852 = vld [vmem:[#allocation2 + $0x1650] sm:$0xff]
    %v853 = vld [vmem:[#allocation2 + $0x1658] sm:$0xff]
    %v854 = vld [vmem:[#allocation2 + $0x1660] sm:$0xff]
    %v855 = vld [vmem:[#allocation2 + $0x1668] sm:$0xff]
    %v856 = vld [vmem:[#allocation2 + $0x1670] sm:$0xff]
    %v857 = vld [vmem:[#allocation2 + $0x1678] sm:$0xff]
    %v858 = vld [vmem:[#allocation2 + $0x1680] sm:$0xff]
    %v859 = vld [vmem:[#allocation2 + $0x1688] sm:$0xff]
    %v860 = vld [vmem:[#allocation2 + $0x1690] sm:$0xff]
    %v861 = vld [vmem:[#allocation2 + $0x1698] sm:$0xff]
    %v862 = vld [vmem:[#allocation2 + $0x16a0] sm:$0xff]
    %v863 = vld [vmem:[#allocation2 + $0x16a8] sm:$0xff]
    %v864 = vld [vmem:[#allocation2 + $0x16b0] sm:$0xff]
    %v865 = vld [vmem:[#allocation2 + $0x16b8] sm:$0xff]
    %v866 = vld [vmem:[#allocation2 + $0x16c0] sm:$0xff]
    %v867 = vld [vmem:[#allocation2 + $0x16c8] sm:$0xff]
    %v868 = vld [vmem:[#allocation2 + $0x16d0] sm:$0xff]
    %v869 = vld [vmem:[#allocation2 + $0x16d8] sm:$0xff]
    %v870 = vld [vmem:[#allocation2 + $0x16e0] sm:$0xff]
    %v871 = vld [vmem:[#allocation2 + $0x16e8] sm:$0xff]
    %v872 = vld [vmem:[#allocation2 + $0x16f0] sm:$0xff]
    %v873 = vld [vmem:[#allocation2 + $0x16f8] sm:$0xff]
    %v874 = vld [vmem:[#allocation2 + $0x1700] sm:$0xff]
    %v875 = vld [vmem:[#allocation2 + $0x1708] sm:$0xff]
    %v876 = vld [vmem:[#allocation2 + $0x1710] sm:$0xff]
    %v877 = vld [vmem:[#allocation2 + $0x1718] sm:$0xff]
    %v878 = vld [vmem:[#allocation2 + $0x1720] sm:$0xff]
    %v879 = vld [vmem:[#allocation2 + $0x1728] sm:$0xff]
    %v880 = vld [vmem:[#allocation2 + $0x1730] sm:$0xff]
    %v881 = vld [vmem:[#allocation2 + $0x1738] sm:$0xff]
    %v882 = vld [vmem:[#allocation2 + $0x1740] sm:$0xff]
    %v883 = vld [vmem:[#allocation2 + $0x1748] sm:$0xff]
    %v884 = vld [vmem:[#allocation2 + $0x1750] sm:$0xff]
    %v885 = vld [vmem:[#allocation2 + $0x1758] sm:$0xff]
    %v886 = vld [vmem:[#allocation2 + $0x1760] sm:$0xff]
    %v887 = vld [vmem:[#allocation2 + $0x1768] sm:$0xff]
    %v888 = vld [vmem:[#allocation2 + $0x1770] sm:$0xff]
    %v889 = vld [vmem:[#allocation2 + $0x1778] sm:$0xff]
    %v890 = vld [vmem:[#allocation2 + $0x1780] sm:$0xff]
    %v891 = vld [vmem:[#allocation2 + $0x1788] sm:$0xff]
    %v892 = vld [vmem:[#allocation2 + $0x1790] sm:$0xff]
    %v893 = vld [vmem:[#allocation2 + $0x1798] sm:$0xff]
    %v894 = vld [vmem:[#allocation2 + $0x17a0] sm:$0xff]
    %v895 = vld [vmem:[#allocation2 + $0x17a8] sm:$0xff]
    %v896 = vld [vmem:[#allocation2 + $0x17b0] sm:$0xff]
    %v897 = vld [vmem:[#allocation2 + $0x17b8] sm:$0xff]
    %v898 = vld [vmem:[#allocation2 + $0x17c0] sm:$0xff]
    %v899 = vld [vmem:[#allocation2 + $0x17c8] sm:$0xff]
    %v900 = vld [vmem:[#allocation2 + $0x17d0] sm:$0xff]
    %v901 = vld [vmem:[#allocation2 + $0x17d8] sm:$0xff]
    %v902 = vld [vmem:[#allocation2 + $0x17e0] sm:$0xff]
    %v903 = vld [vmem:[#allocation2 + $0x17e8] sm:$0xff]
    %v904 = vld [vmem:[#allocation2 + $0x17f0] sm:$0xff]
    %v905 = vld [vmem:[#allocation2 + $0x17f8] sm:$0xff]
    %v906 = vld [vmem:[#allocation4] sm:$0xf]
    %v908 = vperm.slane %v906, 0
    %v909 = vperm.slane %v906, 1
    %v910 = vperm.slane %v906, 2
    %v911 = vperm.slane %v906, 3
    %v940 = vunpack.c.l.b16 %v114
    %v941 = vunpack.c.h.b16 %v114
    %v942 = vunpack.c.l.b16 %v115
    %v943 = vunpack.c.h.b16 %v115
    %v944 = vunpack.c.l.b16 %v116
    %v945 = vunpack.c.h.b16 %v116
    %v946 = vunpack.c.l.b16 %v117
    %v947 = vunpack.c.h.b16 %v117
    %v948 = vunpack.c.l.b16 %v118
    %v949 = vunpack.c.h.b16 %v118
    %v950 = vunpack.c.l.b16 %v119
    %v951 = vunpack.c.h.b16 %v119
    %v952 = vunpack.c.l.b16 %v120
    %v953 = vunpack.c.h.b16 %v120
    %v954 = vunpack.c.l.b16 %v121
    %v955 = vunpack.c.h.b16 %v121
    %v956 = vunpack.c.l.b16 %v122
    %v957 = vunpack.c.h.b16 %v122
    %v958 = vunpack.c.l.b16 %v123
    %v959 = vunpack.c.h.b16 %v123
    %v960 = vunpack.c.l.b16 %v124
    %v961 = vunpack.c.h.b16 %v124
    %v962 = vunpack.c.l.b16 %v125
    %v963 = vunpack.c.h.b16 %v125
    %v964 = vunpack.c.l.b16 %v126
    %v965 = vunpack.c.h.b16 %v126
    %v966 = vunpack.c.l.b16 %v127
    %v967 = vunpack.c.h.b16 %v127
    %v968 = vunpack.c.l.b16 %v128
    %v969 = vunpack.c.h.b16 %v128
    %v970 = vunpack.c.l.b16 %v129
    %v971 = vunpack.c.h.b16 %v129
    %v972 = vunpack.c.l.b16 %v130
    %v973 = vunpack.c.h.b16 %v130
    %v974 = vunpack.c.l.b16 %v131
    %v975 = vunpack.c.h.b16 %v131
    %v976 = vunpack.c.l.b16 %v132
    %v977 = vunpack.c.h.b16 %v132
    %v978 = vunpack.c.l.b16 %v133
    %v979 = vunpack.c.h.b16 %v133
    %v980 = vunpack.c.l.b16 %v134
    %v981 = vunpack.c.h.b16 %v134
    %v982 = vunpack.c.l.b16 %v135
    %v983 = vunpack.c.h.b16 %v135
    %v984 = vunpack.c.l.b16 %v136
    %v985 = vunpack.c.h.b16 %v136
    %v986 = vunpack.c.l.b16 %v137
    %v987 = vunpack.c.h.b16 %v137
    %v988 = vpack.c.b16 %v964, %v940
    %v989 = vpack.c.b16 %v965, %v941
    %v990 = vpack.c.b16 %v966, %v942
    %v991 = vpack.c.b16 %v967, %v943
    %v992 = vpack.c.b16 %v968, %v944
    %v993 = vpack.c.b16 %v969, %v945
    %v994 = vpack.c.b16 %v970, %v946
    %v995 = vpack.c.b16 %v971, %v947
    %v996 = vpack.c.b16 %v972, %v948
    %v997 = vpack.c.b16 %v973, %v949
    %v998 = vpack.c.b16 %v974, %v950
    %v999 = vpack.c.b16 %v975, %v951
    %v1000 = vpack.c.b16 %v976, %v952
    %v1001 = vpack.c.b16 %v977, %v953
    %v1002 = vpack.c.b16 %v978, %v954
    %v1003 = vpack.c.b16 %v979, %v955
    %v1004 = vpack.c.b16 %v980, %v956
    %v1005 = vpack.c.b16 %v981, %v957
    %v1006 = vpack.c.b16 %v982, %v958
    %v1007 = vpack.c.b16 %v983, %v959
    %v1008 = vpack.c.b16 %v984, %v960
    %v1009 = vpack.c.b16 %v985, %v961
    %v1010 = vpack.c.b16 %v986, %v962
    %v1011 = vpack.c.b16 %v987, %v963
    %v1804 = vunpack.c.l.b16 %v138
    %v1805 = vunpack.c.h.b16 %v138
    %v1806 = vunpack.c.l.b16 %v139
    %v1807 = vunpack.c.h.b16 %v139
    %v1808 = vunpack.c.l.b16 %v140
    %v1809 = vunpack.c.h.b16 %v140
    %v1810 = vunpack.c.l.b16 %v141
    %v1811 = vunpack.c.h.b16 %v141
    %v1812 = vunpack.c.l.b16 %v142
    %v1813 = vunpack.c.h.b16 %v142
    %v1814 = vunpack.c.l.b16 %v143
    %v1815 = vunpack.c.h.b16 %v143
    %v1816 = vunpack.c.l.b16 %v144
    %v1817 = vunpack.c.h.b16 %v144
    %v1818 = vunpack.c.l.b16 %v145
    %v1819 = vunpack.c.h.b16 %v145
    %v1820 = vunpack.c.l.b16 %v146
    %v1821 = vunpack.c.h.b16 %v146
    %v1822 = vunpack.c.l.b16 %v147
    %v1823 = vunpack.c.h.b16 %v147
    %v1824 = vunpack.c.l.b16 %v148
    %v1825 = vunpack.c.h.b16 %v148
    %v1826 = vunpack.c.l.b16 %v149
    %v1827 = vunpack.c.h.b16 %v149
    %v1828 = vunpack.c.l.b16 %v150
    %v1829 = vunpack.c.h.b16 %v150
    %v1830 = vunpack.c.l.b16 %v151
    %v1831 = vunpack.c.h.b16 %v151
    %v1832 = vunpack.c.l.b16 %v152
    %v1833 = vunpack.c.h.b16 %v152
    %v1834 = vunpack.c.l.b16 %v153
    %v1835 = vunpack.c.h.b16 %v153
    %v1836 = vunpack.c.l.b16 %v154
    %v1837 = vunpack.c.h.b16 %v154
    %v1838 = vunpack.c.l.b16 %v155
    %v1839 = vunpack.c.h.b16 %v155
    %v1840 = vunpack.c.l.b16 %v156
    %v1841 = vunpack.c.h.b16 %v156
    %v1842 = vunpack.c.l.b16 %v157
    %v1843 = vunpack.c.h.b16 %v157
    %v1844 = vunpack.c.l.b16 %v158
    %v1845 = vunpack.c.h.b16 %v158
    %v1846 = vunpack.c.l.b16 %v159
    %v1847 = vunpack.c.h.b16 %v159
    %v1848 = vunpack.c.l.b16 %v160
    %v1849 = vunpack.c.h.b16 %v160
    %v1850 = vunpack.c.l.b16 %v161
    %v1851 = vunpack.c.h.b16 %v161
    %v1852 = vunpack.c.l.b16 %v162
    %v1853 = vunpack.c.h.b16 %v162
    %v1854 = vunpack.c.l.b16 %v163
    %v1855 = vunpack.c.h.b16 %v163
    %v1856 = vunpack.c.l.b16 %v164
    %v1857 = vunpack.c.h.b16 %v164
    %v1858 = vunpack.c.l.b16 %v165
    %v1859 = vunpack.c.h.b16 %v165
    %v1860 = vunpack.c.l.b16 %v166
    %v1861 = vunpack.c.h.b16 %v166
    %v1862 = vunpack.c.l.b16 %v167
    %v1863 = vunpack.c.h.b16 %v167
    %v1864 = vunpack.c.l.b16 %v168
    %v1865 = vunpack.c.h.b16 %v168
    %v1866 = vunpack.c.l.b16 %v169
    %v1867 = vunpack.c.h.b16 %v169
    %v1868 = vunpack.c.l.b16 %v170
    %v1869 = vunpack.c.h.b16 %v170
    %v1870 = vunpack.c.l.b16 %v171
    %v1871 = vunpack.c.h.b16 %v171
    %v1872 = vunpack.c.l.b16 %v172
    %v1873 = vunpack.c.h.b16 %v172
    %v1874 = vunpack.c.l.b16 %v173
    %v1875 = vunpack.c.h.b16 %v173
    %v1876 = vunpack.c.l.b16 %v174
    %v1877 = vunpack.c.h.b16 %v174
    %v1878 = vunpack.c.l.b16 %v175
    %v1879 = vunpack.c.h.b16 %v175
    %v1880 = vunpack.c.l.b16 %v176
    %v1881 = vunpack.c.h.b16 %v176
    %v1882 = vunpack.c.l.b16 %v177
    %v1883 = vunpack.c.h.b16 %v177
    %v1884 = vunpack.c.l.b16 %v178
    %v1885 = vunpack.c.h.b16 %v178
    %v1886 = vunpack.c.l.b16 %v179
    %v1887 = vunpack.c.h.b16 %v179
    %v1888 = vunpack.c.l.b16 %v180
    %v1889 = vunpack.c.h.b16 %v180
    %v1890 = vunpack.c.l.b16 %v181
    %v1891 = vunpack.c.h.b16 %v181
    %v1892 = vunpack.c.l.b16 %v182
    %v1893 = vunpack.c.h.b16 %v182
    %v1894 = vunpack.c.l.b16 %v183
    %v1895 = vunpack.c.h.b16 %v183
    %v1896 = vunpack.c.l.b16 %v184
    %v1897 = vunpack.c.h.b16 %v184
    %v1898 = vunpack.c.l.b16 %v185
    %v1899 = vunpack.c.h.b16 %v185
    %v1900 = vunpack.c.l.b16 %v186
    %v1901 = vunpack.c.h.b16 %v186
    %v1902 = vunpack.c.l.b16 %v187
    %v1903 = vunpack.c.h.b16 %v187
    %v1904 = vunpack.c.l.b16 %v188
    %v1905 = vunpack.c.h.b16 %v188
    %v1906 = vunpack.c.l.b16 %v189
    %v1907 = vunpack.c.h.b16 %v189
    %v1908 = vunpack.c.l.b16 %v190
    %v1909 = vunpack.c.h.b16 %v190
    %v1910 = vunpack.c.l.b16 %v191
    %v1911 = vunpack.c.h.b16 %v191
    %v1912 = vunpack.c.l.b16 %v192
    %v1913 = vunpack.c.h.b16 %v192
    %v1914 = vunpack.c.l.b16 %v193
    %v1915 = vunpack.c.h.b16 %v193
    %v1916 = vunpack.c.l.b16 %v194
    %v1917 = vunpack.c.h.b16 %v194
    %v1918 = vunpack.c.l.b16 %v195
    %v1919 = vunpack.c.h.b16 %v195
    %v1920 = vunpack.c.l.b16 %v196
    %v1921 = vunpack.c.h.b16 %v196
    %v1922 = vunpack.c.l.b16 %v197
    %v1923 = vunpack.c.h.b16 %v197
    %v1924 = vunpack.c.l.b16 %v198
    %v1925 = vunpack.c.h.b16 %v198
    %v1926 = vunpack.c.l.b16 %v199
    %v1927 = vunpack.c.h.b16 %v199
    %v1928 = vunpack.c.l.b16 %v200
    %v1929 = vunpack.c.h.b16 %v200
    %v1930 = vunpack.c.l.b16 %v201
    %v1931 = vunpack.c.h.b16 %v201
    %v1932 = vunpack.c.l.b16 %v202
    %v1933 = vunpack.c.h.b16 %v202
    %v1934 = vunpack.c.l.b16 %v203
    %v1935 = vunpack.c.h.b16 %v203
    %v1936 = vunpack.c.l.b16 %v204
    %v1937 = vunpack.c.h.b16 %v204
    %v1938 = vunpack.c.l.b16 %v205
    %v1939 = vunpack.c.h.b16 %v205
    %v1940 = vunpack.c.l.b16 %v206
    %v1941 = vunpack.c.h.b16 %v206
    %v1942 = vunpack.c.l.b16 %v207
    %v1943 = vunpack.c.h.b16 %v207
    %v1944 = vunpack.c.l.b16 %v208
    %v1945 = vunpack.c.h.b16 %v208
    %v1946 = vunpack.c.l.b16 %v209
    %v1947 = vunpack.c.h.b16 %v209
    %v1948 = vunpack.c.l.b16 %v210
    %v1949 = vunpack.c.h.b16 %v210
    %v1950 = vunpack.c.l.b16 %v211
    %v1951 = vunpack.c.h.b16 %v211
    %v1952 = vunpack.c.l.b16 %v212
    %v1953 = vunpack.c.h.b16 %v212
    %v1954 = vunpack.c.l.b16 %v213
    %v1955 = vunpack.c.h.b16 %v213
    %v1956 = vunpack.c.l.b16 %v214
    %v1957 = vunpack.c.h.b16 %v214
    %v1958 = vunpack.c.l.b16 %v215
    %v1959 = vunpack.c.h.b16 %v215
    %v1960 = vunpack.c.l.b16 %v216
    %v1961 = vunpack.c.h.b16 %v216
    %v1962 = vunpack.c.l.b16 %v217
    %v1963 = vunpack.c.h.b16 %v217
    %v1964 = vunpack.c.l.b16 %v218
    %v1965 = vunpack.c.h.b16 %v218
    %v1966 = vunpack.c.l.b16 %v219
    %v1967 = vunpack.c.h.b16 %v219
    %v1968 = vunpack.c.l.b16 %v220
    %v1969 = vunpack.c.h.b16 %v220
    %v1970 = vunpack.c.l.b16 %v221
    %v1971 = vunpack.c.h.b16 %v221
    %v1972 = vunpack.c.l.b16 %v222
    %v1973 = vunpack.c.h.b16 %v222
    %v1974 = vunpack.c.l.b16 %v223
    %v1975 = vunpack.c.h.b16 %v223
    %v1976 = vunpack.c.l.b16 %v224
    %v1977 = vunpack.c.h.b16 %v224
    %v1978 = vunpack.c.l.b16 %v225
    %v1979 = vunpack.c.h.b16 %v225
    %v1980 = vunpack.c.l.b16 %v226
    %v1981 = vunpack.c.h.b16 %v226
    %v1982 = vunpack.c.l.b16 %v227
    %v1983 = vunpack.c.h.b16 %v227
    %v1984 = vunpack.c.l.b16 %v228
    %v1985 = vunpack.c.h.b16 %v228
    %v1986 = vunpack.c.l.b16 %v229
    %v1987 = vunpack.c.h.b16 %v229
    %v1988 = vunpack.c.l.b16 %v230
    %v1989 = vunpack.c.h.b16 %v230
    %v1990 = vunpack.c.l.b16 %v231
    %v1991 = vunpack.c.h.b16 %v231
    %v1992 = vunpack.c.l.b16 %v232
    %v1993 = vunpack.c.h.b16 %v232
    %v1994 = vunpack.c.l.b16 %v233
    %v1995 = vunpack.c.h.b16 %v233
    %v1996 = vunpack.c.l.b16 %v234
    %v1997 = vunpack.c.h.b16 %v234
    %v1998 = vunpack.c.l.b16 %v235
    %v1999 = vunpack.c.h.b16 %v235
    %v2000 = vunpack.c.l.b16 %v236
    %v2001 = vunpack.c.h.b16 %v236
    %v2002 = vunpack.c.l.b16 %v237
    %v2003 = vunpack.c.h.b16 %v237
    %v2004 = vunpack.c.l.b16 %v238
    %v2005 = vunpack.c.h.b16 %v238
    %v2006 = vunpack.c.l.b16 %v239
    %v2007 = vunpack.c.h.b16 %v239
    %v2008 = vunpack.c.l.b16 %v240
    %v2009 = vunpack.c.h.b16 %v240
    %v2010 = vunpack.c.l.b16 %v241
    %v2011 = vunpack.c.h.b16 %v241
    %v2012 = vunpack.c.l.b16 %v242
    %v2013 = vunpack.c.h.b16 %v242
    %v2014 = vunpack.c.l.b16 %v243
    %v2015 = vunpack.c.h.b16 %v243
    %v2016 = vunpack.c.l.b16 %v244
    %v2017 = vunpack.c.h.b16 %v244
    %v2018 = vunpack.c.l.b16 %v245
    %v2019 = vunpack.c.h.b16 %v245
    %v2020 = vunpack.c.l.b16 %v246
    %v2021 = vunpack.c.h.b16 %v246
    %v2022 = vunpack.c.l.b16 %v247
    %v2023 = vunpack.c.h.b16 %v247
    %v2024 = vunpack.c.l.b16 %v248
    %v2025 = vunpack.c.h.b16 %v248
    %v2026 = vunpack.c.l.b16 %v249
    %v2027 = vunpack.c.h.b16 %v249
    %v2028 = vunpack.c.l.b16 %v250
    %v2029 = vunpack.c.h.b16 %v250
    %v2030 = vunpack.c.l.b16 %v251
    %v2031 = vunpack.c.h.b16 %v251
    %v2032 = vunpack.c.l.b16 %v252
    %v2033 = vunpack.c.h.b16 %v252
    %v2034 = vunpack.c.l.b16 %v253
    %v2035 = vunpack.c.h.b16 %v253
    %v2036 = vunpack.c.l.b16 %v254
    %v2037 = vunpack.c.h.b16 %v254
    %v2038 = vunpack.c.l.b16 %v255
    %v2039 = vunpack.c.h.b16 %v255
    %v2040 = vunpack.c.l.b16 %v256
    %v2041 = vunpack.c.h.b16 %v256
    %v2042 = vunpack.c.l.b16 %v257
    %v2043 = vunpack.c.h.b16 %v257
    %v2044 = vunpack.c.l.b16 %v258
    %v2045 = vunpack.c.h.b16 %v258
    %v2046 = vunpack.c.l.b16 %v259
    %v2047 = vunpack.c.h.b16 %v259
    %v2048 = vunpack.c.l.b16 %v260
    %v2049 = vunpack.c.h.b16 %v260
    %v2050 = vunpack.c.l.b16 %v261
    %v2051 = vunpack.c.h.b16 %v261
    %v2052 = vunpack.c.l.b16 %v262
    %v2053 = vunpack.c.h.b16 %v262
    %v2054 = vunpack.c.l.b16 %v263
    %v2055 = vunpack.c.h.b16 %v263
    %v2056 = vunpack.c.l.b16 %v264
    %v2057 = vunpack.c.h.b16 %v264
    %v2058 = vunpack.c.l.b16 %v265
    %v2059 = vunpack.c.h.b16 %v265
    %v2060 = vunpack.c.l.b16 %v266
    %v2061 = vunpack.c.h.b16 %v266
    %v2062 = vunpack.c.l.b16 %v267
    %v2063 = vunpack.c.h.b16 %v267
    %v2064 = vunpack.c.l.b16 %v268
    %v2065 = vunpack.c.h.b16 %v268
    %v2066 = vunpack.c.l.b16 %v269
    %v2067 = vunpack.c.h.b16 %v269
    %v2068 = vunpack.c.l.b16 %v270
    %v2069 = vunpack.c.h.b16 %v270
    %v2070 = vunpack.c.l.b16 %v271
    %v2071 = vunpack.c.h.b16 %v271
    %v2072 = vunpack.c.l.b16 %v272
    %v2073 = vunpack.c.h.b16 %v272
    %v2074 = vunpack.c.l.b16 %v273
    %v2075 = vunpack.c.h.b16 %v273
    %v2076 = vunpack.c.l.b16 %v274
    %v2077 = vunpack.c.h.b16 %v274
    %v2078 = vunpack.c.l.b16 %v275
    %v2079 = vunpack.c.h.b16 %v275
    %v2080 = vunpack.c.l.b16 %v276
    %v2081 = vunpack.c.h.b16 %v276
    %v2082 = vunpack.c.l.b16 %v277
    %v2083 = vunpack.c.h.b16 %v277
    %v2084 = vunpack.c.l.b16 %v278
    %v2085 = vunpack.c.h.b16 %v278
    %v2086 = vunpack.c.l.b16 %v279
    %v2087 = vunpack.c.h.b16 %v279
    %v2088 = vunpack.c.l.b16 %v280
    %v2089 = vunpack.c.h.b16 %v280
    %v2090 = vunpack.c.l.b16 %v281
    %v2091 = vunpack.c.h.b16 %v281
    %v2092 = vunpack.c.l.b16 %v282
    %v2093 = vunpack.c.h.b16 %v282
    %v2094 = vunpack.c.l.b16 %v283
    %v2095 = vunpack.c.h.b16 %v283
    %v2096 = vunpack.c.l.b16 %v284
    %v2097 = vunpack.c.h.b16 %v284
    %v2098 = vunpack.c.l.b16 %v285
    %v2099 = vunpack.c.h.b16 %v285
    %v2100 = vunpack.c.l.b16 %v286
    %v2101 = vunpack.c.h.b16 %v286
    %v2102 = vunpack.c.l.b16 %v287
    %v2103 = vunpack.c.h.b16 %v287
    %v2104 = vunpack.c.l.b16 %v288
    %v2105 = vunpack.c.h.b16 %v288
    %v2106 = vunpack.c.l.b16 %v289
    %v2107 = vunpack.c.h.b16 %v289
    %v2108 = vunpack.c.l.b16 %v290
    %v2109 = vunpack.c.h.b16 %v290
    %v2110 = vunpack.c.l.b16 %v291
    %v2111 = vunpack.c.h.b16 %v291
    %v2112 = vunpack.c.l.b16 %v292
    %v2113 = vunpack.c.h.b16 %v292
    %v2114 = vunpack.c.l.b16 %v293
    %v2115 = vunpack.c.h.b16 %v293
    %v2116 = vunpack.c.l.b16 %v294
    %v2117 = vunpack.c.h.b16 %v294
    %v2118 = vunpack.c.l.b16 %v295
    %v2119 = vunpack.c.h.b16 %v295
    %v2120 = vunpack.c.l.b16 %v296
    %v2121 = vunpack.c.h.b16 %v296
    %v2122 = vunpack.c.l.b16 %v297
    %v2123 = vunpack.c.h.b16 %v297
    %v2124 = vunpack.c.l.b16 %v298
    %v2125 = vunpack.c.h.b16 %v298
    %v2126 = vunpack.c.l.b16 %v299
    %v2127 = vunpack.c.h.b16 %v299
    %v2128 = vunpack.c.l.b16 %v300
    %v2129 = vunpack.c.h.b16 %v300
    %v2130 = vunpack.c.l.b16 %v301
    %v2131 = vunpack.c.h.b16 %v301
    %v2132 = vunpack.c.l.b16 %v302
    %v2133 = vunpack.c.h.b16 %v302
    %v2134 = vunpack.c.l.b16 %v303
    %v2135 = vunpack.c.h.b16 %v303
    %v2136 = vunpack.c.l.b16 %v304
    %v2137 = vunpack.c.h.b16 %v304
    %v2138 = vunpack.c.l.b16 %v305
    %v2139 = vunpack.c.h.b16 %v305
    %v2140 = vunpack.c.l.b16 %v306
    %v2141 = vunpack.c.h.b16 %v306
    %v2142 = vunpack.c.l.b16 %v307
    %v2143 = vunpack.c.h.b16 %v307
    %v2144 = vunpack.c.l.b16 %v308
    %v2145 = vunpack.c.h.b16 %v308
    %v2146 = vunpack.c.l.b16 %v309
    %v2147 = vunpack.c.h.b16 %v309
    %v2148 = vunpack.c.l.b16 %v310
    %v2149 = vunpack.c.h.b16 %v310
    %v2150 = vunpack.c.l.b16 %v311
    %v2151 = vunpack.c.h.b16 %v311
    %v2152 = vunpack.c.l.b16 %v312
    %v2153 = vunpack.c.h.b16 %v312
    %v2154 = vunpack.c.l.b16 %v313
    %v2155 = vunpack.c.h.b16 %v313
    %v2156 = vunpack.c.l.b16 %v314
    %v2157 = vunpack.c.h.b16 %v314
    %v2158 = vunpack.c.l.b16 %v315
    %v2159 = vunpack.c.h.b16 %v315
    %v2160 = vunpack.c.l.b16 %v316
    %v2161 = vunpack.c.h.b16 %v316
    %v2162 = vunpack.c.l.b16 %v317
    %v2163 = vunpack.c.h.b16 %v317
    %v2164 = vunpack.c.l.b16 %v318
    %v2165 = vunpack.c.h.b16 %v318
    %v2166 = vunpack.c.l.b16 %v319
    %v2167 = vunpack.c.h.b16 %v319
    %v2168 = vunpack.c.l.b16 %v320
    %v2169 = vunpack.c.h.b16 %v320
    %v2170 = vunpack.c.l.b16 %v321
    %v2171 = vunpack.c.h.b16 %v321
    %v2172 = vunpack.c.l.b16 %v322
    %v2173 = vunpack.c.h.b16 %v322
    %v2174 = vunpack.c.l.b16 %v323
    %v2175 = vunpack.c.h.b16 %v323
    %v2176 = vunpack.c.l.b16 %v324
    %v2177 = vunpack.c.h.b16 %v324
    %v2178 = vunpack.c.l.b16 %v325
    %v2179 = vunpack.c.h.b16 %v325
    %v2180 = vunpack.c.l.b16 %v326
    %v2181 = vunpack.c.h.b16 %v326
    %v2182 = vunpack.c.l.b16 %v327
    %v2183 = vunpack.c.h.b16 %v327
    %v2184 = vunpack.c.l.b16 %v328
    %v2185 = vunpack.c.h.b16 %v328
    %v2186 = vunpack.c.l.b16 %v329
    %v2187 = vunpack.c.h.b16 %v329
    %v2188 = vunpack.c.l.b16 %v330
    %v2189 = vunpack.c.h.b16 %v330
    %v2190 = vunpack.c.l.b16 %v331
    %v2191 = vunpack.c.h.b16 %v331
    %v2192 = vunpack.c.l.b16 %v332
    %v2193 = vunpack.c.h.b16 %v332
    %v2194 = vunpack.c.l.b16 %v333
    %v2195 = vunpack.c.h.b16 %v333
    %v2196 = vunpack.c.l.b16 %v334
    %v2197 = vunpack.c.h.b16 %v334
    %v2198 = vunpack.c.l.b16 %v335
    %v2199 = vunpack.c.h.b16 %v335
    %v2200 = vunpack.c.l.b16 %v336
    %v2201 = vunpack.c.h.b16 %v336
    %v2202 = vunpack.c.l.b16 %v337
    %v2203 = vunpack.c.h.b16 %v337
    %v2204 = vunpack.c.l.b16 %v338
    %v2205 = vunpack.c.h.b16 %v338
    %v2206 = vunpack.c.l.b16 %v339
    %v2207 = vunpack.c.h.b16 %v339
    %v2208 = vunpack.c.l.b16 %v340
    %v2209 = vunpack.c.h.b16 %v340
    %v2210 = vunpack.c.l.b16 %v341
    %v2211 = vunpack.c.h.b16 %v341
    %v2212 = vunpack.c.l.b16 %v342
    %v2213 = vunpack.c.h.b16 %v342
    %v2214 = vunpack.c.l.b16 %v343
    %v2215 = vunpack.c.h.b16 %v343
    %v2216 = vunpack.c.l.b16 %v344
    %v2217 = vunpack.c.h.b16 %v344
    %v2218 = vunpack.c.l.b16 %v345
    %v2219 = vunpack.c.h.b16 %v345
    %v2220 = vunpack.c.l.b16 %v346
    %v2221 = vunpack.c.h.b16 %v346
    %v2222 = vunpack.c.l.b16 %v347
    %v2223 = vunpack.c.h.b16 %v347
    %v2224 = vunpack.c.l.b16 %v348
    %v2225 = vunpack.c.h.b16 %v348
    %v2226 = vunpack.c.l.b16 %v349
    %v2227 = vunpack.c.h.b16 %v349
    %v2228 = vunpack.c.l.b16 %v350
    %v2229 = vunpack.c.h.b16 %v350
    %v2230 = vunpack.c.l.b16 %v351
    %v2231 = vunpack.c.h.b16 %v351
    %v2232 = vunpack.c.l.b16 %v352
    %v2233 = vunpack.c.h.b16 %v352
    %v2234 = vunpack.c.l.b16 %v353
    %v2235 = vunpack.c.h.b16 %v353
    %v2236 = vunpack.c.l.b16 %v354
    %v2237 = vunpack.c.h.b16 %v354
    %v2238 = vunpack.c.l.b16 %v355
    %v2239 = vunpack.c.h.b16 %v355
    %v2240 = vunpack.c.l.b16 %v356
    %v2241 = vunpack.c.h.b16 %v356
    %v2242 = vunpack.c.l.b16 %v357
    %v2243 = vunpack.c.h.b16 %v357
    %v2244 = vunpack.c.l.b16 %v358
    %v2245 = vunpack.c.h.b16 %v358
    %v2246 = vunpack.c.l.b16 %v359
    %v2247 = vunpack.c.h.b16 %v359
    %v2248 = vunpack.c.l.b16 %v360
    %v2249 = vunpack.c.h.b16 %v360
    %v2250 = vunpack.c.l.b16 %v361
    %v2251 = vunpack.c.h.b16 %v361
    %v2252 = vunpack.c.l.b16 %v362
    %v2253 = vunpack.c.h.b16 %v362
    %v2254 = vunpack.c.l.b16 %v363
    %v2255 = vunpack.c.h.b16 %v363
    %v2256 = vunpack.c.l.b16 %v364
    %v2257 = vunpack.c.h.b16 %v364
    %v2258 = vunpack.c.l.b16 %v365
    %v2259 = vunpack.c.h.b16 %v365
    %v2260 = vunpack.c.l.b16 %v366
    %v2261 = vunpack.c.h.b16 %v366
    %v2262 = vunpack.c.l.b16 %v367
    %v2263 = vunpack.c.h.b16 %v367
    %v2264 = vunpack.c.l.b16 %v368
    %v2265 = vunpack.c.h.b16 %v368
    %v2266 = vunpack.c.l.b16 %v369
    %v2267 = vunpack.c.h.b16 %v369
    %v2268 = vunpack.c.l.b16 %v370
    %v2269 = vunpack.c.h.b16 %v370
    %v2270 = vunpack.c.l.b16 %v371
    %v2271 = vunpack.c.h.b16 %v371
    %v2272 = vunpack.c.l.b16 %v372
    %v2273 = vunpack.c.h.b16 %v372
    %v2274 = vunpack.c.l.b16 %v373
    %v2275 = vunpack.c.h.b16 %v373
    %v2276 = vunpack.c.l.b16 %v374
    %v2277 = vunpack.c.h.b16 %v374
    %v2278 = vunpack.c.l.b16 %v375
    %v2279 = vunpack.c.h.b16 %v375
    %v2280 = vunpack.c.l.b16 %v376
    %v2281 = vunpack.c.h.b16 %v376
    %v2282 = vunpack.c.l.b16 %v377
    %v2283 = vunpack.c.h.b16 %v377
    %v2284 = vunpack.c.l.b16 %v378
    %v2285 = vunpack.c.h.b16 %v378
    %v2286 = vunpack.c.l.b16 %v379
    %v2287 = vunpack.c.h.b16 %v379
    %v2288 = vunpack.c.l.b16 %v380
    %v2289 = vunpack.c.h.b16 %v380
    %v2290 = vunpack.c.l.b16 %v381
    %v2291 = vunpack.c.h.b16 %v381
    %v2292 = vunpack.c.l.b16 %v382
    %v2293 = vunpack.c.h.b16 %v382
    %v2294 = vunpack.c.l.b16 %v383
    %v2295 = vunpack.c.h.b16 %v383
    %v2296 = vunpack.c.l.b16 %v384
    %v2297 = vunpack.c.h.b16 %v384
    %v2298 = vunpack.c.l.b16 %v385
    %v2299 = vunpack.c.h.b16 %v385
    %v2300 = vunpack.c.l.b16 %v386
    %v2301 = vunpack.c.h.b16 %v386
    %v2302 = vunpack.c.l.b16 %v387
    %v2303 = vunpack.c.h.b16 %v387
    %v2304 = vunpack.c.l.b16 %v388
    %v2305 = vunpack.c.h.b16 %v388
    %v2306 = vunpack.c.l.b16 %v389
    %v2307 = vunpack.c.h.b16 %v389
    %v2308 = vunpack.c.l.b16 %v390
    %v2309 = vunpack.c.h.b16 %v390
    %v2310 = vunpack.c.l.b16 %v391
    %v2311 = vunpack.c.h.b16 %v391
    %v2312 = vunpack.c.l.b16 %v392
    %v2313 = vunpack.c.h.b16 %v392
    %v2314 = vunpack.c.l.b16 %v393
    %v2315 = vunpack.c.h.b16 %v393
    %v2316 = vunpack.c.l.b16 %v394
    %v2317 = vunpack.c.h.b16 %v394
    %v2318 = vunpack.c.l.b16 %v395
    %v2319 = vunpack.c.h.b16 %v395
    %v2320 = vunpack.c.l.b16 %v396
    %v2321 = vunpack.c.h.b16 %v396
    %v2322 = vunpack.c.l.b16 %v397
    %v2323 = vunpack.c.h.b16 %v397
    %v2324 = vunpack.c.l.b16 %v398
    %v2325 = vunpack.c.h.b16 %v398
    %v2326 = vunpack.c.l.b16 %v399
    %v2327 = vunpack.c.h.b16 %v399
    %v2328 = vunpack.c.l.b16 %v400
    %v2329 = vunpack.c.h.b16 %v400
    %v2330 = vunpack.c.l.b16 %v401
    %v2331 = vunpack.c.h.b16 %v401
    %v2332 = vunpack.c.l.b16 %v402
    %v2333 = vunpack.c.h.b16 %v402
    %v2334 = vunpack.c.l.b16 %v403
    %v2335 = vunpack.c.h.b16 %v403
    %v2336 = vunpack.c.l.b16 %v404
    %v2337 = vunpack.c.h.b16 %v404
    %v2338 = vunpack.c.l.b16 %v405
    %v2339 = vunpack.c.h.b16 %v405
    %v2340 = vunpack.c.l.b16 %v406
    %v2341 = vunpack.c.h.b16 %v406
    %v2342 = vunpack.c.l.b16 %v407
    %v2343 = vunpack.c.h.b16 %v407
    %v2344 = vunpack.c.l.b16 %v408
    %v2345 = vunpack.c.h.b16 %v408
    %v2346 = vunpack.c.l.b16 %v409
    %v2347 = vunpack.c.h.b16 %v409
    %v2348 = vunpack.c.l.b16 %v410
    %v2349 = vunpack.c.h.b16 %v410
    %v2350 = vunpack.c.l.b16 %v411
    %v2351 = vunpack.c.h.b16 %v411
    %v2352 = vunpack.c.l.b16 %v412
    %v2353 = vunpack.c.h.b16 %v412
    %v2354 = vunpack.c.l.b16 %v413
    %v2355 = vunpack.c.h.b16 %v413
    %v2356 = vunpack.c.l.b16 %v414
    %v2357 = vunpack.c.h.b16 %v414
    %v2358 = vunpack.c.l.b16 %v415
    %v2359 = vunpack.c.h.b16 %v415
    %v2360 = vunpack.c.l.b16 %v416
    %v2361 = vunpack.c.h.b16 %v416
    %v2362 = vunpack.c.l.b16 %v417
    %v2363 = vunpack.c.h.b16 %v417
    %v2364 = vunpack.c.l.b16 %v418
    %v2365 = vunpack.c.h.b16 %v418
    %v2366 = vunpack.c.l.b16 %v419
    %v2367 = vunpack.c.h.b16 %v419
    %v2368 = vunpack.c.l.b16 %v420
    %v2369 = vunpack.c.h.b16 %v420
    %v2370 = vunpack.c.l.b16 %v421
    %v2371 = vunpack.c.h.b16 %v421
    %v2372 = vunpack.c.l.b16 %v422
    %v2373 = vunpack.c.h.b16 %v422
    %v2374 = vunpack.c.l.b16 %v423
    %v2375 = vunpack.c.h.b16 %v423
    %v2376 = vunpack.c.l.b16 %v424
    %v2377 = vunpack.c.h.b16 %v424
    %v2378 = vunpack.c.l.b16 %v425
    %v2379 = vunpack.c.h.b16 %v425
    %v2380 = vunpack.c.l.b16 %v426
    %v2381 = vunpack.c.h.b16 %v426
    %v2382 = vunpack.c.l.b16 %v427
    %v2383 = vunpack.c.h.b16 %v427
    %v2384 = vunpack.c.l.b16 %v428
    %v2385 = vunpack.c.h.b16 %v428
    %v2386 = vunpack.c.l.b16 %v429
    %v2387 = vunpack.c.h.b16 %v429
    %v2388 = vunpack.c.l.b16 %v430
    %v2389 = vunpack.c.h.b16 %v430
    %v2390 = vunpack.c.l.b16 %v431
    %v2391 = vunpack.c.h.b16 %v431
    %v2392 = vunpack.c.l.b16 %v432
    %v2393 = vunpack.c.h.b16 %v432
    %v2394 = vunpack.c.l.b16 %v433
    %v2395 = vunpack.c.h.b16 %v433
    %v2396 = vunpack.c.l.b16 %v434
    %v2397 = vunpack.c.h.b16 %v434
    %v2398 = vunpack.c.l.b16 %v435
    %v2399 = vunpack.c.h.b16 %v435
    %v2400 = vunpack.c.l.b16 %v436
    %v2401 = vunpack.c.h.b16 %v436
    %v2402 = vunpack.c.l.b16 %v437
    %v2403 = vunpack.c.h.b16 %v437
    %v2404 = vunpack.c.l.b16 %v438
    %v2405 = vunpack.c.h.b16 %v438
    %v2406 = vunpack.c.l.b16 %v439
    %v2407 = vunpack.c.h.b16 %v439
    %v2408 = vunpack.c.l.b16 %v440
    %v2409 = vunpack.c.h.b16 %v440
    %v2410 = vunpack.c.l.b16 %v441
    %v2411 = vunpack.c.h.b16 %v441
    %v2412 = vunpack.c.l.b16 %v442
    %v2413 = vunpack.c.h.b16 %v442
    %v2414 = vunpack.c.l.b16 %v443
    %v2415 = vunpack.c.h.b16 %v443
    %v2416 = vunpack.c.l.b16 %v444
    %v2417 = vunpack.c.h.b16 %v444
    %v2418 = vunpack.c.l.b16 %v445
    %v2419 = vunpack.c.h.b16 %v445
    %v2420 = vunpack.c.l.b16 %v446
    %v2421 = vunpack.c.h.b16 %v446
    %v2422 = vunpack.c.l.b16 %v447
    %v2423 = vunpack.c.h.b16 %v447
    %v2424 = vunpack.c.l.b16 %v448
    %v2425 = vunpack.c.h.b16 %v448
    %v2426 = vunpack.c.l.b16 %v449
    %v2427 = vunpack.c.h.b16 %v449
    %v2428 = vunpack.c.l.b16 %v450
    %v2429 = vunpack.c.h.b16 %v450
    %v2430 = vunpack.c.l.b16 %v451
    %v2431 = vunpack.c.h.b16 %v451
    %v2432 = vunpack.c.l.b16 %v452
    %v2433 = vunpack.c.h.b16 %v452
    %v2434 = vunpack.c.l.b16 %v453
    %v2435 = vunpack.c.h.b16 %v453
    %v2436 = vunpack.c.l.b16 %v454
    %v2437 = vunpack.c.h.b16 %v454
    %v2438 = vunpack.c.l.b16 %v455
    %v2439 = vunpack.c.h.b16 %v455
    %v2440 = vunpack.c.l.b16 %v456
    %v2441 = vunpack.c.h.b16 %v456
    %v2442 = vunpack.c.l.b16 %v457
    %v2443 = vunpack.c.h.b16 %v457
    %v2444 = vunpack.c.l.b16 %v458
    %v2445 = vunpack.c.h.b16 %v458
    %v2446 = vunpack.c.l.b16 %v459
    %v2447 = vunpack.c.h.b16 %v459
    %v2448 = vunpack.c.l.b16 %v460
    %v2449 = vunpack.c.h.b16 %v460
    %v2450 = vunpack.c.l.b16 %v461
    %v2451 = vunpack.c.h.b16 %v461
    %v2452 = vunpack.c.l.b16 %v462
    %v2453 = vunpack.c.h.b16 %v462
    %v2454 = vunpack.c.l.b16 %v463
    %v2455 = vunpack.c.h.b16 %v463
    %v2456 = vunpack.c.l.b16 %v464
    %v2457 = vunpack.c.h.b16 %v464
    %v2458 = vunpack.c.l.b16 %v465
    %v2459 = vunpack.c.h.b16 %v465
    %v2460 = vunpack.c.l.b16 %v466
    %v2461 = vunpack.c.h.b16 %v466
    %v2462 = vunpack.c.l.b16 %v467
    %v2463 = vunpack.c.h.b16 %v467
    %v2464 = vunpack.c.l.b16 %v468
    %v2465 = vunpack.c.h.b16 %v468
    %v2466 = vunpack.c.l.b16 %v469
    %v2467 = vunpack.c.h.b16 %v469
    %v2468 = vunpack.c.l.b16 %v470
    %v2469 = vunpack.c.h.b16 %v470
    %v2470 = vunpack.c.l.b16 %v471
    %v2471 = vunpack.c.h.b16 %v471
    %v2472 = vunpack.c.l.b16 %v472
    %v2473 = vunpack.c.h.b16 %v472
    %v2474 = vunpack.c.l.b16 %v473
    %v2475 = vunpack.c.h.b16 %v473
    %v2476 = vunpack.c.l.b16 %v474
    %v2477 = vunpack.c.h.b16 %v474
    %v2478 = vunpack.c.l.b16 %v475
    %v2479 = vunpack.c.h.b16 %v475
    %v2480 = vunpack.c.l.b16 %v476
    %v2481 = vunpack.c.h.b16 %v476
    %v2482 = vunpack.c.l.b16 %v477
    %v2483 = vunpack.c.h.b16 %v477
    %v2484 = vunpack.c.l.b16 %v478
    %v2485 = vunpack.c.h.b16 %v478
    %v2486 = vunpack.c.l.b16 %v479
    %v2487 = vunpack.c.h.b16 %v479
    %v2488 = vunpack.c.l.b16 %v480
    %v2489 = vunpack.c.h.b16 %v480
    %v2490 = vunpack.c.l.b16 %v481
    %v2491 = vunpack.c.h.b16 %v481
    %v2492 = vunpack.c.l.b16 %v482
    %v2493 = vunpack.c.h.b16 %v482
    %v2494 = vunpack.c.l.b16 %v483
    %v2495 = vunpack.c.h.b16 %v483
    %v2496 = vunpack.c.l.b16 %v484
    %v2497 = vunpack.c.h.b16 %v484
    %v2498 = vunpack.c.l.b16 %v485
    %v2499 = vunpack.c.h.b16 %v485
    %v2500 = vunpack.c.l.b16 %v486
    %v2501 = vunpack.c.h.b16 %v486
    %v2502 = vunpack.c.l.b16 %v487
    %v2503 = vunpack.c.h.b16 %v487
    %v2504 = vunpack.c.l.b16 %v488
    %v2505 = vunpack.c.h.b16 %v488
    %v2506 = vunpack.c.l.b16 %v489
    %v2507 = vunpack.c.h.b16 %v489
    %v2508 = vunpack.c.l.b16 %v490
    %v2509 = vunpack.c.h.b16 %v490
    %v2510 = vunpack.c.l.b16 %v491
    %v2511 = vunpack.c.h.b16 %v491
    %v2512 = vunpack.c.l.b16 %v492
    %v2513 = vunpack.c.h.b16 %v492
    %v2514 = vunpack.c.l.b16 %v493
    %v2515 = vunpack.c.h.b16 %v493
    %v2516 = vunpack.c.l.b16 %v494
    %v2517 = vunpack.c.h.b16 %v494
    %v2518 = vunpack.c.l.b16 %v495
    %v2519 = vunpack.c.h.b16 %v495
    %v2520 = vunpack.c.l.b16 %v496
    %v2521 = vunpack.c.h.b16 %v496
    %v2522 = vunpack.c.l.b16 %v497
    %v2523 = vunpack.c.h.b16 %v497
    %v2524 = vunpack.c.l.b16 %v498
    %v2525 = vunpack.c.h.b16 %v498
    %v2526 = vunpack.c.l.b16 %v499
    %v2527 = vunpack.c.h.b16 %v499
    %v2528 = vunpack.c.l.b16 %v500
    %v2529 = vunpack.c.h.b16 %v500
    %v2530 = vunpack.c.l.b16 %v501
    %v2531 = vunpack.c.h.b16 %v501
    %v2532 = vunpack.c.l.b16 %v502
    %v2533 = vunpack.c.h.b16 %v502
    %v2534 = vunpack.c.l.b16 %v503
    %v2535 = vunpack.c.h.b16 %v503
    %v2536 = vunpack.c.l.b16 %v504
    %v2537 = vunpack.c.h.b16 %v504
    %v2538 = vunpack.c.l.b16 %v505
    %v2539 = vunpack.c.h.b16 %v505
    %v2540 = vunpack.c.l.b16 %v506
    %v2541 = vunpack.c.h.b16 %v506
    %v2542 = vunpack.c.l.b16 %v507
    %v2543 = vunpack.c.h.b16 %v507
    %v2544 = vunpack.c.l.b16 %v508
    %v2545 = vunpack.c.h.b16 %v508
    %v2546 = vunpack.c.l.b16 %v509
    %v2547 = vunpack.c.h.b16 %v509
    %v2548 = vunpack.c.l.b16 %v510
    %v2549 = vunpack.c.h.b16 %v510
    %v2550 = vunpack.c.l.b16 %v511
    %v2551 = vunpack.c.h.b16 %v511
    %v2552 = vunpack.c.l.b16 %v512
    %v2553 = vunpack.c.h.b16 %v512
    %v2554 = vunpack.c.l.b16 %v513
    %v2555 = vunpack.c.h.b16 %v513
    %v2556 = vunpack.c.l.b16 %v514
    %v2557 = vunpack.c.h.b16 %v514
    %v2558 = vunpack.c.l.b16 %v515
    %v2559 = vunpack.c.h.b16 %v515
    %v2560 = vunpack.c.l.b16 %v516
    %v2561 = vunpack.c.h.b16 %v516
    %v2562 = vunpack.c.l.b16 %v517
    %v2563 = vunpack.c.h.b16 %v517
    %v2564 = vunpack.c.l.b16 %v518
    %v2565 = vunpack.c.h.b16 %v518
    %v2566 = vunpack.c.l.b16 %v519
    %v2567 = vunpack.c.h.b16 %v519
    %v2568 = vunpack.c.l.b16 %v520
    %v2569 = vunpack.c.h.b16 %v520
    %v2570 = vunpack.c.l.b16 %v521
    %v2571 = vunpack.c.h.b16 %v521
    %v2572 = vunpack.c.l.b16 %v522
    %v2573 = vunpack.c.h.b16 %v522
    %v2574 = vunpack.c.l.b16 %v523
    %v2575 = vunpack.c.h.b16 %v523
    %v2576 = vunpack.c.l.b16 %v524
    %v2577 = vunpack.c.h.b16 %v524
    %v2578 = vunpack.c.l.b16 %v525
    %v2579 = vunpack.c.h.b16 %v525
    %v2580 = vunpack.c.l.b16 %v526
    %v2581 = vunpack.c.h.b16 %v526
    %v2582 = vunpack.c.l.b16 %v527
    %v2583 = vunpack.c.h.b16 %v527
    %v2584 = vunpack.c.l.b16 %v528
    %v2585 = vunpack.c.h.b16 %v528
    %v2586 = vunpack.c.l.b16 %v529
    %v2587 = vunpack.c.h.b16 %v529
    %v2588 = vunpack.c.l.b16 %v530
    %v2589 = vunpack.c.h.b16 %v530
    %v2590 = vunpack.c.l.b16 %v531
    %v2591 = vunpack.c.h.b16 %v531
    %v2592 = vunpack.c.l.b16 %v532
    %v2593 = vunpack.c.h.b16 %v532
    %v2594 = vunpack.c.l.b16 %v533
    %v2595 = vunpack.c.h.b16 %v533
    %v2596 = vunpack.c.l.b16 %v534
    %v2597 = vunpack.c.h.b16 %v534
    %v2598 = vunpack.c.l.b16 %v535
    %v2599 = vunpack.c.h.b16 %v535
    %v2600 = vunpack.c.l.b16 %v536
    %v2601 = vunpack.c.h.b16 %v536
    %v2602 = vunpack.c.l.b16 %v537
    %v2603 = vunpack.c.h.b16 %v537
    %v2604 = vunpack.c.l.b16 %v538
    %v2605 = vunpack.c.h.b16 %v538
    %v2606 = vunpack.c.l.b16 %v539
    %v2607 = vunpack.c.h.b16 %v539
    %v2608 = vunpack.c.l.b16 %v540
    %v2609 = vunpack.c.h.b16 %v540
    %v2610 = vunpack.c.l.b16 %v541
    %v2611 = vunpack.c.h.b16 %v541
    %v2612 = vunpack.c.l.b16 %v542
    %v2613 = vunpack.c.h.b16 %v542
    %v2614 = vunpack.c.l.b16 %v543
    %v2615 = vunpack.c.h.b16 %v543
    %v2616 = vunpack.c.l.b16 %v544
    %v2617 = vunpack.c.h.b16 %v544
    %v2618 = vunpack.c.l.b16 %v545
    %v2619 = vunpack.c.h.b16 %v545
    %v2620 = vunpack.c.l.b16 %v546
    %v2621 = vunpack.c.h.b16 %v546
    %v2622 = vunpack.c.l.b16 %v547
    %v2623 = vunpack.c.h.b16 %v547
    %v2624 = vunpack.c.l.b16 %v548
    %v2625 = vunpack.c.h.b16 %v548
    %v2626 = vunpack.c.l.b16 %v549
    %v2627 = vunpack.c.h.b16 %v549
    %v2628 = vunpack.c.l.b16 %v550
    %v2629 = vunpack.c.h.b16 %v550
    %v2630 = vunpack.c.l.b16 %v551
    %v2631 = vunpack.c.h.b16 %v551
    %v2632 = vunpack.c.l.b16 %v552
    %v2633 = vunpack.c.h.b16 %v552
    %v2634 = vunpack.c.l.b16 %v553
    %v2635 = vunpack.c.h.b16 %v553
    %v2636 = vunpack.c.l.b16 %v554
    %v2637 = vunpack.c.h.b16 %v554
    %v2638 = vunpack.c.l.b16 %v555
    %v2639 = vunpack.c.h.b16 %v555
    %v2640 = vunpack.c.l.b16 %v556
    %v2641 = vunpack.c.h.b16 %v556
    %v2642 = vunpack.c.l.b16 %v557
    %v2643 = vunpack.c.h.b16 %v557
    %v2644 = vunpack.c.l.b16 %v558
    %v2645 = vunpack.c.h.b16 %v558
    %v2646 = vunpack.c.l.b16 %v559
    %v2647 = vunpack.c.h.b16 %v559
    %v2648 = vunpack.c.l.b16 %v560
    %v2649 = vunpack.c.h.b16 %v560
    %v2650 = vunpack.c.l.b16 %v561
    %v2651 = vunpack.c.h.b16 %v561
    %v2652 = vunpack.c.l.b16 %v562
    %v2653 = vunpack.c.h.b16 %v562
    %v2654 = vunpack.c.l.b16 %v563
    %v2655 = vunpack.c.h.b16 %v563
    %v2656 = vunpack.c.l.b16 %v564
    %v2657 = vunpack.c.h.b16 %v564
    %v2658 = vunpack.c.l.b16 %v565
    %v2659 = vunpack.c.h.b16 %v565
    %v2660 = vunpack.c.l.b16 %v566
    %v2661 = vunpack.c.h.b16 %v566
    %v2662 = vunpack.c.l.b16 %v567
    %v2663 = vunpack.c.h.b16 %v567
    %v2664 = vunpack.c.l.b16 %v568
    %v2665 = vunpack.c.h.b16 %v568
    %v2666 = vunpack.c.l.b16 %v569
    %v2667 = vunpack.c.h.b16 %v569
    %v2668 = vunpack.c.l.b16 %v570
    %v2669 = vunpack.c.h.b16 %v570
    %v2670 = vunpack.c.l.b16 %v571
    %v2671 = vunpack.c.h.b16 %v571
    %v2672 = vunpack.c.l.b16 %v572
    %v2673 = vunpack.c.h.b16 %v572
    %v2674 = vunpack.c.l.b16 %v573
    %v2675 = vunpack.c.h.b16 %v573
    %v2676 = vunpack.c.l.b16 %v574
    %v2677 = vunpack.c.h.b16 %v574
    %v2678 = vunpack.c.l.b16 %v575
    %v2679 = vunpack.c.h.b16 %v575
    %v2680 = vunpack.c.l.b16 %v576
    %v2681 = vunpack.c.h.b16 %v576
    %v2682 = vunpack.c.l.b16 %v577
    %v2683 = vunpack.c.h.b16 %v577
    %v2684 = vunpack.c.l.b16 %v578
    %v2685 = vunpack.c.h.b16 %v578
    %v2686 = vunpack.c.l.b16 %v579
    %v2687 = vunpack.c.h.b16 %v579
    %v2688 = vunpack.c.l.b16 %v580
    %v2689 = vunpack.c.h.b16 %v580
    %v2690 = vunpack.c.l.b16 %v581
    %v2691 = vunpack.c.h.b16 %v581
    %v2692 = vunpack.c.l.b16 %v582
    %v2693 = vunpack.c.h.b16 %v582
    %v2694 = vunpack.c.l.b16 %v583
    %v2695 = vunpack.c.h.b16 %v583
    %v2696 = vunpack.c.l.b16 %v584
    %v2697 = vunpack.c.h.b16 %v584
    %v2698 = vunpack.c.l.b16 %v585
    %v2699 = vunpack.c.h.b16 %v585
    %v2700 = vunpack.c.l.b16 %v586
    %v2701 = vunpack.c.h.b16 %v586
    %v2702 = vunpack.c.l.b16 %v587
    %v2703 = vunpack.c.h.b16 %v587
    %v2704 = vunpack.c.l.b16 %v588
    %v2705 = vunpack.c.h.b16 %v588
    %v2706 = vunpack.c.l.b16 %v589
    %v2707 = vunpack.c.h.b16 %v589
    %v2708 = vunpack.c.l.b16 %v590
    %v2709 = vunpack.c.h.b16 %v590
    %v2710 = vunpack.c.l.b16 %v591
    %v2711 = vunpack.c.h.b16 %v591
    %v2712 = vunpack.c.l.b16 %v592
    %v2713 = vunpack.c.h.b16 %v592
    %v2714 = vunpack.c.l.b16 %v593
    %v2715 = vunpack.c.h.b16 %v593
    %v2716 = vunpack.c.l.b16 %v594
    %v2717 = vunpack.c.h.b16 %v594
    %v2718 = vunpack.c.l.b16 %v595
    %v2719 = vunpack.c.h.b16 %v595
    %v2720 = vunpack.c.l.b16 %v596
    %v2721 = vunpack.c.h.b16 %v596
    %v2722 = vunpack.c.l.b16 %v597
    %v2723 = vunpack.c.h.b16 %v597
    %v2724 = vunpack.c.l.b16 %v598
    %v2725 = vunpack.c.h.b16 %v598
    %v2726 = vunpack.c.l.b16 %v599
    %v2727 = vunpack.c.h.b16 %v599
    %v2728 = vunpack.c.l.b16 %v600
    %v2729 = vunpack.c.h.b16 %v600
    %v2730 = vunpack.c.l.b16 %v601
    %v2731 = vunpack.c.h.b16 %v601
    %v2732 = vunpack.c.l.b16 %v602
    %v2733 = vunpack.c.h.b16 %v602
    %v2734 = vunpack.c.l.b16 %v603
    %v2735 = vunpack.c.h.b16 %v603
    %v2736 = vunpack.c.l.b16 %v604
    %v2737 = vunpack.c.h.b16 %v604
    %v2738 = vunpack.c.l.b16 %v605
    %v2739 = vunpack.c.h.b16 %v605
    %v2740 = vunpack.c.l.b16 %v606
    %v2741 = vunpack.c.h.b16 %v606
    %v2742 = vunpack.c.l.b16 %v607
    %v2743 = vunpack.c.h.b16 %v607
    %v2744 = vunpack.c.l.b16 %v608
    %v2745 = vunpack.c.h.b16 %v608
    %v2746 = vunpack.c.l.b16 %v609
    %v2747 = vunpack.c.h.b16 %v609
    %v2748 = vunpack.c.l.b16 %v610
    %v2749 = vunpack.c.h.b16 %v610
    %v2750 = vunpack.c.l.b16 %v611
    %v2751 = vunpack.c.h.b16 %v611
    %v2752 = vunpack.c.l.b16 %v612
    %v2753 = vunpack.c.h.b16 %v612
    %v2754 = vunpack.c.l.b16 %v613
    %v2755 = vunpack.c.h.b16 %v613
    %v2756 = vunpack.c.l.b16 %v614
    %v2757 = vunpack.c.h.b16 %v614
    %v2758 = vunpack.c.l.b16 %v615
    %v2759 = vunpack.c.h.b16 %v615
    %v2760 = vunpack.c.l.b16 %v616
    %v2761 = vunpack.c.h.b16 %v616
    %v2762 = vunpack.c.l.b16 %v617
    %v2763 = vunpack.c.h.b16 %v617
    %v2764 = vunpack.c.l.b16 %v618
    %v2765 = vunpack.c.h.b16 %v618
    %v2766 = vunpack.c.l.b16 %v619
    %v2767 = vunpack.c.h.b16 %v619
    %v2768 = vunpack.c.l.b16 %v620
    %v2769 = vunpack.c.h.b16 %v620
    %v2770 = vunpack.c.l.b16 %v621
    %v2771 = vunpack.c.h.b16 %v621
    %v2772 = vunpack.c.l.b16 %v622
    %v2773 = vunpack.c.h.b16 %v622
    %v2774 = vunpack.c.l.b16 %v623
    %v2775 = vunpack.c.h.b16 %v623
    %v2776 = vunpack.c.l.b16 %v624
    %v2777 = vunpack.c.h.b16 %v624
    %v2778 = vunpack.c.l.b16 %v625
    %v2779 = vunpack.c.h.b16 %v625
    %v2780 = vunpack.c.l.b16 %v626
    %v2781 = vunpack.c.h.b16 %v626
    %v2782 = vunpack.c.l.b16 %v627
    %v2783 = vunpack.c.h.b16 %v627
    %v2784 = vunpack.c.l.b16 %v628
    %v2785 = vunpack.c.h.b16 %v628
    %v2786 = vunpack.c.l.b16 %v629
    %v2787 = vunpack.c.h.b16 %v629
    %v2788 = vunpack.c.l.b16 %v630
    %v2789 = vunpack.c.h.b16 %v630
    %v2790 = vunpack.c.l.b16 %v631
    %v2791 = vunpack.c.h.b16 %v631
    %v2792 = vunpack.c.l.b16 %v632
    %v2793 = vunpack.c.h.b16 %v632
    %v2794 = vunpack.c.l.b16 %v633
    %v2795 = vunpack.c.h.b16 %v633
    %v2796 = vunpack.c.l.b16 %v634
    %v2797 = vunpack.c.h.b16 %v634
    %v2798 = vunpack.c.l.b16 %v635
    %v2799 = vunpack.c.h.b16 %v635
    %v2800 = vunpack.c.l.b16 %v636
    %v2801 = vunpack.c.h.b16 %v636
    %v2802 = vunpack.c.l.b16 %v637
    %v2803 = vunpack.c.h.b16 %v637
    %v2804 = vunpack.c.l.b16 %v638
    %v2805 = vunpack.c.h.b16 %v638
    %v2806 = vunpack.c.l.b16 %v639
    %v2807 = vunpack.c.h.b16 %v639
    %v2808 = vunpack.c.l.b16 %v640
    %v2809 = vunpack.c.h.b16 %v640
    %v2810 = vunpack.c.l.b16 %v641
    %v2811 = vunpack.c.h.b16 %v641
    %v2812 = vunpack.c.l.b16 %v642
    %v2813 = vunpack.c.h.b16 %v642
    %v2814 = vunpack.c.l.b16 %v643
    %v2815 = vunpack.c.h.b16 %v643
    %v2816 = vunpack.c.l.b16 %v644
    %v2817 = vunpack.c.h.b16 %v644
    %v2818 = vunpack.c.l.b16 %v645
    %v2819 = vunpack.c.h.b16 %v645
    %v2820 = vunpack.c.l.b16 %v646
    %v2821 = vunpack.c.h.b16 %v646
    %v2822 = vunpack.c.l.b16 %v647
    %v2823 = vunpack.c.h.b16 %v647
    %v2824 = vunpack.c.l.b16 %v648
    %v2825 = vunpack.c.h.b16 %v648
    %v2826 = vunpack.c.l.b16 %v649
    %v2827 = vunpack.c.h.b16 %v649
    %v2828 = vunpack.c.l.b16 %v650
    %v2829 = vunpack.c.h.b16 %v650
    %v2830 = vunpack.c.l.b16 %v651
    %v2831 = vunpack.c.h.b16 %v651
    %v2832 = vunpack.c.l.b16 %v652
    %v2833 = vunpack.c.h.b16 %v652
    %v2834 = vunpack.c.l.b16 %v653
    %v2835 = vunpack.c.h.b16 %v653
    %v2836 = vunpack.c.l.b16 %v654
    %v2837 = vunpack.c.h.b16 %v654
    %v2838 = vunpack.c.l.b16 %v655
    %v2839 = vunpack.c.h.b16 %v655
    %v2840 = vunpack.c.l.b16 %v656
    %v2841 = vunpack.c.h.b16 %v656
    %v2842 = vunpack.c.l.b16 %v657
    %v2843 = vunpack.c.h.b16 %v657
    %v2844 = vunpack.c.l.b16 %v658
    %v2845 = vunpack.c.h.b16 %v658
    %v2846 = vunpack.c.l.b16 %v659
    %v2847 = vunpack.c.h.b16 %v659
    %v2848 = vunpack.c.l.b16 %v660
    %v2849 = vunpack.c.h.b16 %v660
    %v2850 = vunpack.c.l.b16 %v661
    %v2851 = vunpack.c.h.b16 %v661
    %v2852 = vunpack.c.l.b16 %v662
    %v2853 = vunpack.c.h.b16 %v662
    %v2854 = vunpack.c.l.b16 %v663
    %v2855 = vunpack.c.h.b16 %v663
    %v2856 = vunpack.c.l.b16 %v664
    %v2857 = vunpack.c.h.b16 %v664
    %v2858 = vunpack.c.l.b16 %v665
    %v2859 = vunpack.c.h.b16 %v665
    %v2860 = vunpack.c.l.b16 %v666
    %v2861 = vunpack.c.h.b16 %v666
    %v2862 = vunpack.c.l.b16 %v667
    %v2863 = vunpack.c.h.b16 %v667
    %v2864 = vunpack.c.l.b16 %v668
    %v2865 = vunpack.c.h.b16 %v668
    %v2866 = vunpack.c.l.b16 %v669
    %v2867 = vunpack.c.h.b16 %v669
    %v2868 = vunpack.c.l.b16 %v670
    %v2869 = vunpack.c.h.b16 %v670
    %v2870 = vunpack.c.l.b16 %v671
    %v2871 = vunpack.c.h.b16 %v671
    %v2872 = vunpack.c.l.b16 %v672
    %v2873 = vunpack.c.h.b16 %v672
    %v2874 = vunpack.c.l.b16 %v673
    %v2875 = vunpack.c.h.b16 %v673
    %v2876 = vunpack.c.l.b16 %v674
    %v2877 = vunpack.c.h.b16 %v674
    %v2878 = vunpack.c.l.b16 %v675
    %v2879 = vunpack.c.h.b16 %v675
    %v2880 = vunpack.c.l.b16 %v676
    %v2881 = vunpack.c.h.b16 %v676
    %v2882 = vunpack.c.l.b16 %v677
    %v2883 = vunpack.c.h.b16 %v677
    %v2884 = vunpack.c.l.b16 %v678
    %v2885 = vunpack.c.h.b16 %v678
    %v2886 = vunpack.c.l.b16 %v679
    %v2887 = vunpack.c.h.b16 %v679
    %v2888 = vunpack.c.l.b16 %v680
    %v2889 = vunpack.c.h.b16 %v680
    %v2890 = vunpack.c.l.b16 %v681
    %v2891 = vunpack.c.h.b16 %v681
    %v2892 = vunpack.c.l.b16 %v682
    %v2893 = vunpack.c.h.b16 %v682
    %v2894 = vunpack.c.l.b16 %v683
    %v2895 = vunpack.c.h.b16 %v683
    %v2896 = vunpack.c.l.b16 %v684
    %v2897 = vunpack.c.h.b16 %v684
    %v2898 = vunpack.c.l.b16 %v685
    %v2899 = vunpack.c.h.b16 %v685
    %v2900 = vunpack.c.l.b16 %v686
    %v2901 = vunpack.c.h.b16 %v686
    %v2902 = vunpack.c.l.b16 %v687
    %v2903 = vunpack.c.h.b16 %v687
    %v2904 = vunpack.c.l.b16 %v688
    %v2905 = vunpack.c.h.b16 %v688
    %v2906 = vunpack.c.l.b16 %v689
    %v2907 = vunpack.c.h.b16 %v689
    %v2908 = vunpack.c.l.b16 %v690
    %v2909 = vunpack.c.h.b16 %v690
    %v2910 = vunpack.c.l.b16 %v691
    %v2911 = vunpack.c.h.b16 %v691
    %v2912 = vunpack.c.l.b16 %v692
    %v2913 = vunpack.c.h.b16 %v692
    %v2914 = vunpack.c.l.b16 %v693
    %v2915 = vunpack.c.h.b16 %v693
    %v2916 = vunpack.c.l.b16 %v694
    %v2917 = vunpack.c.h.b16 %v694
    %v2918 = vunpack.c.l.b16 %v695
    %v2919 = vunpack.c.h.b16 %v695
    %v2920 = vunpack.c.l.b16 %v696
    %v2921 = vunpack.c.h.b16 %v696
    %v2922 = vunpack.c.l.b16 %v697
    %v2923 = vunpack.c.h.b16 %v697
    %v2924 = vunpack.c.l.b16 %v698
    %v2925 = vunpack.c.h.b16 %v698
    %v2926 = vunpack.c.l.b16 %v699
    %v2927 = vunpack.c.h.b16 %v699
    %v2928 = vunpack.c.l.b16 %v700
    %v2929 = vunpack.c.h.b16 %v700
    %v2930 = vunpack.c.l.b16 %v701
    %v2931 = vunpack.c.h.b16 %v701
    %v2932 = vunpack.c.l.b16 %v702
    %v2933 = vunpack.c.h.b16 %v702
    %v2934 = vunpack.c.l.b16 %v703
    %v2935 = vunpack.c.h.b16 %v703
    %v2936 = vunpack.c.l.b16 %v704
    %v2937 = vunpack.c.h.b16 %v704
    %v2938 = vunpack.c.l.b16 %v705
    %v2939 = vunpack.c.h.b16 %v705
    %v2940 = vunpack.c.l.b16 %v706
    %v2941 = vunpack.c.h.b16 %v706
    %v2942 = vunpack.c.l.b16 %v707
    %v2943 = vunpack.c.h.b16 %v707
    %v2944 = vunpack.c.l.b16 %v708
    %v2945 = vunpack.c.h.b16 %v708
    %v2946 = vunpack.c.l.b16 %v709
    %v2947 = vunpack.c.h.b16 %v709
    %v2948 = vunpack.c.l.b16 %v710
    %v2949 = vunpack.c.h.b16 %v710
    %v2950 = vunpack.c.l.b16 %v711
    %v2951 = vunpack.c.h.b16 %v711
    %v2952 = vunpack.c.l.b16 %v712
    %v2953 = vunpack.c.h.b16 %v712
    %v2954 = vunpack.c.l.b16 %v713
    %v2955 = vunpack.c.h.b16 %v713
    %v2956 = vunpack.c.l.b16 %v714
    %v2957 = vunpack.c.h.b16 %v714
    %v2958 = vunpack.c.l.b16 %v715
    %v2959 = vunpack.c.h.b16 %v715
    %v2960 = vunpack.c.l.b16 %v716
    %v2961 = vunpack.c.h.b16 %v716
    %v2962 = vunpack.c.l.b16 %v717
    %v2963 = vunpack.c.h.b16 %v717
    %v2964 = vunpack.c.l.b16 %v718
    %v2965 = vunpack.c.h.b16 %v718
    %v2966 = vunpack.c.l.b16 %v719
    %v2967 = vunpack.c.h.b16 %v719
    %v2968 = vunpack.c.l.b16 %v720
    %v2969 = vunpack.c.h.b16 %v720
    %v2970 = vunpack.c.l.b16 %v721
    %v2971 = vunpack.c.h.b16 %v721
    %v2972 = vunpack.c.l.b16 %v722
    %v2973 = vunpack.c.h.b16 %v722
    %v2974 = vunpack.c.l.b16 %v723
    %v2975 = vunpack.c.h.b16 %v723
    %v2976 = vunpack.c.l.b16 %v724
    %v2977 = vunpack.c.h.b16 %v724
    %v2978 = vunpack.c.l.b16 %v725
    %v2979 = vunpack.c.h.b16 %v725
    %v2980 = vunpack.c.l.b16 %v726
    %v2981 = vunpack.c.h.b16 %v726
    %v2982 = vunpack.c.l.b16 %v727
    %v2983 = vunpack.c.h.b16 %v727
    %v2984 = vunpack.c.l.b16 %v728
    %v2985 = vunpack.c.h.b16 %v728
    %v2986 = vunpack.c.l.b16 %v729
    %v2987 = vunpack.c.h.b16 %v729
    %v2988 = vunpack.c.l.b16 %v730
    %v2989 = vunpack.c.h.b16 %v730
    %v2990 = vunpack.c.l.b16 %v731
    %v2991 = vunpack.c.h.b16 %v731
    %v2992 = vunpack.c.l.b16 %v732
    %v2993 = vunpack.c.h.b16 %v732
    %v2994 = vunpack.c.l.b16 %v733
    %v2995 = vunpack.c.h.b16 %v733
    %v2996 = vunpack.c.l.b16 %v734
    %v2997 = vunpack.c.h.b16 %v734
    %v2998 = vunpack.c.l.b16 %v735
    %v2999 = vunpack.c.h.b16 %v735
    %v3000 = vunpack.c.l.b16 %v736
    %v3001 = vunpack.c.h.b16 %v736
    %v3002 = vunpack.c.l.b16 %v737
    %v3003 = vunpack.c.h.b16 %v737
    %v3004 = vunpack.c.l.b16 %v738
    %v3005 = vunpack.c.h.b16 %v738
    %v3006 = vunpack.c.l.b16 %v739
    %v3007 = vunpack.c.h.b16 %v739
    %v3008 = vunpack.c.l.b16 %v740
    %v3009 = vunpack.c.h.b16 %v740
    %v3010 = vunpack.c.l.b16 %v741
    %v3011 = vunpack.c.h.b16 %v741
    %v3012 = vunpack.c.l.b16 %v742
    %v3013 = vunpack.c.h.b16 %v742
    %v3014 = vunpack.c.l.b16 %v743
    %v3015 = vunpack.c.h.b16 %v743
    %v3016 = vunpack.c.l.b16 %v744
    %v3017 = vunpack.c.h.b16 %v744
    %v3018 = vunpack.c.l.b16 %v745
    %v3019 = vunpack.c.h.b16 %v745
    %v3020 = vunpack.c.l.b16 %v746
    %v3021 = vunpack.c.h.b16 %v746
    %v3022 = vunpack.c.l.b16 %v747
    %v3023 = vunpack.c.h.b16 %v747
    %v3024 = vunpack.c.l.b16 %v748
    %v3025 = vunpack.c.h.b16 %v748
    %v3026 = vunpack.c.l.b16 %v749
    %v3027 = vunpack.c.h.b16 %v749
    %v3028 = vunpack.c.l.b16 %v750
    %v3029 = vunpack.c.h.b16 %v750
    %v3030 = vunpack.c.l.b16 %v751
    %v3031 = vunpack.c.h.b16 %v751
    %v3032 = vunpack.c.l.b16 %v752
    %v3033 = vunpack.c.h.b16 %v752
    %v3034 = vunpack.c.l.b16 %v753
    %v3035 = vunpack.c.h.b16 %v753
    %v3036 = vunpack.c.l.b16 %v754
    %v3037 = vunpack.c.h.b16 %v754
    %v3038 = vunpack.c.l.b16 %v755
    %v3039 = vunpack.c.h.b16 %v755
    %v3040 = vunpack.c.l.b16 %v756
    %v3041 = vunpack.c.h.b16 %v756
    %v3042 = vunpack.c.l.b16 %v757
    %v3043 = vunpack.c.h.b16 %v757
    %v3044 = vunpack.c.l.b16 %v758
    %v3045 = vunpack.c.h.b16 %v758
    %v3046 = vunpack.c.l.b16 %v759
    %v3047 = vunpack.c.h.b16 %v759
    %v3048 = vunpack.c.l.b16 %v760
    %v3049 = vunpack.c.h.b16 %v760
    %v3050 = vunpack.c.l.b16 %v761
    %v3051 = vunpack.c.h.b16 %v761
    %v3052 = vunpack.c.l.b16 %v762
    %v3053 = vunpack.c.h.b16 %v762
    %v3054 = vunpack.c.l.b16 %v763
    %v3055 = vunpack.c.h.b16 %v763
    %v3056 = vunpack.c.l.b16 %v764
    %v3057 = vunpack.c.h.b16 %v764
    %v3058 = vunpack.c.l.b16 %v765
    %v3059 = vunpack.c.h.b16 %v765
    %v3060 = vunpack.c.l.b16 %v766
    %v3061 = vunpack.c.h.b16 %v766
    %v3062 = vunpack.c.l.b16 %v767
    %v3063 = vunpack.c.h.b16 %v767
    %v3064 = vunpack.c.l.b16 %v768
    %v3065 = vunpack.c.h.b16 %v768
    %v3066 = vunpack.c.l.b16 %v769
    %v3067 = vunpack.c.h.b16 %v769
    %v3068 = vunpack.c.l.b16 %v770
    %v3069 = vunpack.c.h.b16 %v770
    %v3070 = vunpack.c.l.b16 %v771
    %v3071 = vunpack.c.h.b16 %v771
    %v3072 = vunpack.c.l.b16 %v772
    %v3073 = vunpack.c.h.b16 %v772
    %v3074 = vunpack.c.l.b16 %v773
    %v3075 = vunpack.c.h.b16 %v773
    %v3076 = vunpack.c.l.b16 %v774
    %v3077 = vunpack.c.h.b16 %v774
    %v3078 = vunpack.c.l.b16 %v775
    %v3079 = vunpack.c.h.b16 %v775
    %v3080 = vunpack.c.l.b16 %v776
    %v3081 = vunpack.c.h.b16 %v776
    %v3082 = vunpack.c.l.b16 %v777
    %v3083 = vunpack.c.h.b16 %v777
    %v3084 = vunpack.c.l.b16 %v778
    %v3085 = vunpack.c.h.b16 %v778
    %v3086 = vunpack.c.l.b16 %v779
    %v3087 = vunpack.c.h.b16 %v779
    %v3088 = vunpack.c.l.b16 %v780
    %v3089 = vunpack.c.h.b16 %v780
    %v3090 = vunpack.c.l.b16 %v781
    %v3091 = vunpack.c.h.b16 %v781
    %v3092 = vunpack.c.l.b16 %v782
    %v3093 = vunpack.c.h.b16 %v782
    %v3094 = vunpack.c.l.b16 %v783
    %v3095 = vunpack.c.h.b16 %v783
    %v3096 = vunpack.c.l.b16 %v784
    %v3097 = vunpack.c.h.b16 %v784
    %v3098 = vunpack.c.l.b16 %v785
    %v3099 = vunpack.c.h.b16 %v785
    %v3100 = vunpack.c.l.b16 %v786
    %v3101 = vunpack.c.h.b16 %v786
    %v3102 = vunpack.c.l.b16 %v787
    %v3103 = vunpack.c.h.b16 %v787
    %v3104 = vunpack.c.l.b16 %v788
    %v3105 = vunpack.c.h.b16 %v788
    %v3106 = vunpack.c.l.b16 %v789
    %v3107 = vunpack.c.h.b16 %v789
    %v3108 = vunpack.c.l.b16 %v790
    %v3109 = vunpack.c.h.b16 %v790
    %v3110 = vunpack.c.l.b16 %v791
    %v3111 = vunpack.c.h.b16 %v791
    %v3112 = vunpack.c.l.b16 %v792
    %v3113 = vunpack.c.h.b16 %v792
    %v3114 = vunpack.c.l.b16 %v793
    %v3115 = vunpack.c.h.b16 %v793
    %v3116 = vunpack.c.l.b16 %v794
    %v3117 = vunpack.c.h.b16 %v794
    %v3118 = vunpack.c.l.b16 %v795
    %v3119 = vunpack.c.h.b16 %v795
    %v3120 = vunpack.c.l.b16 %v796
    %v3121 = vunpack.c.h.b16 %v796
    %v3122 = vunpack.c.l.b16 %v797
    %v3123 = vunpack.c.h.b16 %v797
    %v3124 = vunpack.c.l.b16 %v798
    %v3125 = vunpack.c.h.b16 %v798
    %v3126 = vunpack.c.l.b16 %v799
    %v3127 = vunpack.c.h.b16 %v799
    %v3128 = vunpack.c.l.b16 %v800
    %v3129 = vunpack.c.h.b16 %v800
    %v3130 = vunpack.c.l.b16 %v801
    %v3131 = vunpack.c.h.b16 %v801
    %v3132 = vunpack.c.l.b16 %v802
    %v3133 = vunpack.c.h.b16 %v802
    %v3134 = vunpack.c.l.b16 %v803
    %v3135 = vunpack.c.h.b16 %v803
    %v3136 = vunpack.c.l.b16 %v804
    %v3137 = vunpack.c.h.b16 %v804
    %v3138 = vunpack.c.l.b16 %v805
    %v3139 = vunpack.c.h.b16 %v805
    %v3140 = vunpack.c.l.b16 %v806
    %v3141 = vunpack.c.h.b16 %v806
    %v3142 = vunpack.c.l.b16 %v807
    %v3143 = vunpack.c.h.b16 %v807
    %v3144 = vunpack.c.l.b16 %v808
    %v3145 = vunpack.c.h.b16 %v808
    %v3146 = vunpack.c.l.b16 %v809
    %v3147 = vunpack.c.h.b16 %v809
    %v3148 = vunpack.c.l.b16 %v810
    %v3149 = vunpack.c.h.b16 %v810
    %v3150 = vunpack.c.l.b16 %v811
    %v3151 = vunpack.c.h.b16 %v811
    %v3152 = vunpack.c.l.b16 %v812
    %v3153 = vunpack.c.h.b16 %v812
    %v3154 = vunpack.c.l.b16 %v813
    %v3155 = vunpack.c.h.b16 %v813
    %v3156 = vunpack.c.l.b16 %v814
    %v3157 = vunpack.c.h.b16 %v814
    %v3158 = vunpack.c.l.b16 %v815
    %v3159 = vunpack.c.h.b16 %v815
    %v3160 = vunpack.c.l.b16 %v816
    %v3161 = vunpack.c.h.b16 %v816
    %v3162 = vunpack.c.l.b16 %v817
    %v3163 = vunpack.c.h.b16 %v817
    %v3164 = vunpack.c.l.b16 %v818
    %v3165 = vunpack.c.h.b16 %v818
    %v3166 = vunpack.c.l.b16 %v819
    %v3167 = vunpack.c.h.b16 %v819
    %v3168 = vunpack.c.l.b16 %v820
    %v3169 = vunpack.c.h.b16 %v820
    %v3170 = vunpack.c.l.b16 %v821
    %v3171 = vunpack.c.h.b16 %v821
    %v3172 = vunpack.c.l.b16 %v822
    %v3173 = vunpack.c.h.b16 %v822
    %v3174 = vunpack.c.l.b16 %v823
    %v3175 = vunpack.c.h.b16 %v823
    %v3176 = vunpack.c.l.b16 %v824
    %v3177 = vunpack.c.h.b16 %v824
    %v3178 = vunpack.c.l.b16 %v825
    %v3179 = vunpack.c.h.b16 %v825
    %v3180 = vunpack.c.l.b16 %v826
    %v3181 = vunpack.c.h.b16 %v826
    %v3182 = vunpack.c.l.b16 %v827
    %v3183 = vunpack.c.h.b16 %v827
    %v3184 = vunpack.c.l.b16 %v828
    %v3185 = vunpack.c.h.b16 %v828
    %v3186 = vunpack.c.l.b16 %v829
    %v3187 = vunpack.c.h.b16 %v829
    %v3188 = vunpack.c.l.b16 %v830
    %v3189 = vunpack.c.h.b16 %v830
    %v3190 = vunpack.c.l.b16 %v831
    %v3191 = vunpack.c.h.b16 %v831
    %v3192 = vunpack.c.l.b16 %v832
    %v3193 = vunpack.c.h.b16 %v832
    %v3194 = vunpack.c.l.b16 %v833
    %v3195 = vunpack.c.h.b16 %v833
    %v3196 = vunpack.c.l.b16 %v834
    %v3197 = vunpack.c.h.b16 %v834
    %v3198 = vunpack.c.l.b16 %v835
    %v3199 = vunpack.c.h.b16 %v835
    %v3200 = vunpack.c.l.b16 %v836
    %v3201 = vunpack.c.h.b16 %v836
    %v3202 = vunpack.c.l.b16 %v837
    %v3203 = vunpack.c.h.b16 %v837
    %v3204 = vunpack.c.l.b16 %v838
    %v3205 = vunpack.c.h.b16 %v838
    %v3206 = vunpack.c.l.b16 %v839
    %v3207 = vunpack.c.h.b16 %v839
    %v3208 = vunpack.c.l.b16 %v840
    %v3209 = vunpack.c.h.b16 %v840
    %v3210 = vunpack.c.l.b16 %v841
    %v3211 = vunpack.c.h.b16 %v841
    %v3212 = vunpack.c.l.b16 %v842
    %v3213 = vunpack.c.h.b16 %v842
    %v3214 = vunpack.c.l.b16 %v843
    %v3215 = vunpack.c.h.b16 %v843
    %v3216 = vunpack.c.l.b16 %v844
    %v3217 = vunpack.c.h.b16 %v844
    %v3218 = vunpack.c.l.b16 %v845
    %v3219 = vunpack.c.h.b16 %v845
    %v3220 = vunpack.c.l.b16 %v846
    %v3221 = vunpack.c.h.b16 %v846
    %v3222 = vunpack.c.l.b16 %v847
    %v3223 = vunpack.c.h.b16 %v847
    %v3224 = vunpack.c.l.b16 %v848
    %v3225 = vunpack.c.h.b16 %v848
    %v3226 = vunpack.c.l.b16 %v849
    %v3227 = vunpack.c.h.b16 %v849
    %v3228 = vunpack.c.l.b16 %v850
    %v3229 = vunpack.c.h.b16 %v850
    %v3230 = vunpack.c.l.b16 %v851
    %v3231 = vunpack.c.h.b16 %v851
    %v3232 = vunpack.c.l.b16 %v852
    %v3233 = vunpack.c.h.b16 %v852
    %v3234 = vunpack.c.l.b16 %v853
    %v3235 = vunpack.c.h.b16 %v853
    %v3236 = vunpack.c.l.b16 %v854
    %v3237 = vunpack.c.h.b16 %v854
    %v3238 = vunpack.c.l.b16 %v855
    %v3239 = vunpack.c.h.b16 %v855
    %v3240 = vunpack.c.l.b16 %v856
    %v3241 = vunpack.c.h.b16 %v856
    %v3242 = vunpack.c.l.b16 %v857
    %v3243 = vunpack.c.h.b16 %v857
    %v3244 = vunpack.c.l.b16 %v858
    %v3245 = vunpack.c.h.b16 %v858
    %v3246 = vunpack.c.l.b16 %v859
    %v3247 = vunpack.c.h.b16 %v859
    %v3248 = vunpack.c.l.b16 %v860
    %v3249 = vunpack.c.h.b16 %v860
    %v3250 = vunpack.c.l.b16 %v861
    %v3251 = vunpack.c.h.b16 %v861
    %v3252 = vunpack.c.l.b16 %v862
    %v3253 = vunpack.c.h.b16 %v862
    %v3254 = vunpack.c.l.b16 %v863
    %v3255 = vunpack.c.h.b16 %v863
    %v3256 = vunpack.c.l.b16 %v864
    %v3257 = vunpack.c.h.b16 %v864
    %v3258 = vunpack.c.l.b16 %v865
    %v3259 = vunpack.c.h.b16 %v865
    %v3260 = vunpack.c.l.b16 %v866
    %v3261 = vunpack.c.h.b16 %v866
    %v3262 = vunpack.c.l.b16 %v867
    %v3263 = vunpack.c.h.b16 %v867
    %v3264 = vunpack.c.l.b16 %v868
    %v3265 = vunpack.c.h.b16 %v868
    %v3266 = vunpack.c.l.b16 %v869
    %v3267 = vunpack.c.h.b16 %v869
    %v3268 = vunpack.c.l.b16 %v870
    %v3269 = vunpack.c.h.b16 %v870
    %v3270 = vunpack.c.l.b16 %v871
    %v3271 = vunpack.c.h.b16 %v871
    %v3272 = vunpack.c.l.b16 %v872
    %v3273 = vunpack.c.h.b16 %v872
    %v3274 = vunpack.c.l.b16 %v873
    %v3275 = vunpack.c.h.b16 %v873
    %v3276 = vunpack.c.l.b16 %v874
    %v3277 = vunpack.c.h.b16 %v874
    %v3278 = vunpack.c.l.b16 %v875
    %v3279 = vunpack.c.h.b16 %v875
    %v3280 = vunpack.c.l.b16 %v876
    %v3281 = vunpack.c.h.b16 %v876
    %v3282 = vunpack.c.l.b16 %v877
    %v3283 = vunpack.c.h.b16 %v877
    %v3284 = vunpack.c.l.b16 %v878
    %v3285 = vunpack.c.h.b16 %v878
    %v3286 = vunpack.c.l.b16 %v879
    %v3287 = vunpack.c.h.b16 %v879
    %v3288 = vunpack.c.l.b16 %v880
    %v3289 = vunpack.c.h.b16 %v880
    %v3290 = vunpack.c.l.b16 %v881
    %v3291 = vunpack.c.h.b16 %v881
    %v3292 = vunpack.c.l.b16 %v882
    %v3293 = vunpack.c.h.b16 %v882
    %v3294 = vunpack.c.l.b16 %v883
    %v3295 = vunpack.c.h.b16 %v883
    %v3296 = vunpack.c.l.b16 %v884
    %v3297 = vunpack.c.h.b16 %v884
    %v3298 = vunpack.c.l.b16 %v885
    %v3299 = vunpack.c.h.b16 %v885
    %v3300 = vunpack.c.l.b16 %v886
    %v3301 = vunpack.c.h.b16 %v886
    %v3302 = vunpack.c.l.b16 %v887
    %v3303 = vunpack.c.h.b16 %v887
    %v3304 = vunpack.c.l.b16 %v888
    %v3305 = vunpack.c.h.b16 %v888
    %v3306 = vunpack.c.l.b16 %v889
    %v3307 = vunpack.c.h.b16 %v889
    %v3308 = vunpack.c.l.b16 %v890
    %v3309 = vunpack.c.h.b16 %v890
    %v3310 = vunpack.c.l.b16 %v891
    %v3311 = vunpack.c.h.b16 %v891
    %v3312 = vunpack.c.l.b16 %v892
    %v3313 = vunpack.c.h.b16 %v892
    %v3314 = vunpack.c.l.b16 %v893
    %v3315 = vunpack.c.h.b16 %v893
    %v3316 = vunpack.c.l.b16 %v894
    %v3317 = vunpack.c.h.b16 %v894
    %v3318 = vunpack.c.l.b16 %v895
    %v3319 = vunpack.c.h.b16 %v895
    %v3320 = vunpack.c.l.b16 %v896
    %v3321 = vunpack.c.h.b16 %v896
    %v3322 = vunpack.c.l.b16 %v897
    %v3323 = vunpack.c.h.b16 %v897
    %v3324 = vunpack.c.l.b16 %v898
    %v3325 = vunpack.c.h.b16 %v898
    %v3326 = vunpack.c.l.b16 %v899
    %v3327 = vunpack.c.h.b16 %v899
    %v3328 = vunpack.c.l.b16 %v900
    %v3329 = vunpack.c.h.b16 %v900
    %v3330 = vunpack.c.l.b16 %v901
    %v3331 = vunpack.c.h.b16 %v901
    %v3332 = vunpack.c.l.b16 %v902
    %v3333 = vunpack.c.h.b16 %v902
    %v3334 = vunpack.c.l.b16 %v903
    %v3335 = vunpack.c.h.b16 %v903
    %v3336 = vunpack.c.l.b16 %v904
    %v3337 = vunpack.c.h.b16 %v904
    %v3338 = vunpack.c.l.b16 %v905
    %v3339 = vunpack.c.h.b16 %v905
    %v3340 = vpack.c.b16 %v1808, %v1804
    %v3341 = vpack.c.b16 %v1809, %v1805
    %v3342 = vpack.c.b16 %v1810, %v1806
    %v3343 = vpack.c.b16 %v1811, %v1807
    %v3344 = vpack.c.b16 %v1816, %v1812
    %v3345 = vpack.c.b16 %v1817, %v1813
    %v3346 = vpack.c.b16 %v1818, %v1814
    %v3347 = vpack.c.b16 %v1819, %v1815
    %v3348 = vpack.c.b16 %v1824, %v1820
    %v3349 = vpack.c.b16 %v1825, %v1821
    %v3350 = vpack.c.b16 %v1826, %v1822
    %v3351 = vpack.c.b16 %v1827, %v1823
    %v3352 = vpack.c.b16 %v1832, %v1828
    %v3353 = vpack.c.b16 %v1833, %v1829
    %v3354 = vpack.c.b16 %v1834, %v1830
    %v3355 = vpack.c.b16 %v1835, %v1831
    %v3356 = vpack.c.b16 %v1840, %v1836
    %v3357 = vpack.c.b16 %v1841, %v1837
    %v3358 = vpack.c.b16 %v1842, %v1838
    %v3359 = vpack.c.b16 %v1843, %v1839
    %v3360 = vpack.c.b16 %v1848, %v1844
    %v3361 = vpack.c.b16 %v1849, %v1845
    %v3362 = vpack.c.b16 %v1850, %v1846
    %v3363 = vpack.c.b16 %v1851, %v1847
    %v3364 = vpack.c.b16 %v1856, %v1852
    %v3365 = vpack.c.b16 %v1857, %v1853
    %v3366 = vpack.c.b16 %v1858, %v1854
    %v3367 = vpack.c.b16 %v1859, %v1855
    %v3368 = vpack.c.b16 %v1864, %v1860
    %v3369 = vpack.c.b16 %v1865, %v1861
    %v3370 = vpack.c.b16 %v1866, %v1862
    %v3371 = vpack.c.b16 %v1867, %v1863
    %v3372 = vpack.c.b16 %v1872, %v1868
    %v3373 = vpack.c.b16 %v1873, %v1869
    %v3374 = vpack.c.b16 %v1874, %v1870
    %v3375 = vpack.c.b16 %v1875, %v1871
    %v3376 = vpack.c.b16 %v1880, %v1876
    %v3377 = vpack.c.b16 %v1881, %v1877
    %v3378 = vpack.c.b16 %v1882, %v1878
    %v3379 = vpack.c.b16 %v1883, %v1879
    %v3380 = vpack.c.b16 %v1888, %v1884
    %v3381 = vpack.c.b16 %v1889, %v1885
    %v3382 = vpack.c.b16 %v1890, %v1886
    %v3383 = vpack.c.b16 %v1891, %v1887
    %v3384 = vpack.c.b16 %v1896, %v1892
    %v3385 = vpack.c.b16 %v1897, %v1893
    %v3386 = vpack.c.b16 %v1898, %v1894
    %v3387 = vpack.c.b16 %v1899, %v1895
    %v3388 = vpack.c.b16 %v1904, %v1900
    %v3389 = vpack.c.b16 %v1905, %v1901
    %v3390 = vpack.c.b16 %v1906, %v1902
    %v3391 = vpack.c.b16 %v1907, %v1903
    %v3392 = vpack.c.b16 %v1912, %v1908
    %v3393 = vpack.c.b16 %v1913, %v1909
    %v3394 = vpack.c.b16 %v1914, %v1910
    %v3395 = vpack.c.b16 %v1915, %v1911
    %v3396 = vpack.c.b16 %v1920, %v1916
    %v3397 = vpack.c.b16 %v1921, %v1917
    %v3398 = vpack.c.b16 %v1922, %v1918
    %v3399 = vpack.c.b16 %v1923, %v1919
    %v3400 = vpack.c.b16 %v1928, %v1924
    %v3401 = vpack.c.b16 %v1929, %v1925
    %v3402 = vpack.c.b16 %v1930, %v1926
    %v3403 = vpack.c.b16 %v1931, %v1927
    %v3404 = vpack.c.b16 %v1936, %v1932
    %v3405 = vpack.c.b16 %v1937, %v1933
    %v3406 = vpack.c.b16 %v1938, %v1934
    %v3407 = vpack.c.b16 %v1939, %v1935
    %v3408 = vpack.c.b16 %v1944, %v1940
    %v3409 = vpack.c.b16 %v1945, %v1941
    %v3410 = vpack.c.b16 %v1946, %v1942
    %v3411 = vpack.c.b16 %v1947, %v1943
    %v3412 = vpack.c.b16 %v1952, %v1948
    %v3413 = vpack.c.b16 %v1953, %v1949
    %v3414 = vpack.c.b16 %v1954, %v1950
    %v3415 = vpack.c.b16 %v1955, %v1951
    %v3416 = vpack.c.b16 %v1960, %v1956
    %v3417 = vpack.c.b16 %v1961, %v1957
    %v3418 = vpack.c.b16 %v1962, %v1958
    %v3419 = vpack.c.b16 %v1963, %v1959
    %v3420 = vpack.c.b16 %v1968, %v1964
    %v3421 = vpack.c.b16 %v1969, %v1965
    %v3422 = vpack.c.b16 %v1970, %v1966
    %v3423 = vpack.c.b16 %v1971, %v1967
    %v3424 = vpack.c.b16 %v1976, %v1972
    %v3425 = vpack.c.b16 %v1977, %v1973
    %v3426 = vpack.c.b16 %v1978, %v1974
    %v3427 = vpack.c.b16 %v1979, %v1975
    %v3428 = vpack.c.b16 %v1984, %v1980
    %v3429 = vpack.c.b16 %v1985, %v1981
    %v3430 = vpack.c.b16 %v1986, %v1982
    %v3431 = vpack.c.b16 %v1987, %v1983
    %v3432 = vpack.c.b16 %v1992, %v1988
    %v3433 = vpack.c.b16 %v1993, %v1989
    %v3434 = vpack.c.b16 %v1994, %v1990
    %v3435 = vpack.c.b16 %v1995, %v1991
    %v3436 = vpack.c.b16 %v2000, %v1996
    %v3437 = vpack.c.b16 %v2001, %v1997
    %v3438 = vpack.c.b16 %v2002, %v1998
    %v3439 = vpack.c.b16 %v2003, %v1999
    %v3440 = vpack.c.b16 %v2008, %v2004
    %v3441 = vpack.c.b16 %v2009, %v2005
    %v3442 = vpack.c.b16 %v2010, %v2006
    %v3443 = vpack.c.b16 %v2011, %v2007
    %v3444 = vpack.c.b16 %v2016, %v2012
    %v3445 = vpack.c.b16 %v2017, %v2013
    %v3446 = vpack.c.b16 %v2018, %v2014
    %v3447 = vpack.c.b16 %v2019, %v2015
    %v3448 = vpack.c.b16 %v2024, %v2020
    %v3449 = vpack.c.b16 %v2025, %v2021
    %v3450 = vpack.c.b16 %v2026, %v2022
    %v3451 = vpack.c.b16 %v2027, %v2023
    %v3452 = vpack.c.b16 %v2032, %v2028
    %v3453 = vpack.c.b16 %v2033, %v2029
    %v3454 = vpack.c.b16 %v2034, %v2030
    %v3455 = vpack.c.b16 %v2035, %v2031
    %v3456 = vpack.c.b16 %v2040, %v2036
    %v3457 = vpack.c.b16 %v2041, %v2037
    %v3458 = vpack.c.b16 %v2042, %v2038
    %v3459 = vpack.c.b16 %v2043, %v2039
    %v3460 = vpack.c.b16 %v2048, %v2044
    %v3461 = vpack.c.b16 %v2049, %v2045
    %v3462 = vpack.c.b16 %v2050, %v2046
    %v3463 = vpack.c.b16 %v2051, %v2047
    %v3464 = vpack.c.b16 %v2056, %v2052
    %v3465 = vpack.c.b16 %v2057, %v2053
    %v3466 = vpack.c.b16 %v2058, %v2054
    %v3467 = vpack.c.b16 %v2059, %v2055
    %v3468 = vpack.c.b16 %v2064, %v2060
    %v3469 = vpack.c.b16 %v2065, %v2061
    %v3470 = vpack.c.b16 %v2066, %v2062
    %v3471 = vpack.c.b16 %v2067, %v2063
    %v3472 = vpack.c.b16 %v2072, %v2068
    %v3473 = vpack.c.b16 %v2073, %v2069
    %v3474 = vpack.c.b16 %v2074, %v2070
    %v3475 = vpack.c.b16 %v2075, %v2071
    %v3476 = vpack.c.b16 %v2080, %v2076
    %v3477 = vpack.c.b16 %v2081, %v2077
    %v3478 = vpack.c.b16 %v2082, %v2078
    %v3479 = vpack.c.b16 %v2083, %v2079
    %v3480 = vpack.c.b16 %v2088, %v2084
    %v3481 = vpack.c.b16 %v2089, %v2085
    %v3482 = vpack.c.b16 %v2090, %v2086
    %v3483 = vpack.c.b16 %v2091, %v2087
    %v3484 = vpack.c.b16 %v2096, %v2092
    %v3485 = vpack.c.b16 %v2097, %v2093
    %v3486 = vpack.c.b16 %v2098, %v2094
    %v3487 = vpack.c.b16 %v2099, %v2095
    %v3488 = vpack.c.b16 %v2104, %v2100
    %v3489 = vpack.c.b16 %v2105, %v2101
    %v3490 = vpack.c.b16 %v2106, %v2102
    %v3491 = vpack.c.b16 %v2107, %v2103
    %v3492 = vpack.c.b16 %v2112, %v2108
    %v3493 = vpack.c.b16 %v2113, %v2109
    %v3494 = vpack.c.b16 %v2114, %v2110
    %v3495 = vpack.c.b16 %v2115, %v2111
    %v3496 = vpack.c.b16 %v2120, %v2116
    %v3497 = vpack.c.b16 %v2121, %v2117
    %v3498 = vpack.c.b16 %v2122, %v2118
    %v3499 = vpack.c.b16 %v2123, %v2119
    %v3500 = vpack.c.b16 %v2128, %v2124
    %v3501 = vpack.c.b16 %v2129, %v2125
    %v3502 = vpack.c.b16 %v2130, %v2126
    %v3503 = vpack.c.b16 %v2131, %v2127
    %v3504 = vpack.c.b16 %v2136, %v2132
    %v3505 = vpack.c.b16 %v2137, %v2133
    %v3506 = vpack.c.b16 %v2138, %v2134
    %v3507 = vpack.c.b16 %v2139, %v2135
    %v3508 = vpack.c.b16 %v2144, %v2140
    %v3509 = vpack.c.b16 %v2145, %v2141
    %v3510 = vpack.c.b16 %v2146, %v2142
    %v3511 = vpack.c.b16 %v2147, %v2143
    %v3512 = vpack.c.b16 %v2152, %v2148
    %v3513 = vpack.c.b16 %v2153, %v2149
    %v3514 = vpack.c.b16 %v2154, %v2150
    %v3515 = vpack.c.b16 %v2155, %v2151
    %v3516 = vpack.c.b16 %v2160, %v2156
    %v3517 = vpack.c.b16 %v2161, %v2157
    %v3518 = vpack.c.b16 %v2162, %v2158
    %v3519 = vpack.c.b16 %v2163, %v2159
    %v3520 = vpack.c.b16 %v2168, %v2164
    %v3521 = vpack.c.b16 %v2169, %v2165
    %v3522 = vpack.c.b16 %v2170, %v2166
    %v3523 = vpack.c.b16 %v2171, %v2167
    %v3524 = vpack.c.b16 %v2176, %v2172
    %v3525 = vpack.c.b16 %v2177, %v2173
    %v3526 = vpack.c.b16 %v2178, %v2174
    %v3527 = vpack.c.b16 %v2179, %v2175
    %v3528 = vpack.c.b16 %v2184, %v2180
    %v3529 = vpack.c.b16 %v2185, %v2181
    %v3530 = vpack.c.b16 %v2186, %v2182
    %v3531 = vpack.c.b16 %v2187, %v2183
    %v3532 = vpack.c.b16 %v2192, %v2188
    %v3533 = vpack.c.b16 %v2193, %v2189
    %v3534 = vpack.c.b16 %v2194, %v2190
    %v3535 = vpack.c.b16 %v2195, %v2191
    %v3536 = vpack.c.b16 %v2200, %v2196
    %v3537 = vpack.c.b16 %v2201, %v2197
    %v3538 = vpack.c.b16 %v2202, %v2198
    %v3539 = vpack.c.b16 %v2203, %v2199
    %v3540 = vpack.c.b16 %v2208, %v2204
    %v3541 = vpack.c.b16 %v2209, %v2205
    %v3542 = vpack.c.b16 %v2210, %v2206
    %v3543 = vpack.c.b16 %v2211, %v2207
    %v3544 = vpack.c.b16 %v2216, %v2212
    %v3545 = vpack.c.b16 %v2217, %v2213
    %v3546 = vpack.c.b16 %v2218, %v2214
    %v3547 = vpack.c.b16 %v2219, %v2215
    %v3548 = vpack.c.b16 %v2224, %v2220
    %v3549 = vpack.c.b16 %v2225, %v2221
    %v3550 = vpack.c.b16 %v2226, %v2222
    %v3551 = vpack.c.b16 %v2227, %v2223
    %v3552 = vpack.c.b16 %v2232, %v2228
    %v3553 = vpack.c.b16 %v2233, %v2229
    %v3554 = vpack.c.b16 %v2234, %v2230
    %v3555 = vpack.c.b16 %v2235, %v2231
    %v3556 = vpack.c.b16 %v2240, %v2236
    %v3557 = vpack.c.b16 %v2241, %v2237
    %v3558 = vpack.c.b16 %v2242, %v2238
    %v3559 = vpack.c.b16 %v2243, %v2239
    %v3560 = vpack.c.b16 %v2248, %v2244
    %v3561 = vpack.c.b16 %v2249, %v2245
    %v3562 = vpack.c.b16 %v2250, %v2246
    %v3563 = vpack.c.b16 %v2251, %v2247
    %v3564 = vpack.c.b16 %v2256, %v2252
    %v3565 = vpack.c.b16 %v2257, %v2253
    %v3566 = vpack.c.b16 %v2258, %v2254
    %v3567 = vpack.c.b16 %v2259, %v2255
    %v3568 = vpack.c.b16 %v2264, %v2260
    %v3569 = vpack.c.b16 %v2265, %v2261
    %v3570 = vpack.c.b16 %v2266, %v2262
    %v3571 = vpack.c.b16 %v2267, %v2263
    %v3572 = vpack.c.b16 %v2272, %v2268
    %v3573 = vpack.c.b16 %v2273, %v2269
    %v3574 = vpack.c.b16 %v2274, %v2270
    %v3575 = vpack.c.b16 %v2275, %v2271
    %v3576 = vpack.c.b16 %v2280, %v2276
    %v3577 = vpack.c.b16 %v2281, %v2277
    %v3578 = vpack.c.b16 %v2282, %v2278
    %v3579 = vpack.c.b16 %v2283, %v2279
    %v3580 = vpack.c.b16 %v2288, %v2284
    %v3581 = vpack.c.b16 %v2289, %v2285
    %v3582 = vpack.c.b16 %v2290, %v2286
    %v3583 = vpack.c.b16 %v2291, %v2287
    %v3584 = vpack.c.b16 %v2296, %v2292
    %v3585 = vpack.c.b16 %v2297, %v2293
    %v3586 = vpack.c.b16 %v2298, %v2294
    %v3587 = vpack.c.b16 %v2299, %v2295
    %v3588 = vpack.c.b16 %v2304, %v2300
    %v3589 = vpack.c.b16 %v2305, %v2301
    %v3590 = vpack.c.b16 %v2306, %v2302
    %v3591 = vpack.c.b16 %v2307, %v2303
    %v3592 = vpack.c.b16 %v2312, %v2308
    %v3593 = vpack.c.b16 %v2313, %v2309
    %v3594 = vpack.c.b16 %v2314, %v2310
    %v3595 = vpack.c.b16 %v2315, %v2311
    %v3596 = vpack.c.b16 %v2320, %v2316
    %v3597 = vpack.c.b16 %v2321, %v2317
    %v3598 = vpack.c.b16 %v2322, %v2318
    %v3599 = vpack.c.b16 %v2323, %v2319
    %v3600 = vpack.c.b16 %v2328, %v2324
    %v3601 = vpack.c.b16 %v2329, %v2325
    %v3602 = vpack.c.b16 %v2330, %v2326
    %v3603 = vpack.c.b16 %v2331, %v2327
    %v3604 = vpack.c.b16 %v2336, %v2332
    %v3605 = vpack.c.b16 %v2337, %v2333
    %v3606 = vpack.c.b16 %v2338, %v2334
    %v3607 = vpack.c.b16 %v2339, %v2335
    %v3608 = vpack.c.b16 %v2344, %v2340
    %v3609 = vpack.c.b16 %v2345, %v2341
    %v3610 = vpack.c.b16 %v2346, %v2342
    %v3611 = vpack.c.b16 %v2347, %v2343
    %v3612 = vpack.c.b16 %v2352, %v2348
    %v3613 = vpack.c.b16 %v2353, %v2349
    %v3614 = vpack.c.b16 %v2354, %v2350
    %v3615 = vpack.c.b16 %v2355, %v2351
    %v3616 = vpack.c.b16 %v2360, %v2356
    %v3617 = vpack.c.b16 %v2361, %v2357
    %v3618 = vpack.c.b16 %v2362, %v2358
    %v3619 = vpack.c.b16 %v2363, %v2359
    %v3620 = vpack.c.b16 %v2368, %v2364
    %v3621 = vpack.c.b16 %v2369, %v2365
    %v3622 = vpack.c.b16 %v2370, %v2366
    %v3623 = vpack.c.b16 %v2371, %v2367
    %v3624 = vpack.c.b16 %v2376, %v2372
    %v3625 = vpack.c.b16 %v2377, %v2373
    %v3626 = vpack.c.b16 %v2378, %v2374
    %v3627 = vpack.c.b16 %v2379, %v2375
    %v3628 = vpack.c.b16 %v2384, %v2380
    %v3629 = vpack.c.b16 %v2385, %v2381
    %v3630 = vpack.c.b16 %v2386, %v2382
    %v3631 = vpack.c.b16 %v2387, %v2383
    %v3632 = vpack.c.b16 %v2392, %v2388
    %v3633 = vpack.c.b16 %v2393, %v2389
    %v3634 = vpack.c.b16 %v2394, %v2390
    %v3635 = vpack.c.b16 %v2395, %v2391
    %v3636 = vpack.c.b16 %v2400, %v2396
    %v3637 = vpack.c.b16 %v2401, %v2397
    %v3638 = vpack.c.b16 %v2402, %v2398
    %v3639 = vpack.c.b16 %v2403, %v2399
    %v3640 = vpack.c.b16 %v2408, %v2404
    %v3641 = vpack.c.b16 %v2409, %v2405
    %v3642 = vpack.c.b16 %v2410, %v2406
    %v3643 = vpack.c.b16 %v2411, %v2407
    %v3644 = vpack.c.b16 %v2416, %v2412
    %v3645 = vpack.c.b16 %v2417, %v2413
    %v3646 = vpack.c.b16 %v2418, %v2414
    %v3647 = vpack.c.b16 %v2419, %v2415
    %v3648 = vpack.c.b16 %v2424, %v2420
    %v3649 = vpack.c.b16 %v2425, %v2421
    %v3650 = vpack.c.b16 %v2426, %v2422
    %v3651 = vpack.c.b16 %v2427, %v2423
    %v3652 = vpack.c.b16 %v2432, %v2428
    %v3653 = vpack.c.b16 %v2433, %v2429
    %v3654 = vpack.c.b16 %v2434, %v2430
    %v3655 = vpack.c.b16 %v2435, %v2431
    %v3656 = vpack.c.b16 %v2440, %v2436
    %v3657 = vpack.c.b16 %v2441, %v2437
    %v3658 = vpack.c.b16 %v2442, %v2438
    %v3659 = vpack.c.b16 %v2443, %v2439
    %v3660 = vpack.c.b16 %v2448, %v2444
    %v3661 = vpack.c.b16 %v2449, %v2445
    %v3662 = vpack.c.b16 %v2450, %v2446
    %v3663 = vpack.c.b16 %v2451, %v2447
    %v3664 = vpack.c.b16 %v2456, %v2452
    %v3665 = vpack.c.b16 %v2457, %v2453
    %v3666 = vpack.c.b16 %v2458, %v2454
    %v3667 = vpack.c.b16 %v2459, %v2455
    %v3668 = vpack.c.b16 %v2464, %v2460
    %v3669 = vpack.c.b16 %v2465, %v2461
    %v3670 = vpack.c.b16 %v2466, %v2462
    %v3671 = vpack.c.b16 %v2467, %v2463
    %v3672 = vpack.c.b16 %v2472, %v2468
    %v3673 = vpack.c.b16 %v2473, %v2469
    %v3674 = vpack.c.b16 %v2474, %v2470
    %v3675 = vpack.c.b16 %v2475, %v2471
    %v3676 = vpack.c.b16 %v2480, %v2476
    %v3677 = vpack.c.b16 %v2481, %v2477
    %v3678 = vpack.c.b16 %v2482, %v2478
    %v3679 = vpack.c.b16 %v2483, %v2479
    %v3680 = vpack.c.b16 %v2488, %v2484
    %v3681 = vpack.c.b16 %v2489, %v2485
    %v3682 = vpack.c.b16 %v2490, %v2486
    %v3683 = vpack.c.b16 %v2491, %v2487
    %v3684 = vpack.c.b16 %v2496, %v2492
    %v3685 = vpack.c.b16 %v2497, %v2493
    %v3686 = vpack.c.b16 %v2498, %v2494
    %v3687 = vpack.c.b16 %v2499, %v2495
    %v3688 = vpack.c.b16 %v2504, %v2500
    %v3689 = vpack.c.b16 %v2505, %v2501
    %v3690 = vpack.c.b16 %v2506, %v2502
    %v3691 = vpack.c.b16 %v2507, %v2503
    %v3692 = vpack.c.b16 %v2512, %v2508
    %v3693 = vpack.c.b16 %v2513, %v2509
    %v3694 = vpack.c.b16 %v2514, %v2510
    %v3695 = vpack.c.b16 %v2515, %v2511
    %v3696 = vpack.c.b16 %v2520, %v2516
    %v3697 = vpack.c.b16 %v2521, %v2517
    %v3698 = vpack.c.b16 %v2522, %v2518
    %v3699 = vpack.c.b16 %v2523, %v2519
    %v3700 = vpack.c.b16 %v2528, %v2524
    %v3701 = vpack.c.b16 %v2529, %v2525
    %v3702 = vpack.c.b16 %v2530, %v2526
    %v3703 = vpack.c.b16 %v2531, %v2527
    %v3704 = vpack.c.b16 %v2536, %v2532
    %v3705 = vpack.c.b16 %v2537, %v2533
    %v3706 = vpack.c.b16 %v2538, %v2534
    %v3707 = vpack.c.b16 %v2539, %v2535
    %v3708 = vpack.c.b16 %v2544, %v2540
    %v3709 = vpack.c.b16 %v2545, %v2541
    %v3710 = vpack.c.b16 %v2546, %v2542
    %v3711 = vpack.c.b16 %v2547, %v2543
    %v3712 = vpack.c.b16 %v2552, %v2548
    %v3713 = vpack.c.b16 %v2553, %v2549
    %v3714 = vpack.c.b16 %v2554, %v2550
    %v3715 = vpack.c.b16 %v2555, %v2551
    %v3716 = vpack.c.b16 %v2560, %v2556
    %v3717 = vpack.c.b16 %v2561, %v2557
    %v3718 = vpack.c.b16 %v2562, %v2558
    %v3719 = vpack.c.b16 %v2563, %v2559
    %v3720 = vpack.c.b16 %v2568, %v2564
    %v3721 = vpack.c.b16 %v2569, %v2565
    %v3722 = vpack.c.b16 %v2570, %v2566
    %v3723 = vpack.c.b16 %v2571, %v2567
    %v3724 = vpack.c.b16 %v2576, %v2572
    %v3725 = vpack.c.b16 %v2577, %v2573
    %v3726 = vpack.c.b16 %v2578, %v2574
    %v3727 = vpack.c.b16 %v2579, %v2575
    %v3728 = vpack.c.b16 %v2584, %v2580
    %v3729 = vpack.c.b16 %v2585, %v2581
    %v3730 = vpack.c.b16 %v2586, %v2582
    %v3731 = vpack.c.b16 %v2587, %v2583
    %v3732 = vpack.c.b16 %v2592, %v2588
    %v3733 = vpack.c.b16 %v2593, %v2589
    %v3734 = vpack.c.b16 %v2594, %v2590
    %v3735 = vpack.c.b16 %v2595, %v2591
    %v3736 = vpack.c.b16 %v2600, %v2596
    %v3737 = vpack.c.b16 %v2601, %v2597
    %v3738 = vpack.c.b16 %v2602, %v2598
    %v3739 = vpack.c.b16 %v2603, %v2599
    %v3740 = vpack.c.b16 %v2608, %v2604
    %v3741 = vpack.c.b16 %v2609, %v2605
    %v3742 = vpack.c.b16 %v2610, %v2606
    %v3743 = vpack.c.b16 %v2611, %v2607
    %v3744 = vpack.c.b16 %v2616, %v2612
    %v3745 = vpack.c.b16 %v2617, %v2613
    %v3746 = vpack.c.b16 %v2618, %v2614
    %v3747 = vpack.c.b16 %v2619, %v2615
    %v3748 = vpack.c.b16 %v2624, %v2620
    %v3749 = vpack.c.b16 %v2625, %v2621
    %v3750 = vpack.c.b16 %v2626, %v2622
    %v3751 = vpack.c.b16 %v2627, %v2623
    %v3752 = vpack.c.b16 %v2632, %v2628
    %v3753 = vpack.c.b16 %v2633, %v2629
    %v3754 = vpack.c.b16 %v2634, %v2630
    %v3755 = vpack.c.b16 %v2635, %v2631
    %v3756 = vpack.c.b16 %v2640, %v2636
    %v3757 = vpack.c.b16 %v2641, %v2637
    %v3758 = vpack.c.b16 %v2642, %v2638
    %v3759 = vpack.c.b16 %v2643, %v2639
    %v3760 = vpack.c.b16 %v2648, %v2644
    %v3761 = vpack.c.b16 %v2649, %v2645
    %v3762 = vpack.c.b16 %v2650, %v2646
    %v3763 = vpack.c.b16 %v2651, %v2647
    %v3764 = vpack.c.b16 %v2656, %v2652
    %v3765 = vpack.c.b16 %v2657, %v2653
    %v3766 = vpack.c.b16 %v2658, %v2654
    %v3767 = vpack.c.b16 %v2659, %v2655
    %v3768 = vpack.c.b16 %v2664, %v2660
    %v3769 = vpack.c.b16 %v2665, %v2661
    %v3770 = vpack.c.b16 %v2666, %v2662
    %v3771 = vpack.c.b16 %v2667, %v2663
    %v3772 = vpack.c.b16 %v2672, %v2668
    %v3773 = vpack.c.b16 %v2673, %v2669
    %v3774 = vpack.c.b16 %v2674, %v2670
    %v3775 = vpack.c.b16 %v2675, %v2671
    %v3776 = vpack.c.b16 %v2680, %v2676
    %v3777 = vpack.c.b16 %v2681, %v2677
    %v3778 = vpack.c.b16 %v2682, %v2678
    %v3779 = vpack.c.b16 %v2683, %v2679
    %v3780 = vpack.c.b16 %v2688, %v2684
    %v3781 = vpack.c.b16 %v2689, %v2685
    %v3782 = vpack.c.b16 %v2690, %v2686
    %v3783 = vpack.c.b16 %v2691, %v2687
    %v3784 = vpack.c.b16 %v2696, %v2692
    %v3785 = vpack.c.b16 %v2697, %v2693
    %v3786 = vpack.c.b16 %v2698, %v2694
    %v3787 = vpack.c.b16 %v2699, %v2695
    %v3788 = vpack.c.b16 %v2704, %v2700
    %v3789 = vpack.c.b16 %v2705, %v2701
    %v3790 = vpack.c.b16 %v2706, %v2702
    %v3791 = vpack.c.b16 %v2707, %v2703
    %v3792 = vpack.c.b16 %v2712, %v2708
    %v3793 = vpack.c.b16 %v2713, %v2709
    %v3794 = vpack.c.b16 %v2714, %v2710
    %v3795 = vpack.c.b16 %v2715, %v2711
    %v3796 = vpack.c.b16 %v2720, %v2716
    %v3797 = vpack.c.b16 %v2721, %v2717
    %v3798 = vpack.c.b16 %v2722, %v2718
    %v3799 = vpack.c.b16 %v2723, %v2719
    %v3800 = vpack.c.b16 %v2728, %v2724
    %v3801 = vpack.c.b16 %v2729, %v2725
    %v3802 = vpack.c.b16 %v2730, %v2726
    %v3803 = vpack.c.b16 %v2731, %v2727
    %v3804 = vpack.c.b16 %v2736, %v2732
    %v3805 = vpack.c.b16 %v2737, %v2733
    %v3806 = vpack.c.b16 %v2738, %v2734
    %v3807 = vpack.c.b16 %v2739, %v2735
    %v3808 = vpack.c.b16 %v2744, %v2740
    %v3809 = vpack.c.b16 %v2745, %v2741
    %v3810 = vpack.c.b16 %v2746, %v2742
    %v3811 = vpack.c.b16 %v2747, %v2743
    %v3812 = vpack.c.b16 %v2752, %v2748
    %v3813 = vpack.c.b16 %v2753, %v2749
    %v3814 = vpack.c.b16 %v2754, %v2750
    %v3815 = vpack.c.b16 %v2755, %v2751
    %v3816 = vpack.c.b16 %v2760, %v2756
    %v3817 = vpack.c.b16 %v2761, %v2757
    %v3818 = vpack.c.b16 %v2762, %v2758
    %v3819 = vpack.c.b16 %v2763, %v2759
    %v3820 = vpack.c.b16 %v2768, %v2764
    %v3821 = vpack.c.b16 %v2769, %v2765
    %v3822 = vpack.c.b16 %v2770, %v2766
    %v3823 = vpack.c.b16 %v2771, %v2767
    %v3824 = vpack.c.b16 %v2776, %v2772
    %v3825 = vpack.c.b16 %v2777, %v2773
    %v3826 = vpack.c.b16 %v2778, %v2774
    %v3827 = vpack.c.b16 %v2779, %v2775
    %v3828 = vpack.c.b16 %v2784, %v2780
    %v3829 = vpack.c.b16 %v2785, %v2781
    %v3830 = vpack.c.b16 %v2786, %v2782
    %v3831 = vpack.c.b16 %v2787, %v2783
    %v3832 = vpack.c.b16 %v2792, %v2788
    %v3833 = vpack.c.b16 %v2793, %v2789
    %v3834 = vpack.c.b16 %v2794, %v2790
    %v3835 = vpack.c.b16 %v2795, %v2791
    %v3836 = vpack.c.b16 %v2800, %v2796
    %v3837 = vpack.c.b16 %v2801, %v2797
    %v3838 = vpack.c.b16 %v2802, %v2798
    %v3839 = vpack.c.b16 %v2803, %v2799
    %v3840 = vpack.c.b16 %v2808, %v2804
    %v3841 = vpack.c.b16 %v2809, %v2805
    %v3842 = vpack.c.b16 %v2810, %v2806
    %v3843 = vpack.c.b16 %v2811, %v2807
    %v3844 = vpack.c.b16 %v2816, %v2812
    %v3845 = vpack.c.b16 %v2817, %v2813
    %v3846 = vpack.c.b16 %v2818, %v2814
    %v3847 = vpack.c.b16 %v2819, %v2815
    %v3848 = vpack.c.b16 %v2824, %v2820
    %v3849 = vpack.c.b16 %v2825, %v2821
    %v3850 = vpack.c.b16 %v2826, %v2822
    %v3851 = vpack.c.b16 %v2827, %v2823
    %v3852 = vpack.c.b16 %v2832, %v2828
    %v3853 = vpack.c.b16 %v2833, %v2829
    %v3854 = vpack.c.b16 %v2834, %v2830
    %v3855 = vpack.c.b16 %v2835, %v2831
    %v3856 = vpack.c.b16 %v2840, %v2836
    %v3857 = vpack.c.b16 %v2841, %v2837
    %v3858 = vpack.c.b16 %v2842, %v2838
    %v3859 = vpack.c.b16 %v2843, %v2839
    %v3860 = vpack.c.b16 %v2848, %v2844
    %v3861 = vpack.c.b16 %v2849, %v2845
    %v3862 = vpack.c.b16 %v2850, %v2846
    %v3863 = vpack.c.b16 %v2851, %v2847
    %v3864 = vpack.c.b16 %v2856, %v2852
    %v3865 = vpack.c.b16 %v2857, %v2853
    %v3866 = vpack.c.b16 %v2858, %v2854
    %v3867 = vpack.c.b16 %v2859, %v2855
    %v3868 = vpack.c.b16 %v2864, %v2860
    %v3869 = vpack.c.b16 %v2865, %v2861
    %v3870 = vpack.c.b16 %v2866, %v2862
    %v3871 = vpack.c.b16 %v2867, %v2863
    %v3872 = vpack.c.b16 %v2872, %v2868
    %v3873 = vpack.c.b16 %v2873, %v2869
    %v3874 = vpack.c.b16 %v2874, %v2870
    %v3875 = vpack.c.b16 %v2875, %v2871
    %v3876 = vpack.c.b16 %v2880, %v2876
    %v3877 = vpack.c.b16 %v2881, %v2877
    %v3878 = vpack.c.b16 %v2882, %v2878
    %v3879 = vpack.c.b16 %v2883, %v2879
    %v3880 = vpack.c.b16 %v2888, %v2884
    %v3881 = vpack.c.b16 %v2889, %v2885
    %v3882 = vpack.c.b16 %v2890, %v2886
    %v3883 = vpack.c.b16 %v2891, %v2887
    %v3884 = vpack.c.b16 %v2896, %v2892
    %v3885 = vpack.c.b16 %v2897, %v2893
    %v3886 = vpack.c.b16 %v2898, %v2894
    %v3887 = vpack.c.b16 %v2899, %v2895
    %v3888 = vpack.c.b16 %v2904, %v2900
    %v3889 = vpack.c.b16 %v2905, %v2901
    %v3890 = vpack.c.b16 %v2906, %v2902
    %v3891 = vpack.c.b16 %v2907, %v2903
    %v3892 = vpack.c.b16 %v2912, %v2908
    %v3893 = vpack.c.b16 %v2913, %v2909
    %v3894 = vpack.c.b16 %v2914, %v2910
    %v3895 = vpack.c.b16 %v2915, %v2911
    %v3896 = vpack.c.b16 %v2920, %v2916
    %v3897 = vpack.c.b16 %v2921, %v2917
    %v3898 = vpack.c.b16 %v2922, %v2918
    %v3899 = vpack.c.b16 %v2923, %v2919
    %v3900 = vpack.c.b16 %v2928, %v2924
    %v3901 = vpack.c.b16 %v2929, %v2925
    %v3902 = vpack.c.b16 %v2930, %v2926
    %v3903 = vpack.c.b16 %v2931, %v2927
    %v3904 = vpack.c.b16 %v2936, %v2932
    %v3905 = vpack.c.b16 %v2937, %v2933
    %v3906 = vpack.c.b16 %v2938, %v2934
    %v3907 = vpack.c.b16 %v2939, %v2935
    %v3908 = vpack.c.b16 %v2944, %v2940
    %v3909 = vpack.c.b16 %v2945, %v2941
    %v3910 = vpack.c.b16 %v2946, %v2942
    %v3911 = vpack.c.b16 %v2947, %v2943
    %v3912 = vpack.c.b16 %v2952, %v2948
    %v3913 = vpack.c.b16 %v2953, %v2949
    %v3914 = vpack.c.b16 %v2954, %v2950
    %v3915 = vpack.c.b16 %v2955, %v2951
    %v3916 = vpack.c.b16 %v2960, %v2956
    %v3917 = vpack.c.b16 %v2961, %v2957
    %v3918 = vpack.c.b16 %v2962, %v2958
    %v3919 = vpack.c.b16 %v2963, %v2959
    %v3920 = vpack.c.b16 %v2968, %v2964
    %v3921 = vpack.c.b16 %v2969, %v2965
    %v3922 = vpack.c.b16 %v2970, %v2966
    %v3923 = vpack.c.b16 %v2971, %v2967
    %v3924 = vpack.c.b16 %v2976, %v2972
    %v3925 = vpack.c.b16 %v2977, %v2973
    %v3926 = vpack.c.b16 %v2978, %v2974
    %v3927 = vpack.c.b16 %v2979, %v2975
    %v3928 = vpack.c.b16 %v2984, %v2980
    %v3929 = vpack.c.b16 %v2985, %v2981
    %v3930 = vpack.c.b16 %v2986, %v2982
    %v3931 = vpack.c.b16 %v2987, %v2983
    %v3932 = vpack.c.b16 %v2992, %v2988
    %v3933 = vpack.c.b16 %v2993, %v2989
    %v3934 = vpack.c.b16 %v2994, %v2990
    %v3935 = vpack.c.b16 %v2995, %v2991
    %v3936 = vpack.c.b16 %v3000, %v2996
    %v3937 = vpack.c.b16 %v3001, %v2997
    %v3938 = vpack.c.b16 %v3002, %v2998
    %v3939 = vpack.c.b16 %v3003, %v2999
    %v3940 = vpack.c.b16 %v3008, %v3004
    %v3941 = vpack.c.b16 %v3009, %v3005
    %v3942 = vpack.c.b16 %v3010, %v3006
    %v3943 = vpack.c.b16 %v3011, %v3007
    %v3944 = vpack.c.b16 %v3016, %v3012
    %v3945 = vpack.c.b16 %v3017, %v3013
    %v3946 = vpack.c.b16 %v3018, %v3014
    %v3947 = vpack.c.b16 %v3019, %v3015
    %v3948 = vpack.c.b16 %v3024, %v3020
    %v3949 = vpack.c.b16 %v3025, %v3021
    %v3950 = vpack.c.b16 %v3026, %v3022
    %v3951 = vpack.c.b16 %v3027, %v3023
    %v3952 = vpack.c.b16 %v3032, %v3028
    %v3953 = vpack.c.b16 %v3033, %v3029
    %v3954 = vpack.c.b16 %v3034, %v3030
    %v3955 = vpack.c.b16 %v3035, %v3031
    %v3956 = vpack.c.b16 %v3040, %v3036
    %v3957 = vpack.c.b16 %v3041, %v3037
    %v3958 = vpack.c.b16 %v3042, %v3038
    %v3959 = vpack.c.b16 %v3043, %v3039
    %v3960 = vpack.c.b16 %v3048, %v3044
    %v3961 = vpack.c.b16 %v3049, %v3045
    %v3962 = vpack.c.b16 %v3050, %v3046
    %v3963 = vpack.c.b16 %v3051, %v3047
    %v3964 = vpack.c.b16 %v3056, %v3052
    %v3965 = vpack.c.b16 %v3057, %v3053
    %v3966 = vpack.c.b16 %v3058, %v3054
    %v3967 = vpack.c.b16 %v3059, %v3055
    %v3968 = vpack.c.b16 %v3064, %v3060
    %v3969 = vpack.c.b16 %v3065, %v3061
    %v3970 = vpack.c.b16 %v3066, %v3062
    %v3971 = vpack.c.b16 %v3067, %v3063
    %v3972 = vpack.c.b16 %v3072, %v3068
    %v3973 = vpack.c.b16 %v3073, %v3069
    %v3974 = vpack.c.b16 %v3074, %v3070
    %v3975 = vpack.c.b16 %v3075, %v3071
    %v3976 = vpack.c.b16 %v3080, %v3076
    %v3977 = vpack.c.b16 %v3081, %v3077
    %v3978 = vpack.c.b16 %v3082, %v3078
    %v3979 = vpack.c.b16 %v3083, %v3079
    %v3980 = vpack.c.b16 %v3088, %v3084
    %v3981 = vpack.c.b16 %v3089, %v3085
    %v3982 = vpack.c.b16 %v3090, %v3086
    %v3983 = vpack.c.b16 %v3091, %v3087
    %v3984 = vpack.c.b16 %v3096, %v3092
    %v3985 = vpack.c.b16 %v3097, %v3093
    %v3986 = vpack.c.b16 %v3098, %v3094
    %v3987 = vpack.c.b16 %v3099, %v3095
    %v3988 = vpack.c.b16 %v3104, %v3100
    %v3989 = vpack.c.b16 %v3105, %v3101
    %v3990 = vpack.c.b16 %v3106, %v3102
    %v3991 = vpack.c.b16 %v3107, %v3103
    %v3992 = vpack.c.b16 %v3112, %v3108
    %v3993 = vpack.c.b16 %v3113, %v3109
    %v3994 = vpack.c.b16 %v3114, %v3110
    %v3995 = vpack.c.b16 %v3115, %v3111
    %v3996 = vpack.c.b16 %v3120, %v3116
    %v3997 = vpack.c.b16 %v3121, %v3117
    %v3998 = vpack.c.b16 %v3122, %v3118
    %v3999 = vpack.c.b16 %v3123, %v3119
    %v4000 = vpack.c.b16 %v3128, %v3124
    %v4001 = vpack.c.b16 %v3129, %v3125
    %v4002 = vpack.c.b16 %v3130, %v3126
    %v4003 = vpack.c.b16 %v3131, %v3127
    %v4004 = vpack.c.b16 %v3136, %v3132
    %v4005 = vpack.c.b16 %v3137, %v3133
    %v4006 = vpack.c.b16 %v3138, %v3134
    %v4007 = vpack.c.b16 %v3139, %v3135
    %v4008 = vpack.c.b16 %v3144, %v3140
    %v4009 = vpack.c.b16 %v3145, %v3141
    %v4010 = vpack.c.b16 %v3146, %v3142
    %v4011 = vpack.c.b16 %v3147, %v3143
    %v4012 = vpack.c.b16 %v3152, %v3148
    %v4013 = vpack.c.b16 %v3153, %v3149
    %v4014 = vpack.c.b16 %v3154, %v3150
    %v4015 = vpack.c.b16 %v3155, %v3151
    %v4016 = vpack.c.b16 %v3160, %v3156
    %v4017 = vpack.c.b16 %v3161, %v3157
    %v4018 = vpack.c.b16 %v3162, %v3158
    %v4019 = vpack.c.b16 %v3163, %v3159
    %v4020 = vpack.c.b16 %v3168, %v3164
    %v4021 = vpack.c.b16 %v3169, %v3165
    %v4022 = vpack.c.b16 %v3170, %v3166
    %v4023 = vpack.c.b16 %v3171, %v3167
    %v4024 = vpack.c.b16 %v3176, %v3172
    %v4025 = vpack.c.b16 %v3177, %v3173
    %v4026 = vpack.c.b16 %v3178, %v3174
    %v4027 = vpack.c.b16 %v3179, %v3175
    %v4028 = vpack.c.b16 %v3184, %v3180
    %v4029 = vpack.c.b16 %v3185, %v3181
    %v4030 = vpack.c.b16 %v3186, %v3182
    %v4031 = vpack.c.b16 %v3187, %v3183
    %v4032 = vpack.c.b16 %v3192, %v3188
    %v4033 = vpack.c.b16 %v3193, %v3189
    %v4034 = vpack.c.b16 %v3194, %v3190
    %v4035 = vpack.c.b16 %v3195, %v3191
    %v4036 = vpack.c.b16 %v3200, %v3196
    %v4037 = vpack.c.b16 %v3201, %v3197
    %v4038 = vpack.c.b16 %v3202, %v3198
    %v4039 = vpack.c.b16 %v3203, %v3199
    %v4040 = vpack.c.b16 %v3208, %v3204
    %v4041 = vpack.c.b16 %v3209, %v3205
    %v4042 = vpack.c.b16 %v3210, %v3206
    %v4043 = vpack.c.b16 %v3211, %v3207
    %v4044 = vpack.c.b16 %v3216, %v3212
    %v4045 = vpack.c.b16 %v3217, %v3213
    %v4046 = vpack.c.b16 %v3218, %v3214
    %v4047 = vpack.c.b16 %v3219, %v3215
    %v4048 = vpack.c.b16 %v3224, %v3220
    %v4049 = vpack.c.b16 %v3225, %v3221
    %v4050 = vpack.c.b16 %v3226, %v3222
    %v4051 = vpack.c.b16 %v3227, %v3223
    %v4052 = vpack.c.b16 %v3232, %v3228
    %v4053 = vpack.c.b16 %v3233, %v3229
    %v4054 = vpack.c.b16 %v3234, %v3230
    %v4055 = vpack.c.b16 %v3235, %v3231
    %v4056 = vpack.c.b16 %v3240, %v3236
    %v4057 = vpack.c.b16 %v3241, %v3237
    %v4058 = vpack.c.b16 %v3242, %v3238
    %v4059 = vpack.c.b16 %v3243, %v3239
    %v4060 = vpack.c.b16 %v3248, %v3244
    %v4061 = vpack.c.b16 %v3249, %v3245
    %v4062 = vpack.c.b16 %v3250, %v3246
    %v4063 = vpack.c.b16 %v3251, %v3247
    %v4064 = vpack.c.b16 %v3256, %v3252
    %v4065 = vpack.c.b16 %v3257, %v3253
    %v4066 = vpack.c.b16 %v3258, %v3254
    %v4067 = vpack.c.b16 %v3259, %v3255
    %v4068 = vpack.c.b16 %v3264, %v3260
    %v4069 = vpack.c.b16 %v3265, %v3261
    %v4070 = vpack.c.b16 %v3266, %v3262
    %v4071 = vpack.c.b16 %v3267, %v3263
    %v4072 = vpack.c.b16 %v3272, %v3268
    %v4073 = vpack.c.b16 %v3273, %v3269
    %v4074 = vpack.c.b16 %v3274, %v3270
    %v4075 = vpack.c.b16 %v3275, %v3271
    %v4076 = vpack.c.b16 %v3280, %v3276
    %v4077 = vpack.c.b16 %v3281, %v3277
    %v4078 = vpack.c.b16 %v3282, %v3278
    %v4079 = vpack.c.b16 %v3283, %v3279
    %v4080 = vpack.c.b16 %v3288, %v3284
    %v4081 = vpack.c.b16 %v3289, %v3285
    %v4082 = vpack.c.b16 %v3290, %v3286
    %v4083 = vpack.c.b16 %v3291, %v3287
    %v4084 = vpack.c.b16 %v3296, %v3292
    %v4085 = vpack.c.b16 %v3297, %v3293
    %v4086 = vpack.c.b16 %v3298, %v3294
    %v4087 = vpack.c.b16 %v3299, %v3295
    %v4088 = vpack.c.b16 %v3304, %v3300
    %v4089 = vpack.c.b16 %v3305, %v3301
    %v4090 = vpack.c.b16 %v3306, %v3302
    %v4091 = vpack.c.b16 %v3307, %v3303
    %v4092 = vpack.c.b16 %v3312, %v3308
    %v4093 = vpack.c.b16 %v3313, %v3309
    %v4094 = vpack.c.b16 %v3314, %v3310
    %v4095 = vpack.c.b16 %v3315, %v3311
    %v4096 = vpack.c.b16 %v3320, %v3316
    %v4097 = vpack.c.b16 %v3321, %v3317
    %v4098 = vpack.c.b16 %v3322, %v3318
    %v4099 = vpack.c.b16 %v3323, %v3319
    %v4100 = vpack.c.b16 %v3328, %v3324
    %v4101 = vpack.c.b16 %v3329, %v3325
    %v4102 = vpack.c.b16 %v3330, %v3326
    %v4103 = vpack.c.b16 %v3331, %v3327
    %v4104 = vpack.c.b16 %v3336, %v3332
    %v4105 = vpack.c.b16 %v3337, %v3333
    %v4106 = vpack.c.b16 %v3338, %v3334
    %v4107 = vpack.c.b16 %v3339, %v3335
    %4876 = vmatpush.bf16.msra.mxu0 %v3368
    %4877 = vmatpush.bf16.msra.mxu0 %v3364
    %4878 = vmatpush.bf16.msra.mxu0 %v3360
    %4879 = vmatpush.bf16.msra.mxu0 %v3356
    %4880 = vmatpush.bf16.msra.mxu0 %v3352
    %4881 = vmatpush.bf16.msra.mxu0 %v3348
    %4882 = vmatpush.bf16.msra.mxu0 %v3344
    %4883 = vmatpush.bf16.msra.mxu0 %v3340
    %4884 = vmatmul.bf16.gmra.mxu0 %v988
    %v4885 = vpop.f32.mrf.mxu0
    %v4886 = vadd.f32 %v908, %v4885
    %v4887 = vpop.f32.mrf.mxu0
    %v4888 = vadd.f32 %v908, %v4887
    %4889 = vdwg.mxu0
    %4890 = vmatpush.bf16.msra.mxu0 %v3400
    %4891 = vmatpush.bf16.msra.mxu0 %v3396
    %4892 = vmatpush.bf16.msra.mxu0 %v3392
    %4893 = vmatpush.bf16.msra.mxu0 %v3388
    %4894 = vmatpush.bf16.msra.mxu0 %v3384
    %4895 = vmatpush.bf16.msra.mxu0 %v3380
    %4896 = vmatpush.bf16.msra.mxu0 %v3376
    %4897 = vmatpush.bf16.msra.mxu0 %v3372
    %4898 = vmatmul.bf16.gmra.mxu0 %v989
    %v4899 = vpop.f32.mrf.mxu0
    %v4900 = vadd.f32 %v4886, %v4899
    %v4901 = vpop.f32.mrf.mxu0
    %v4902 = vadd.f32 %v4888, %v4901
    %4903 = vdwg.mxu0
    %4904 = vmatpush.bf16.msra.mxu0 %v3432
    %4905 = vmatpush.bf16.msra.mxu0 %v3428
    %4906 = vmatpush.bf16.msra.mxu0 %v3424
    %4907 = vmatpush.bf16.msra.mxu0 %v3420
    %4908 = vmatpush.bf16.msra.mxu0 %v3416
    %4909 = vmatpush.bf16.msra.mxu0 %v3412
    %4910 = vmatpush.bf16.msra.mxu0 %v3408
    %4911 = vmatpush.bf16.msra.mxu0 %v3404
    %4912 = vmatmul.bf16.gmra.mxu0 %v990
    %v4913 = vpop.f32.mrf.mxu0
    %v4914 = vadd.f32 %v4900, %v4913
    %v4915 = vpop.f32.mrf.mxu0
    %v4916 = vadd.f32 %v4902, %v4915
    %4917 = vdwg.mxu0
    %4918 = vmatpush.bf16.msra.mxu0 %v3464
    %4919 = vmatpush.bf16.msra.mxu0 %v3460
    %4920 = vmatpush.bf16.msra.mxu0 %v3456
    %4921 = vmatpush.bf16.msra.mxu0 %v3452
    %4922 = vmatpush.bf16.msra.mxu0 %v3448
    %4923 = vmatpush.bf16.msra.mxu0 %v3444
    %4924 = vmatpush.bf16.msra.mxu0 %v3440
    %4925 = vmatpush.bf16.msra.mxu0 %v3436
    %4926 = vmatmul.bf16.gmra.mxu0 %v991
    %v4927 = vpop.f32.mrf.mxu0
    %v4928 = vadd.f32 %v4914, %v4927
    %v4929 = vpop.f32.mrf.mxu0
    %v4930 = vadd.f32 %v4916, %v4929
    %4931 = vdwg.mxu0
    %4932 = vmatpush.bf16.msra.mxu0 %v3496
    %4933 = vmatpush.bf16.msra.mxu0 %v3492
    %4934 = vmatpush.bf16.msra.mxu0 %v3488
    %4935 = vmatpush.bf16.msra.mxu0 %v3484
    %4936 = vmatpush.bf16.msra.mxu0 %v3480
    %4937 = vmatpush.bf16.msra.mxu0 %v3476
    %4938 = vmatpush.bf16.msra.mxu0 %v3472
    %4939 = vmatpush.bf16.msra.mxu0 %v3468
    %4940 = vmatmul.bf16.gmra.mxu0 %v992
    %v4941 = vpop.f32.mrf.mxu0
    %v4942 = vadd.f32 %v4928, %v4941
    %v4943 = vpop.f32.mrf.mxu0
    %v4944 = vadd.f32 %v4930, %v4943
    %4945 = vdwg.mxu0
    %4946 = vmatpush.bf16.msra.mxu0 %v3528
    %4947 = vmatpush.bf16.msra.mxu0 %v3524
    %4948 = vmatpush.bf16.msra.mxu0 %v3520
    %4949 = vmatpush.bf16.msra.mxu0 %v3516
    %4950 = vmatpush.bf16.msra.mxu0 %v3512
    %4951 = vmatpush.bf16.msra.mxu0 %v3508
    %4952 = vmatpush.bf16.msra.mxu0 %v3504
    %4953 = vmatpush.bf16.msra.mxu0 %v3500
    %4954 = vmatmul.bf16.gmra.mxu0 %v993
    %v4955 = vpop.f32.mrf.mxu0
    %v4956 = vadd.f32 %v4942, %v4955
    %v4957 = vpop.f32.mrf.mxu0
    %v4958 = vadd.f32 %v4944, %v4957
    %4959 = vdwg.mxu0
    %4960 = vmatpush.bf16.msra.mxu0 %v3560
    %4961 = vmatpush.bf16.msra.mxu0 %v3556
    %4962 = vmatpush.bf16.msra.mxu0 %v3552
    %4963 = vmatpush.bf16.msra.mxu0 %v3548
    %4964 = vmatpush.bf16.msra.mxu0 %v3544
    %4965 = vmatpush.bf16.msra.mxu0 %v3540
    %4966 = vmatpush.bf16.msra.mxu0 %v3536
    %4967 = vmatpush.bf16.msra.mxu0 %v3532
    %4968 = vmatmul.bf16.gmra.mxu0 %v994
    %v4969 = vpop.f32.mrf.mxu0
    %v4970 = vadd.f32 %v4956, %v4969
    %v4971 = vpop.f32.mrf.mxu0
    %v4972 = vadd.f32 %v4958, %v4971
    %4973 = vdwg.mxu0
    %4974 = vmatpush.bf16.msra.mxu0 %v3592
    %4975 = vmatpush.bf16.msra.mxu0 %v3588
    %4976 = vmatpush.bf16.msra.mxu0 %v3584
    %4977 = vmatpush.bf16.msra.mxu0 %v3580
    %4978 = vmatpush.bf16.msra.mxu0 %v3576
    %4979 = vmatpush.bf16.msra.mxu0 %v3572
    %4980 = vmatpush.bf16.msra.mxu0 %v3568
    %4981 = vmatpush.bf16.msra.mxu0 %v3564
    %4982 = vmatmul.bf16.gmra.mxu0 %v995
    %v4983 = vpop.f32.mrf.mxu0
    %v4984 = vadd.f32 %v4970, %v4983
    %v4985 = vpop.f32.mrf.mxu0
    %v4986 = vadd.f32 %v4972, %v4985
    %4987 = vdwg.mxu0
    %4988 = vmatpush.bf16.msra.mxu0 %v3624
    %4989 = vmatpush.bf16.msra.mxu0 %v3620
    %4990 = vmatpush.bf16.msra.mxu0 %v3616
    %4991 = vmatpush.bf16.msra.mxu0 %v3612
    %4992 = vmatpush.bf16.msra.mxu0 %v3608
    %4993 = vmatpush.bf16.msra.mxu0 %v3604
    %4994 = vmatpush.bf16.msra.mxu0 %v3600
    %4995 = vmatpush.bf16.msra.mxu0 %v3596
    %4996 = vmatmul.bf16.gmra.mxu0 %v996
    %v4997 = vpop.f32.mrf.mxu0
    %v4998 = vadd.f32 %v4984, %v4997
    %v4999 = vpop.f32.mrf.mxu0
    %v5000 = vadd.f32 %v4986, %v4999
    %5001 = vdwg.mxu0
    %5002 = vmatpush.bf16.msra.mxu0 %v3656
    %5003 = vmatpush.bf16.msra.mxu0 %v3652
    %5004 = vmatpush.bf16.msra.mxu0 %v3648
    %5005 = vmatpush.bf16.msra.mxu0 %v3644
    %5006 = vmatpush.bf16.msra.mxu0 %v3640
    %5007 = vmatpush.bf16.msra.mxu0 %v3636
    %5008 = vmatpush.bf16.msra.mxu0 %v3632
    %5009 = vmatpush.bf16.msra.mxu0 %v3628
    %5010 = vmatmul.bf16.gmra.mxu0 %v997
    %v5011 = vpop.f32.mrf.mxu0
    %v5012 = vadd.f32 %v4998, %v5011
    %v5013 = vpop.f32.mrf.mxu0
    %v5014 = vadd.f32 %v5000, %v5013
    %5015 = vdwg.mxu0
    %5016 = vmatpush.bf16.msra.mxu0 %v3688
    %5017 = vmatpush.bf16.msra.mxu0 %v3684
    %5018 = vmatpush.bf16.msra.mxu0 %v3680
    %5019 = vmatpush.bf16.msra.mxu0 %v3676
    %5020 = vmatpush.bf16.msra.mxu0 %v3672
    %5021 = vmatpush.bf16.msra.mxu0 %v3668
    %5022 = vmatpush.bf16.msra.mxu0 %v3664
    %5023 = vmatpush.bf16.msra.mxu0 %v3660
    %5024 = vmatmul.bf16.gmra.mxu0 %v998
    %v5025 = vpop.f32.mrf.mxu0
    %v5026 = vadd.f32 %v5012, %v5025
    %v5027 = vpop.f32.mrf.mxu0
    %v5028 = vadd.f32 %v5014, %v5027
    %5029 = vdwg.mxu0
    %5030 = vmatpush.bf16.msra.mxu0 %v3720
    %5031 = vmatpush.bf16.msra.mxu0 %v3716
    %5032 = vmatpush.bf16.msra.mxu0 %v3712
    %5033 = vmatpush.bf16.msra.mxu0 %v3708
    %5034 = vmatpush.bf16.msra.mxu0 %v3704
    %5035 = vmatpush.bf16.msra.mxu0 %v3700
    %5036 = vmatpush.bf16.msra.mxu0 %v3696
    %5037 = vmatpush.bf16.msra.mxu0 %v3692
    %5038 = vmatmul.bf16.gmra.mxu0 %v999
    %v5039 = vpop.f32.mrf.mxu0
    %v5040 = vadd.f32 %v5026, %v5039
    %v5041 = vpop.f32.mrf.mxu0
    %v5042 = vadd.f32 %v5028, %v5041
    %5043 = vdwg.mxu0
    %5044 = vmatpush.bf16.msra.mxu0 %v3752
    %5045 = vmatpush.bf16.msra.mxu0 %v3748
    %5046 = vmatpush.bf16.msra.mxu0 %v3744
    %5047 = vmatpush.bf16.msra.mxu0 %v3740
    %5048 = vmatpush.bf16.msra.mxu0 %v3736
    %5049 = vmatpush.bf16.msra.mxu0 %v3732
    %5050 = vmatpush.bf16.msra.mxu0 %v3728
    %5051 = vmatpush.bf16.msra.mxu0 %v3724
    %5052 = vmatmul.bf16.gmra.mxu0 %v1000
    %v5053 = vpop.f32.mrf.mxu0
    %v5054 = vadd.f32 %v5040, %v5053
    %v5055 = vpop.f32.mrf.mxu0
    %v5056 = vadd.f32 %v5042, %v5055
    %5057 = vdwg.mxu0
    %5058 = vmatpush.bf16.msra.mxu0 %v3784
    %5059 = vmatpush.bf16.msra.mxu0 %v3780
    %5060 = vmatpush.bf16.msra.mxu0 %v3776
    %5061 = vmatpush.bf16.msra.mxu0 %v3772
    %5062 = vmatpush.bf16.msra.mxu0 %v3768
    %5063 = vmatpush.bf16.msra.mxu0 %v3764
    %5064 = vmatpush.bf16.msra.mxu0 %v3760
    %5065 = vmatpush.bf16.msra.mxu0 %v3756
    %5066 = vmatmul.bf16.gmra.mxu0 %v1001
    %v5067 = vpop.f32.mrf.mxu0
    %v5068 = vadd.f32 %v5054, %v5067
    %v5069 = vpop.f32.mrf.mxu0
    %v5070 = vadd.f32 %v5056, %v5069
    %5071 = vdwg.mxu0
    %5072 = vmatpush.bf16.msra.mxu0 %v3816
    %5073 = vmatpush.bf16.msra.mxu0 %v3812
    %5074 = vmatpush.bf16.msra.mxu0 %v3808
    %5075 = vmatpush.bf16.msra.mxu0 %v3804
    %5076 = vmatpush.bf16.msra.mxu0 %v3800
    %5077 = vmatpush.bf16.msra.mxu0 %v3796
    %5078 = vmatpush.bf16.msra.mxu0 %v3792
    %5079 = vmatpush.bf16.msra.mxu0 %v3788
    %5080 = vmatmul.bf16.gmra.mxu0 %v1002
    %v5081 = vpop.f32.mrf.mxu0
    %v5082 = vadd.f32 %v5068, %v5081
    %v5083 = vpop.f32.mrf.mxu0
    %v5084 = vadd.f32 %v5070, %v5083
    %5085 = vdwg.mxu0
    %5086 = vmatpush.bf16.msra.mxu0 %v3848
    %5087 = vmatpush.bf16.msra.mxu0 %v3844
    %5088 = vmatpush.bf16.msra.mxu0 %v3840
    %5089 = vmatpush.bf16.msra.mxu0 %v3836
    %5090 = vmatpush.bf16.msra.mxu0 %v3832
    %5091 = vmatpush.bf16.msra.mxu0 %v3828
    %5092 = vmatpush.bf16.msra.mxu0 %v3824
    %5093 = vmatpush.bf16.msra.mxu0 %v3820
    %5094 = vmatmul.bf16.gmra.mxu0 %v1003
    %v5095 = vpop.f32.mrf.mxu0
    %v5096 = vadd.f32 %v5082, %v5095
    %v5097 = vpop.f32.mrf.mxu0
    %v5098 = vadd.f32 %v5084, %v5097
    %5099 = vdwg.mxu0
    %5100 = vmatpush.bf16.msra.mxu0 %v3880
    %5101 = vmatpush.bf16.msra.mxu0 %v3876
    %5102 = vmatpush.bf16.msra.mxu0 %v3872
    %5103 = vmatpush.bf16.msra.mxu0 %v3868
    %5104 = vmatpush.bf16.msra.mxu0 %v3864
    %5105 = vmatpush.bf16.msra.mxu0 %v3860
    %5106 = vmatpush.bf16.msra.mxu0 %v3856
    %5107 = vmatpush.bf16.msra.mxu0 %v3852
    %5108 = vmatmul.bf16.gmra.mxu0 %v1004
    %v5109 = vpop.f32.mrf.mxu0
    %v5110 = vadd.f32 %v5096, %v5109
    %v5111 = vpop.f32.mrf.mxu0
    %v5112 = vadd.f32 %v5098, %v5111
    %5113 = vdwg.mxu0
    %5114 = vmatpush.bf16.msra.mxu0 %v3912
    %5115 = vmatpush.bf16.msra.mxu0 %v3908
    %5116 = vmatpush.bf16.msra.mxu0 %v3904
    %5117 = vmatpush.bf16.msra.mxu0 %v3900
    %5118 = vmatpush.bf16.msra.mxu0 %v3896
    %5119 = vmatpush.bf16.msra.mxu0 %v3892
    %5120 = vmatpush.bf16.msra.mxu0 %v3888
    %5121 = vmatpush.bf16.msra.mxu0 %v3884
    %5122 = vmatmul.bf16.gmra.mxu0 %v1005
    %v5123 = vpop.f32.mrf.mxu0
    %v5124 = vadd.f32 %v5110, %v5123
    %v5125 = vpop.f32.mrf.mxu0
    %v5126 = vadd.f32 %v5112, %v5125
    %5127 = vdwg.mxu0
    %5128 = vmatpush.bf16.msra.mxu0 %v3944
    %5129 = vmatpush.bf16.msra.mxu0 %v3940
    %5130 = vmatpush.bf16.msra.mxu0 %v3936
    %5131 = vmatpush.bf16.msra.mxu0 %v3932
    %5132 = vmatpush.bf16.msra.mxu0 %v3928
    %5133 = vmatpush.bf16.msra.mxu0 %v3924
    %5134 = vmatpush.bf16.msra.mxu0 %v3920
    %5135 = vmatpush.bf16.msra.mxu0 %v3916
    %5136 = vmatmul.bf16.gmra.mxu0 %v1006
    %v5137 = vpop.f32.mrf.mxu0
    %v5138 = vadd.f32 %v5124, %v5137
    %v5139 = vpop.f32.mrf.mxu0
    %v5140 = vadd.f32 %v5126, %v5139
    %5141 = vdwg.mxu0
    %5142 = vmatpush.bf16.msra.mxu0 %v3976
    %5143 = vmatpush.bf16.msra.mxu0 %v3972
    %5144 = vmatpush.bf16.msra.mxu0 %v3968
    %5145 = vmatpush.bf16.msra.mxu0 %v3964
    %5146 = vmatpush.bf16.msra.mxu0 %v3960
    %5147 = vmatpush.bf16.msra.mxu0 %v3956
    %5148 = vmatpush.bf16.msra.mxu0 %v3952
    %5149 = vmatpush.bf16.msra.mxu0 %v3948
    %5150 = vmatmul.bf16.gmra.mxu0 %v1007
    %v5151 = vpop.f32.mrf.mxu0
    %v5152 = vadd.f32 %v5138, %v5151
    %v5153 = vpop.f32.mrf.mxu0
    %v5154 = vadd.f32 %v5140, %v5153
    %5155 = vdwg.mxu0
    %5156 = vmatpush.bf16.msra.mxu0 %v4008
    %5157 = vmatpush.bf16.msra.mxu0 %v4004
    %5158 = vmatpush.bf16.msra.mxu0 %v4000
    %5159 = vmatpush.bf16.msra.mxu0 %v3996
    %5160 = vmatpush.bf16.msra.mxu0 %v3992
    %5161 = vmatpush.bf16.msra.mxu0 %v3988
    %5162 = vmatpush.bf16.msra.mxu0 %v3984
    %5163 = vmatpush.bf16.msra.mxu0 %v3980
    %5164 = vmatmul.bf16.gmra.mxu0 %v1008
    %v5165 = vpop.f32.mrf.mxu0
    %v5166 = vadd.f32 %v5152, %v5165
    %v5167 = vpop.f32.mrf.mxu0
    %v5168 = vadd.f32 %v5154, %v5167
    %5169 = vdwg.mxu0
    %5170 = vmatpush.bf16.msra.mxu0 %v4040
    %5171 = vmatpush.bf16.msra.mxu0 %v4036
    %5172 = vmatpush.bf16.msra.mxu0 %v4032
    %5173 = vmatpush.bf16.msra.mxu0 %v4028
    %5174 = vmatpush.bf16.msra.mxu0 %v4024
    %5175 = vmatpush.bf16.msra.mxu0 %v4020
    %5176 = vmatpush.bf16.msra.mxu0 %v4016
    %5177 = vmatpush.bf16.msra.mxu0 %v4012
    %5178 = vmatmul.bf16.gmra.mxu0 %v1009
    %v5179 = vpop.f32.mrf.mxu0
    %v5180 = vadd.f32 %v5166, %v5179
    %v5181 = vpop.f32.mrf.mxu0
    %v5182 = vadd.f32 %v5168, %v5181
    %5183 = vdwg.mxu0
    %5184 = vmatpush.bf16.msra.mxu0 %v4072
    %5185 = vmatpush.bf16.msra.mxu0 %v4068
    %5186 = vmatpush.bf16.msra.mxu0 %v4064
    %5187 = vmatpush.bf16.msra.mxu0 %v4060
    %5188 = vmatpush.bf16.msra.mxu0 %v4056
    %5189 = vmatpush.bf16.msra.mxu0 %v4052
    %5190 = vmatpush.bf16.msra.mxu0 %v4048
    %5191 = vmatpush.bf16.msra.mxu0 %v4044
    %5192 = vmatmul.bf16.gmra.mxu0 %v1010
    %v5193 = vpop.f32.mrf.mxu0
    %v5194 = vadd.f32 %v5180, %v5193
    %v5195 = vpop.f32.mrf.mxu0
    %v5196 = vadd.f32 %v5182, %v5195
    %5197 = vdwg.mxu0
    %5198 = vmatpush.bf16.msra.mxu0 %v4104
    %5199 = vmatpush.bf16.msra.mxu0 %v4100
    %5200 = vmatpush.bf16.msra.mxu0 %v4096
    %5201 = vmatpush.bf16.msra.mxu0 %v4092
    %5202 = vmatpush.bf16.msra.mxu0 %v4088
    %5203 = vmatpush.bf16.msra.mxu0 %v4084
    %5204 = vmatpush.bf16.msra.mxu0 %v4080
    %5205 = vmatpush.bf16.msra.mxu0 %v4076
    %5206 = vmatmul.bf16.gmra.mxu0 %v1011
    %v5207 = vpop.f32.mrf.mxu0
    %v5208 = vadd.f32 %v5194, %v5207
    %v5209 = vpop.f32.mrf.mxu0
    %v5210 = vadd.f32 %v5196, %v5209
    %5211 = vdwg.mxu0
    %5212 = vmatpush.bf16.msra.mxu0 %v3369
    %5213 = vmatpush.bf16.msra.mxu0 %v3365
    %5214 = vmatpush.bf16.msra.mxu0 %v3361
    %5215 = vmatpush.bf16.msra.mxu0 %v3357
    %5216 = vmatpush.bf16.msra.mxu0 %v3353
    %5217 = vmatpush.bf16.msra.mxu0 %v3349
    %5218 = vmatpush.bf16.msra.mxu0 %v3345
    %5219 = vmatpush.bf16.msra.mxu0 %v3341
    %5220 = vmatmul.bf16.gmra.mxu0 %v988
    %v5221 = vpop.f32.mrf.mxu0
    %v5222 = vadd.f32 %v909, %v5221
    %v5223 = vpop.f32.mrf.mxu0
    %v5224 = vadd.f32 %v909, %v5223
    %5225 = vdwg.mxu0
    %5226 = vmatpush.bf16.msra.mxu0 %v3401
    %5227 = vmatpush.bf16.msra.mxu0 %v3397
    %5228 = vmatpush.bf16.msra.mxu0 %v3393
    %5229 = vmatpush.bf16.msra.mxu0 %v3389
    %5230 = vmatpush.bf16.msra.mxu0 %v3385
    %5231 = vmatpush.bf16.msra.mxu0 %v3381
    %5232 = vmatpush.bf16.msra.mxu0 %v3377
    %5233 = vmatpush.bf16.msra.mxu0 %v3373
    %5234 = vmatmul.bf16.gmra.mxu0 %v989
    %v5235 = vpop.f32.mrf.mxu0
    %v5236 = vadd.f32 %v5222, %v5235
    %v5237 = vpop.f32.mrf.mxu0
    %v5238 = vadd.f32 %v5224, %v5237
    %5239 = vdwg.mxu0
    %5240 = vmatpush.bf16.msra.mxu0 %v3433
    %5241 = vmatpush.bf16.msra.mxu0 %v3429
    %5242 = vmatpush.bf16.msra.mxu0 %v3425
    %5243 = vmatpush.bf16.msra.mxu0 %v3421
    %5244 = vmatpush.bf16.msra.mxu0 %v3417
    %5245 = vmatpush.bf16.msra.mxu0 %v3413
    %5246 = vmatpush.bf16.msra.mxu0 %v3409
    %5247 = vmatpush.bf16.msra.mxu0 %v3405
    %5248 = vmatmul.bf16.gmra.mxu0 %v990
    %v5249 = vpop.f32.mrf.mxu0
    %v5250 = vadd.f32 %v5236, %v5249
    %v5251 = vpop.f32.mrf.mxu0
    %v5252 = vadd.f32 %v5238, %v5251
    %5253 = vdwg.mxu0
    %5254 = vmatpush.bf16.msra.mxu0 %v3465
    %5255 = vmatpush.bf16.msra.mxu0 %v3461
    %5256 = vmatpush.bf16.msra.mxu0 %v3457
    %5257 = vmatpush.bf16.msra.mxu0 %v3453
    %5258 = vmatpush.bf16.msra.mxu0 %v3449
    %5259 = vmatpush.bf16.msra.mxu0 %v3445
    %5260 = vmatpush.bf16.msra.mxu0 %v3441
    %5261 = vmatpush.bf16.msra.mxu0 %v3437
    %5262 = vmatmul.bf16.gmra.mxu0 %v991
    %v5263 = vpop.f32.mrf.mxu0
    %v5264 = vadd.f32 %v5250, %v5263
    %v5265 = vpop.f32.mrf.mxu0
    %v5266 = vadd.f32 %v5252, %v5265
    %5267 = vdwg.mxu0
    %5268 = vmatpush.bf16.msra.mxu0 %v3497
    %5269 = vmatpush.bf16.msra.mxu0 %v3493
    %5270 = vmatpush.bf16.msra.mxu0 %v3489
    %5271 = vmatpush.bf16.msra.mxu0 %v3485
    %5272 = vmatpush.bf16.msra.mxu0 %v3481
    %5273 = vmatpush.bf16.msra.mxu0 %v3477
    %5274 = vmatpush.bf16.msra.mxu0 %v3473
    %5275 = vmatpush.bf16.msra.mxu0 %v3469
    %5276 = vmatmul.bf16.gmra.mxu0 %v992
    %v5277 = vpop.f32.mrf.mxu0
    %v5278 = vadd.f32 %v5264, %v5277
    %v5279 = vpop.f32.mrf.mxu0
    %v5280 = vadd.f32 %v5266, %v5279
    %5281 = vdwg.mxu0
    %5282 = vmatpush.bf16.msra.mxu0 %v3529
    %5283 = vmatpush.bf16.msra.mxu0 %v3525
    %5284 = vmatpush.bf16.msra.mxu0 %v3521
    %5285 = vmatpush.bf16.msra.mxu0 %v3517
    %5286 = vmatpush.bf16.msra.mxu0 %v3513
    %5287 = vmatpush.bf16.msra.mxu0 %v3509
    %5288 = vmatpush.bf16.msra.mxu0 %v3505
    %5289 = vmatpush.bf16.msra.mxu0 %v3501
    %5290 = vmatmul.bf16.gmra.mxu0 %v993
    %v5291 = vpop.f32.mrf.mxu0
    %v5292 = vadd.f32 %v5278, %v5291
    %v5293 = vpop.f32.mrf.mxu0
    %v5294 = vadd.f32 %v5280, %v5293
    %5295 = vdwg.mxu0
    %5296 = vmatpush.bf16.msra.mxu0 %v3561
    %5297 = vmatpush.bf16.msra.mxu0 %v3557
    %5298 = vmatpush.bf16.msra.mxu0 %v3553
    %5299 = vmatpush.bf16.msra.mxu0 %v3549
    %5300 = vmatpush.bf16.msra.mxu0 %v3545
    %5301 = vmatpush.bf16.msra.mxu0 %v3541
    %5302 = vmatpush.bf16.msra.mxu0 %v3537
    %5303 = vmatpush.bf16.msra.mxu0 %v3533
    %5304 = vmatmul.bf16.gmra.mxu0 %v994
    %v5305 = vpop.f32.mrf.mxu0
    %v5306 = vadd.f32 %v5292, %v5305
    %v5307 = vpop.f32.mrf.mxu0
    %v5308 = vadd.f32 %v5294, %v5307
    %5309 = vdwg.mxu0
    %5310 = vmatpush.bf16.msra.mxu0 %v3593
    %5311 = vmatpush.bf16.msra.mxu0 %v3589
    %5312 = vmatpush.bf16.msra.mxu0 %v3585
    %5313 = vmatpush.bf16.msra.mxu0 %v3581
    %5314 = vmatpush.bf16.msra.mxu0 %v3577
    %5315 = vmatpush.bf16.msra.mxu0 %v3573
    %5316 = vmatpush.bf16.msra.mxu0 %v3569
    %5317 = vmatpush.bf16.msra.mxu0 %v3565
    %5318 = vmatmul.bf16.gmra.mxu0 %v995
    %v5319 = vpop.f32.mrf.mxu0
    %v5320 = vadd.f32 %v5306, %v5319
    %v5321 = vpop.f32.mrf.mxu0
    %v5322 = vadd.f32 %v5308, %v5321
    %5323 = vdwg.mxu0
    %5324 = vmatpush.bf16.msra.mxu0 %v3625
    %5325 = vmatpush.bf16.msra.mxu0 %v3621
    %5326 = vmatpush.bf16.msra.mxu0 %v3617
    %5327 = vmatpush.bf16.msra.mxu0 %v3613
    %5328 = vmatpush.bf16.msra.mxu0 %v3609
    %5329 = vmatpush.bf16.msra.mxu0 %v3605
    %5330 = vmatpush.bf16.msra.mxu0 %v3601
    %5331 = vmatpush.bf16.msra.mxu0 %v3597
    %5332 = vmatmul.bf16.gmra.mxu0 %v996
    %v5333 = vpop.f32.mrf.mxu0
    %v5334 = vadd.f32 %v5320, %v5333
    %v5335 = vpop.f32.mrf.mxu0
    %v5336 = vadd.f32 %v5322, %v5335
    %5337 = vdwg.mxu0
    %5338 = vmatpush.bf16.msra.mxu0 %v3657
    %5339 = vmatpush.bf16.msra.mxu0 %v3653
    %5340 = vmatpush.bf16.msra.mxu0 %v3649
    %5341 = vmatpush.bf16.msra.mxu0 %v3645
    %5342 = vmatpush.bf16.msra.mxu0 %v3641
    %5343 = vmatpush.bf16.msra.mxu0 %v3637
    %5344 = vmatpush.bf16.msra.mxu0 %v3633
    %5345 = vmatpush.bf16.msra.mxu0 %v3629
    %5346 = vmatmul.bf16.gmra.mxu0 %v997
    %v5347 = vpop.f32.mrf.mxu0
    %v5348 = vadd.f32 %v5334, %v5347
    %v5349 = vpop.f32.mrf.mxu0
    %v5350 = vadd.f32 %v5336, %v5349
    %5351 = vdwg.mxu0
    %5352 = vmatpush.bf16.msra.mxu0 %v3689
    %5353 = vmatpush.bf16.msra.mxu0 %v3685
    %5354 = vmatpush.bf16.msra.mxu0 %v3681
    %5355 = vmatpush.bf16.msra.mxu0 %v3677
    %5356 = vmatpush.bf16.msra.mxu0 %v3673
    %5357 = vmatpush.bf16.msra.mxu0 %v3669
    %5358 = vmatpush.bf16.msra.mxu0 %v3665
    %5359 = vmatpush.bf16.msra.mxu0 %v3661
    %5360 = vmatmul.bf16.gmra.mxu0 %v998
    %v5361 = vpop.f32.mrf.mxu0
    %v5362 = vadd.f32 %v5348, %v5361
    %v5363 = vpop.f32.mrf.mxu0
    %v5364 = vadd.f32 %v5350, %v5363
    %5365 = vdwg.mxu0
    %5366 = vmatpush.bf16.msra.mxu0 %v3721
    %5367 = vmatpush.bf16.msra.mxu0 %v3717
    %5368 = vmatpush.bf16.msra.mxu0 %v3713
    %5369 = vmatpush.bf16.msra.mxu0 %v3709
    %5370 = vmatpush.bf16.msra.mxu0 %v3705
    %5371 = vmatpush.bf16.msra.mxu0 %v3701
    %5372 = vmatpush.bf16.msra.mxu0 %v3697
    %5373 = vmatpush.bf16.msra.mxu0 %v3693
    %5374 = vmatmul.bf16.gmra.mxu0 %v999
    %v5375 = vpop.f32.mrf.mxu0
    %v5376 = vadd.f32 %v5362, %v5375
    %v5377 = vpop.f32.mrf.mxu0
    %v5378 = vadd.f32 %v5364, %v5377
    %5379 = vdwg.mxu0
    %5380 = vmatpush.bf16.msra.mxu0 %v3753
    %5381 = vmatpush.bf16.msra.mxu0 %v3749
    %5382 = vmatpush.bf16.msra.mxu0 %v3745
    %5383 = vmatpush.bf16.msra.mxu0 %v3741
    %5384 = vmatpush.bf16.msra.mxu0 %v3737
    %5385 = vmatpush.bf16.msra.mxu0 %v3733
    %5386 = vmatpush.bf16.msra.mxu0 %v3729
    %5387 = vmatpush.bf16.msra.mxu0 %v3725
    %5388 = vmatmul.bf16.gmra.mxu0 %v1000
    %v5389 = vpop.f32.mrf.mxu0
    %v5390 = vadd.f32 %v5376, %v5389
    %v5391 = vpop.f32.mrf.mxu0
    %v5392 = vadd.f32 %v5378, %v5391
    %5393 = vdwg.mxu0
    %5394 = vmatpush.bf16.msra.mxu0 %v3785
    %5395 = vmatpush.bf16.msra.mxu0 %v3781
    %5396 = vmatpush.bf16.msra.mxu0 %v3777
    %5397 = vmatpush.bf16.msra.mxu0 %v3773
    %5398 = vmatpush.bf16.msra.mxu0 %v3769
    %5399 = vmatpush.bf16.msra.mxu0 %v3765
    %5400 = vmatpush.bf16.msra.mxu0 %v3761
    %5401 = vmatpush.bf16.msra.mxu0 %v3757
    %5402 = vmatmul.bf16.gmra.mxu0 %v1001
    %v5403 = vpop.f32.mrf.mxu0
    %v5404 = vadd.f32 %v5390, %v5403
    %v5405 = vpop.f32.mrf.mxu0
    %v5406 = vadd.f32 %v5392, %v5405
    %5407 = vdwg.mxu0
    %5408 = vmatpush.bf16.msra.mxu0 %v3817
    %5409 = vmatpush.bf16.msra.mxu0 %v3813
    %5410 = vmatpush.bf16.msra.mxu0 %v3809
    %5411 = vmatpush.bf16.msra.mxu0 %v3805
    %5412 = vmatpush.bf16.msra.mxu0 %v3801
    %5413 = vmatpush.bf16.msra.mxu0 %v3797
    %5414 = vmatpush.bf16.msra.mxu0 %v3793
    %5415 = vmatpush.bf16.msra.mxu0 %v3789
    %5416 = vmatmul.bf16.gmra.mxu0 %v1002
    %v5417 = vpop.f32.mrf.mxu0
    %v5418 = vadd.f32 %v5404, %v5417
    %v5419 = vpop.f32.mrf.mxu0
    %v5420 = vadd.f32 %v5406, %v5419
    %5421 = vdwg.mxu0
    %5422 = vmatpush.bf16.msra.mxu0 %v3849
    %5423 = vmatpush.bf16.msra.mxu0 %v3845
    %5424 = vmatpush.bf16.msra.mxu0 %v3841
    %5425 = vmatpush.bf16.msra.mxu0 %v3837
    %5426 = vmatpush.bf16.msra.mxu0 %v3833
    %5427 = vmatpush.bf16.msra.mxu0 %v3829
    %5428 = vmatpush.bf16.msra.mxu0 %v3825
    %5429 = vmatpush.bf16.msra.mxu0 %v3821
    %5430 = vmatmul.bf16.gmra.mxu0 %v1003
    %v5431 = vpop.f32.mrf.mxu0
    %v5432 = vadd.f32 %v5418, %v5431
    %v5433 = vpop.f32.mrf.mxu0
    %v5434 = vadd.f32 %v5420, %v5433
    %5435 = vdwg.mxu0
    %5436 = vmatpush.bf16.msra.mxu0 %v3881
    %5437 = vmatpush.bf16.msra.mxu0 %v3877
    %5438 = vmatpush.bf16.msra.mxu0 %v3873
    %5439 = vmatpush.bf16.msra.mxu0 %v3869
    %5440 = vmatpush.bf16.msra.mxu0 %v3865
    %5441 = vmatpush.bf16.msra.mxu0 %v3861
    %5442 = vmatpush.bf16.msra.mxu0 %v3857
    %5443 = vmatpush.bf16.msra.mxu0 %v3853
    %5444 = vmatmul.bf16.gmra.mxu0 %v1004
    %v5445 = vpop.f32.mrf.mxu0
    %v5446 = vadd.f32 %v5432, %v5445
    %v5447 = vpop.f32.mrf.mxu0
    %v5448 = vadd.f32 %v5434, %v5447
    %5449 = vdwg.mxu0
    %5450 = vmatpush.bf16.msra.mxu0 %v3913
    %5451 = vmatpush.bf16.msra.mxu0 %v3909
    %5452 = vmatpush.bf16.msra.mxu0 %v3905
    %5453 = vmatpush.bf16.msra.mxu0 %v3901
    %5454 = vmatpush.bf16.msra.mxu0 %v3897
    %5455 = vmatpush.bf16.msra.mxu0 %v3893
    %5456 = vmatpush.bf16.msra.mxu0 %v3889
    %5457 = vmatpush.bf16.msra.mxu0 %v3885
    %5458 = vmatmul.bf16.gmra.mxu0 %v1005
    %v5459 = vpop.f32.mrf.mxu0
    %v5460 = vadd.f32 %v5446, %v5459
    %v5461 = vpop.f32.mrf.mxu0
    %v5462 = vadd.f32 %v5448, %v5461
    %5463 = vdwg.mxu0
    %5464 = vmatpush.bf16.msra.mxu0 %v3945
    %5465 = vmatpush.bf16.msra.mxu0 %v3941
    %5466 = vmatpush.bf16.msra.mxu0 %v3937
    %5467 = vmatpush.bf16.msra.mxu0 %v3933
    %5468 = vmatpush.bf16.msra.mxu0 %v3929
    %5469 = vmatpush.bf16.msra.mxu0 %v3925
    %5470 = vmatpush.bf16.msra.mxu0 %v3921
    %5471 = vmatpush.bf16.msra.mxu0 %v3917
    %5472 = vmatmul.bf16.gmra.mxu0 %v1006
    %v5473 = vpop.f32.mrf.mxu0
    %v5474 = vadd.f32 %v5460, %v5473
    %v5475 = vpop.f32.mrf.mxu0
    %v5476 = vadd.f32 %v5462, %v5475
    %5477 = vdwg.mxu0
    %5478 = vmatpush.bf16.msra.mxu0 %v3977
    %5479 = vmatpush.bf16.msra.mxu0 %v3973
    %5480 = vmatpush.bf16.msra.mxu0 %v3969
    %5481 = vmatpush.bf16.msra.mxu0 %v3965
    %5482 = vmatpush.bf16.msra.mxu0 %v3961
    %5483 = vmatpush.bf16.msra.mxu0 %v3957
    %5484 = vmatpush.bf16.msra.mxu0 %v3953
    %5485 = vmatpush.bf16.msra.mxu0 %v3949
    %5486 = vmatmul.bf16.gmra.mxu0 %v1007
    %v5487 = vpop.f32.mrf.mxu0
    %v5488 = vadd.f32 %v5474, %v5487
    %v5489 = vpop.f32.mrf.mxu0
    %v5490 = vadd.f32 %v5476, %v5489
    %5491 = vdwg.mxu0
    %5492 = vmatpush.bf16.msra.mxu0 %v4009
    %5493 = vmatpush.bf16.msra.mxu0 %v4005
    %5494 = vmatpush.bf16.msra.mxu0 %v4001
    %5495 = vmatpush.bf16.msra.mxu0 %v3997
    %5496 = vmatpush.bf16.msra.mxu0 %v3993
    %5497 = vmatpush.bf16.msra.mxu0 %v3989
    %5498 = vmatpush.bf16.msra.mxu0 %v3985
    %5499 = vmatpush.bf16.msra.mxu0 %v3981
    %5500 = vmatmul.bf16.gmra.mxu0 %v1008
    %v5501 = vpop.f32.mrf.mxu0
    %v5502 = vadd.f32 %v5488, %v5501
    %v5503 = vpop.f32.mrf.mxu0
    %v5504 = vadd.f32 %v5490, %v5503
    %5505 = vdwg.mxu0
    %5506 = vmatpush.bf16.msra.mxu0 %v4041
    %5507 = vmatpush.bf16.msra.mxu0 %v4037
    %5508 = vmatpush.bf16.msra.mxu0 %v4033
    %5509 = vmatpush.bf16.msra.mxu0 %v4029
    %5510 = vmatpush.bf16.msra.mxu0 %v4025
    %5511 = vmatpush.bf16.msra.mxu0 %v4021
    %5512 = vmatpush.bf16.msra.mxu0 %v4017
    %5513 = vmatpush.bf16.msra.mxu0 %v4013
    %5514 = vmatmul.bf16.gmra.mxu0 %v1009
    %v5515 = vpop.f32.mrf.mxu0
    %v5516 = vadd.f32 %v5502, %v5515
    %v5517 = vpop.f32.mrf.mxu0
    %v5518 = vadd.f32 %v5504, %v5517
    %5519 = vdwg.mxu0
    %5520 = vmatpush.bf16.msra.mxu0 %v4073
    %5521 = vmatpush.bf16.msra.mxu0 %v4069
    %5522 = vmatpush.bf16.msra.mxu0 %v4065
    %5523 = vmatpush.bf16.msra.mxu0 %v4061
    %5524 = vmatpush.bf16.msra.mxu0 %v4057
    %5525 = vmatpush.bf16.msra.mxu0 %v4053
    %5526 = vmatpush.bf16.msra.mxu0 %v4049
    %5527 = vmatpush.bf16.msra.mxu0 %v4045
    %5528 = vmatmul.bf16.gmra.mxu0 %v1010
    %v5529 = vpop.f32.mrf.mxu0
    %v5530 = vadd.f32 %v5516, %v5529
    %v5531 = vpop.f32.mrf.mxu0
    %v5532 = vadd.f32 %v5518, %v5531
    %5533 = vdwg.mxu0
    %5534 = vmatpush.bf16.msra.mxu0 %v4105
    %5535 = vmatpush.bf16.msra.mxu0 %v4101
    %5536 = vmatpush.bf16.msra.mxu0 %v4097
    %5537 = vmatpush.bf16.msra.mxu0 %v4093
    %5538 = vmatpush.bf16.msra.mxu0 %v4089
    %5539 = vmatpush.bf16.msra.mxu0 %v4085
    %5540 = vmatpush.bf16.msra.mxu0 %v4081
    %5541 = vmatpush.bf16.msra.mxu0 %v4077
    %5542 = vmatmul.bf16.gmra.mxu0 %v1011
    %v5543 = vpop.f32.mrf.mxu0
    %v5544 = vadd.f32 %v5530, %v5543
    %v5545 = vpop.f32.mrf.mxu0
    %v5546 = vadd.f32 %v5532, %v5545
    %5547 = vdwg.mxu0
    %5548 = vmatpush.bf16.msra.mxu0 %v3370
    %5549 = vmatpush.bf16.msra.mxu0 %v3366
    %5550 = vmatpush.bf16.msra.mxu0 %v3362
    %5551 = vmatpush.bf16.msra.mxu0 %v3358
    %5552 = vmatpush.bf16.msra.mxu0 %v3354
    %5553 = vmatpush.bf16.msra.mxu0 %v3350
    %5554 = vmatpush.bf16.msra.mxu0 %v3346
    %5555 = vmatpush.bf16.msra.mxu0 %v3342
    %5556 = vmatmul.bf16.gmra.mxu0 %v988
    %v5557 = vpop.f32.mrf.mxu0
    %v5558 = vadd.f32 %v910, %v5557
    %v5559 = vpop.f32.mrf.mxu0
    %v5560 = vadd.f32 %v910, %v5559
    %5561 = vdwg.mxu0
    %5562 = vmatpush.bf16.msra.mxu0 %v3402
    %5563 = vmatpush.bf16.msra.mxu0 %v3398
    %5564 = vmatpush.bf16.msra.mxu0 %v3394
    %5565 = vmatpush.bf16.msra.mxu0 %v3390
    %5566 = vmatpush.bf16.msra.mxu0 %v3386
    %5567 = vmatpush.bf16.msra.mxu0 %v3382
    %5568 = vmatpush.bf16.msra.mxu0 %v3378
    %5569 = vmatpush.bf16.msra.mxu0 %v3374
    %5570 = vmatmul.bf16.gmra.mxu0 %v989
    %v5571 = vpop.f32.mrf.mxu0
    %v5572 = vadd.f32 %v5558, %v5571
    %v5573 = vpop.f32.mrf.mxu0
    %v5574 = vadd.f32 %v5560, %v5573
    %5575 = vdwg.mxu0
    %5576 = vmatpush.bf16.msra.mxu0 %v3434
    %5577 = vmatpush.bf16.msra.mxu0 %v3430
    %5578 = vmatpush.bf16.msra.mxu0 %v3426
    %5579 = vmatpush.bf16.msra.mxu0 %v3422
    %5580 = vmatpush.bf16.msra.mxu0 %v3418
    %5581 = vmatpush.bf16.msra.mxu0 %v3414
    %5582 = vmatpush.bf16.msra.mxu0 %v3410
    %5583 = vmatpush.bf16.msra.mxu0 %v3406
    %5584 = vmatmul.bf16.gmra.mxu0 %v990
    %v5585 = vpop.f32.mrf.mxu0
    %v5586 = vadd.f32 %v5572, %v5585
    %v5587 = vpop.f32.mrf.mxu0
    %v5588 = vadd.f32 %v5574, %v5587
    %5589 = vdwg.mxu0
    %5590 = vmatpush.bf16.msra.mxu0 %v3466
    %5591 = vmatpush.bf16.msra.mxu0 %v3462
    %5592 = vmatpush.bf16.msra.mxu0 %v3458
    %5593 = vmatpush.bf16.msra.mxu0 %v3454
    %5594 = vmatpush.bf16.msra.mxu0 %v3450
    %5595 = vmatpush.bf16.msra.mxu0 %v3446
    %5596 = vmatpush.bf16.msra.mxu0 %v3442
    %5597 = vmatpush.bf16.msra.mxu0 %v3438
    %5598 = vmatmul.bf16.gmra.mxu0 %v991
    %v5599 = vpop.f32.mrf.mxu0
    %v5600 = vadd.f32 %v5586, %v5599
    %v5601 = vpop.f32.mrf.mxu0
    %v5602 = vadd.f32 %v5588, %v5601
    %5603 = vdwg.mxu0
    %5604 = vmatpush.bf16.msra.mxu0 %v3498
    %5605 = vmatpush.bf16.msra.mxu0 %v3494
    %5606 = vmatpush.bf16.msra.mxu0 %v3490
    %5607 = vmatpush.bf16.msra.mxu0 %v3486
    %5608 = vmatpush.bf16.msra.mxu0 %v3482
    %5609 = vmatpush.bf16.msra.mxu0 %v3478
    %5610 = vmatpush.bf16.msra.mxu0 %v3474
    %5611 = vmatpush.bf16.msra.mxu0 %v3470
    %5612 = vmatmul.bf16.gmra.mxu0 %v992
    %v5613 = vpop.f32.mrf.mxu0
    %v5614 = vadd.f32 %v5600, %v5613
    %v5615 = vpop.f32.mrf.mxu0
    %v5616 = vadd.f32 %v5602, %v5615
    %5617 = vdwg.mxu0
    %5618 = vmatpush.bf16.msra.mxu0 %v3530
    %5619 = vmatpush.bf16.msra.mxu0 %v3526
    %5620 = vmatpush.bf16.msra.mxu0 %v3522
    %5621 = vmatpush.bf16.msra.mxu0 %v3518
    %5622 = vmatpush.bf16.msra.mxu0 %v3514
    %5623 = vmatpush.bf16.msra.mxu0 %v3510
    %5624 = vmatpush.bf16.msra.mxu0 %v3506
    %5625 = vmatpush.bf16.msra.mxu0 %v3502
    %5626 = vmatmul.bf16.gmra.mxu0 %v993
    %v5627 = vpop.f32.mrf.mxu0
    %v5628 = vadd.f32 %v5614, %v5627
    %v5629 = vpop.f32.mrf.mxu0
    %v5630 = vadd.f32 %v5616, %v5629
    %5631 = vdwg.mxu0
    %5632 = vmatpush.bf16.msra.mxu0 %v3562
    %5633 = vmatpush.bf16.msra.mxu0 %v3558
    %5634 = vmatpush.bf16.msra.mxu0 %v3554
    %5635 = vmatpush.bf16.msra.mxu0 %v3550
    %5636 = vmatpush.bf16.msra.mxu0 %v3546
    %5637 = vmatpush.bf16.msra.mxu0 %v3542
    %5638 = vmatpush.bf16.msra.mxu0 %v3538
    %5639 = vmatpush.bf16.msra.mxu0 %v3534
    %5640 = vmatmul.bf16.gmra.mxu0 %v994
    %v5641 = vpop.f32.mrf.mxu0
    %v5642 = vadd.f32 %v5628, %v5641
    %v5643 = vpop.f32.mrf.mxu0
    %v5644 = vadd.f32 %v5630, %v5643
    %5645 = vdwg.mxu0
    %5646 = vmatpush.bf16.msra.mxu0 %v3594
    %5647 = vmatpush.bf16.msra.mxu0 %v3590
    %5648 = vmatpush.bf16.msra.mxu0 %v3586
    %5649 = vmatpush.bf16.msra.mxu0 %v3582
    %5650 = vmatpush.bf16.msra.mxu0 %v3578
    %5651 = vmatpush.bf16.msra.mxu0 %v3574
    %5652 = vmatpush.bf16.msra.mxu0 %v3570
    %5653 = vmatpush.bf16.msra.mxu0 %v3566
    %5654 = vmatmul.bf16.gmra.mxu0 %v995
    %v5655 = vpop.f32.mrf.mxu0
    %v5656 = vadd.f32 %v5642, %v5655
    %v5657 = vpop.f32.mrf.mxu0
    %v5658 = vadd.f32 %v5644, %v5657
    %5659 = vdwg.mxu0
    %5660 = vmatpush.bf16.msra.mxu0 %v3626
    %5661 = vmatpush.bf16.msra.mxu0 %v3622
    %5662 = vmatpush.bf16.msra.mxu0 %v3618
    %5663 = vmatpush.bf16.msra.mxu0 %v3614
    %5664 = vmatpush.bf16.msra.mxu0 %v3610
    %5665 = vmatpush.bf16.msra.mxu0 %v3606
    %5666 = vmatpush.bf16.msra.mxu0 %v3602
    %5667 = vmatpush.bf16.msra.mxu0 %v3598
    %5668 = vmatmul.bf16.gmra.mxu0 %v996
    %v5669 = vpop.f32.mrf.mxu0
    %v5670 = vadd.f32 %v5656, %v5669
    %v5671 = vpop.f32.mrf.mxu0
    %v5672 = vadd.f32 %v5658, %v5671
    %5673 = vdwg.mxu0
    %5674 = vmatpush.bf16.msra.mxu0 %v3658
    %5675 = vmatpush.bf16.msra.mxu0 %v3654
    %5676 = vmatpush.bf16.msra.mxu0 %v3650
    %5677 = vmatpush.bf16.msra.mxu0 %v3646
    %5678 = vmatpush.bf16.msra.mxu0 %v3642
    %5679 = vmatpush.bf16.msra.mxu0 %v3638
    %5680 = vmatpush.bf16.msra.mxu0 %v3634
    %5681 = vmatpush.bf16.msra.mxu0 %v3630
    %5682 = vmatmul.bf16.gmra.mxu0 %v997
    %v5683 = vpop.f32.mrf.mxu0
    %v5684 = vadd.f32 %v5670, %v5683
    %v5685 = vpop.f32.mrf.mxu0
    %v5686 = vadd.f32 %v5672, %v5685
    %5687 = vdwg.mxu0
    %5688 = vmatpush.bf16.msra.mxu0 %v3690
    %5689 = vmatpush.bf16.msra.mxu0 %v3686
    %5690 = vmatpush.bf16.msra.mxu0 %v3682
    %5691 = vmatpush.bf16.msra.mxu0 %v3678
    %5692 = vmatpush.bf16.msra.mxu0 %v3674
    %5693 = vmatpush.bf16.msra.mxu0 %v3670
    %5694 = vmatpush.bf16.msra.mxu0 %v3666
    %5695 = vmatpush.bf16.msra.mxu0 %v3662
    %5696 = vmatmul.bf16.gmra.mxu0 %v998
    %v5697 = vpop.f32.mrf.mxu0
    %v5698 = vadd.f32 %v5684, %v5697
    %v5699 = vpop.f32.mrf.mxu0
    %v5700 = vadd.f32 %v5686, %v5699
    %5701 = vdwg.mxu0
    %5702 = vmatpush.bf16.msra.mxu0 %v3722
    %5703 = vmatpush.bf16.msra.mxu0 %v3718
    %5704 = vmatpush.bf16.msra.mxu0 %v3714
    %5705 = vmatpush.bf16.msra.mxu0 %v3710
    %5706 = vmatpush.bf16.msra.mxu0 %v3706
    %5707 = vmatpush.bf16.msra.mxu0 %v3702
    %5708 = vmatpush.bf16.msra.mxu0 %v3698
    %5709 = vmatpush.bf16.msra.mxu0 %v3694
    %5710 = vmatmul.bf16.gmra.mxu0 %v999
    %v5711 = vpop.f32.mrf.mxu0
    %v5712 = vadd.f32 %v5698, %v5711
    %v5713 = vpop.f32.mrf.mxu0
    %v5714 = vadd.f32 %v5700, %v5713
    %5715 = vdwg.mxu0
    %5716 = vmatpush.bf16.msra.mxu0 %v3754
    %5717 = vmatpush.bf16.msra.mxu0 %v3750
    %5718 = vmatpush.bf16.msra.mxu0 %v3746
    %5719 = vmatpush.bf16.msra.mxu0 %v3742
    %5720 = vmatpush.bf16.msra.mxu0 %v3738
    %5721 = vmatpush.bf16.msra.mxu0 %v3734
    %5722 = vmatpush.bf16.msra.mxu0 %v3730
    %5723 = vmatpush.bf16.msra.mxu0 %v3726
    %5724 = vmatmul.bf16.gmra.mxu0 %v1000
    %v5725 = vpop.f32.mrf.mxu0
    %v5726 = vadd.f32 %v5712, %v5725
    %v5727 = vpop.f32.mrf.mxu0
    %v5728 = vadd.f32 %v5714, %v5727
    %5729 = vdwg.mxu0
    %5730 = vmatpush.bf16.msra.mxu0 %v3786
    %5731 = vmatpush.bf16.msra.mxu0 %v3782
    %5732 = vmatpush.bf16.msra.mxu0 %v3778
    %5733 = vmatpush.bf16.msra.mxu0 %v3774
    %5734 = vmatpush.bf16.msra.mxu0 %v3770
    %5735 = vmatpush.bf16.msra.mxu0 %v3766
    %5736 = vmatpush.bf16.msra.mxu0 %v3762
    %5737 = vmatpush.bf16.msra.mxu0 %v3758
    %5738 = vmatmul.bf16.gmra.mxu0 %v1001
    %v5739 = vpop.f32.mrf.mxu0
    %v5740 = vadd.f32 %v5726, %v5739
    %v5741 = vpop.f32.mrf.mxu0
    %v5742 = vadd.f32 %v5728, %v5741
    %5743 = vdwg.mxu0
    %5744 = vmatpush.bf16.msra.mxu0 %v3818
    %5745 = vmatpush.bf16.msra.mxu0 %v3814
    %5746 = vmatpush.bf16.msra.mxu0 %v3810
    %5747 = vmatpush.bf16.msra.mxu0 %v3806
    %5748 = vmatpush.bf16.msra.mxu0 %v3802
    %5749 = vmatpush.bf16.msra.mxu0 %v3798
    %5750 = vmatpush.bf16.msra.mxu0 %v3794
    %5751 = vmatpush.bf16.msra.mxu0 %v3790
    %5752 = vmatmul.bf16.gmra.mxu0 %v1002
    %v5753 = vpop.f32.mrf.mxu0
    %v5754 = vadd.f32 %v5740, %v5753
    %v5755 = vpop.f32.mrf.mxu0
    %v5756 = vadd.f32 %v5742, %v5755
    %5757 = vdwg.mxu0
    %5758 = vmatpush.bf16.msra.mxu0 %v3850
    %5759 = vmatpush.bf16.msra.mxu0 %v3846
    %5760 = vmatpush.bf16.msra.mxu0 %v3842
    %5761 = vmatpush.bf16.msra.mxu0 %v3838
    %5762 = vmatpush.bf16.msra.mxu0 %v3834
    %5763 = vmatpush.bf16.msra.mxu0 %v3830
    %5764 = vmatpush.bf16.msra.mxu0 %v3826
    %5765 = vmatpush.bf16.msra.mxu0 %v3822
    %5766 = vmatmul.bf16.gmra.mxu0 %v1003
    %v5767 = vpop.f32.mrf.mxu0
    %v5768 = vadd.f32 %v5754, %v5767
    %v5769 = vpop.f32.mrf.mxu0
    %v5770 = vadd.f32 %v5756, %v5769
    %5771 = vdwg.mxu0
    %5772 = vmatpush.bf16.msra.mxu0 %v3882
    %5773 = vmatpush.bf16.msra.mxu0 %v3878
    %5774 = vmatpush.bf16.msra.mxu0 %v3874
    %5775 = vmatpush.bf16.msra.mxu0 %v3870
    %5776 = vmatpush.bf16.msra.mxu0 %v3866
    %5777 = vmatpush.bf16.msra.mxu0 %v3862
    %5778 = vmatpush.bf16.msra.mxu0 %v3858
    %5779 = vmatpush.bf16.msra.mxu0 %v3854
    %5780 = vmatmul.bf16.gmra.mxu0 %v1004
    %v5781 = vpop.f32.mrf.mxu0
    %v5782 = vadd.f32 %v5768, %v5781
    %v5783 = vpop.f32.mrf.mxu0
    %v5784 = vadd.f32 %v5770, %v5783
    %5785 = vdwg.mxu0
    %5786 = vmatpush.bf16.msra.mxu0 %v3914
    %5787 = vmatpush.bf16.msra.mxu0 %v3910
    %5788 = vmatpush.bf16.msra.mxu0 %v3906
    %5789 = vmatpush.bf16.msra.mxu0 %v3902
    %5790 = vmatpush.bf16.msra.mxu0 %v3898
    %5791 = vmatpush.bf16.msra.mxu0 %v3894
    %5792 = vmatpush.bf16.msra.mxu0 %v3890
    %5793 = vmatpush.bf16.msra.mxu0 %v3886
    %5794 = vmatmul.bf16.gmra.mxu0 %v1005
    %v5795 = vpop.f32.mrf.mxu0
    %v5796 = vadd.f32 %v5782, %v5795
    %v5797 = vpop.f32.mrf.mxu0
    %v5798 = vadd.f32 %v5784, %v5797
    %5799 = vdwg.mxu0
    %5800 = vmatpush.bf16.msra.mxu0 %v3946
    %5801 = vmatpush.bf16.msra.mxu0 %v3942
    %5802 = vmatpush.bf16.msra.mxu0 %v3938
    %5803 = vmatpush.bf16.msra.mxu0 %v3934
    %5804 = vmatpush.bf16.msra.mxu0 %v3930
    %5805 = vmatpush.bf16.msra.mxu0 %v3926
    %5806 = vmatpush.bf16.msra.mxu0 %v3922
    %5807 = vmatpush.bf16.msra.mxu0 %v3918
    %5808 = vmatmul.bf16.gmra.mxu0 %v1006
    %v5809 = vpop.f32.mrf.mxu0
    %v5810 = vadd.f32 %v5796, %v5809
    %v5811 = vpop.f32.mrf.mxu0
    %v5812 = vadd.f32 %v5798, %v5811
    %5813 = vdwg.mxu0
    %5814 = vmatpush.bf16.msra.mxu0 %v3978
    %5815 = vmatpush.bf16.msra.mxu0 %v3974
    %5816 = vmatpush.bf16.msra.mxu0 %v3970
    %5817 = vmatpush.bf16.msra.mxu0 %v3966
    %5818 = vmatpush.bf16.msra.mxu0 %v3962
    %5819 = vmatpush.bf16.msra.mxu0 %v3958
    %5820 = vmatpush.bf16.msra.mxu0 %v3954
    %5821 = vmatpush.bf16.msra.mxu0 %v3950
    %5822 = vmatmul.bf16.gmra.mxu0 %v1007
    %v5823 = vpop.f32.mrf.mxu0
    %v5824 = vadd.f32 %v5810, %v5823
    %v5825 = vpop.f32.mrf.mxu0
    %v5826 = vadd.f32 %v5812, %v5825
    %5827 = vdwg.mxu0
    %5828 = vmatpush.bf16.msra.mxu0 %v4010
    %5829 = vmatpush.bf16.msra.mxu0 %v4006
    %5830 = vmatpush.bf16.msra.mxu0 %v4002
    %5831 = vmatpush.bf16.msra.mxu0 %v3998
    %5832 = vmatpush.bf16.msra.mxu0 %v3994
    %5833 = vmatpush.bf16.msra.mxu0 %v3990
    %5834 = vmatpush.bf16.msra.mxu0 %v3986
    %5835 = vmatpush.bf16.msra.mxu0 %v3982
    %5836 = vmatmul.bf16.gmra.mxu0 %v1008
    %v5837 = vpop.f32.mrf.mxu0
    %v5838 = vadd.f32 %v5824, %v5837
    %v5839 = vpop.f32.mrf.mxu0
    %v5840 = vadd.f32 %v5826, %v5839
    %5841 = vdwg.mxu0
    %5842 = vmatpush.bf16.msra.mxu0 %v4042
    %5843 = vmatpush.bf16.msra.mxu0 %v4038
    %5844 = vmatpush.bf16.msra.mxu0 %v4034
    %5845 = vmatpush.bf16.msra.mxu0 %v4030
    %5846 = vmatpush.bf16.msra.mxu0 %v4026
    %5847 = vmatpush.bf16.msra.mxu0 %v4022
    %5848 = vmatpush.bf16.msra.mxu0 %v4018
    %5849 = vmatpush.bf16.msra.mxu0 %v4014
    %5850 = vmatmul.bf16.gmra.mxu0 %v1009
    %v5851 = vpop.f32.mrf.mxu0
    %v5852 = vadd.f32 %v5838, %v5851
    %v5853 = vpop.f32.mrf.mxu0
    %v5854 = vadd.f32 %v5840, %v5853
    %5855 = vdwg.mxu0
    %5856 = vmatpush.bf16.msra.mxu0 %v4074
    %5857 = vmatpush.bf16.msra.mxu0 %v4070
    %5858 = vmatpush.bf16.msra.mxu0 %v4066
    %5859 = vmatpush.bf16.msra.mxu0 %v4062
    %5860 = vmatpush.bf16.msra.mxu0 %v4058
    %5861 = vmatpush.bf16.msra.mxu0 %v4054
    %5862 = vmatpush.bf16.msra.mxu0 %v4050
    %5863 = vmatpush.bf16.msra.mxu0 %v4046
    %5864 = vmatmul.bf16.gmra.mxu0 %v1010
    %v5865 = vpop.f32.mrf.mxu0
    %v5866 = vadd.f32 %v5852, %v5865
    %v5867 = vpop.f32.mrf.mxu0
    %v5868 = vadd.f32 %v5854, %v5867
    %5869 = vdwg.mxu0
    %5870 = vmatpush.bf16.msra.mxu0 %v4106
    %5871 = vmatpush.bf16.msra.mxu0 %v4102
    %5872 = vmatpush.bf16.msra.mxu0 %v4098
    %5873 = vmatpush.bf16.msra.mxu0 %v4094
    %5874 = vmatpush.bf16.msra.mxu0 %v4090
    %5875 = vmatpush.bf16.msra.mxu0 %v4086
    %5876 = vmatpush.bf16.msra.mxu0 %v4082
    %5877 = vmatpush.bf16.msra.mxu0 %v4078
    %5878 = vmatmul.bf16.gmra.mxu0 %v1011
    %v5879 = vpop.f32.mrf.mxu0
    %v5880 = vadd.f32 %v5866, %v5879
    %v5881 = vpop.f32.mrf.mxu0
    %v5882 = vadd.f32 %v5868, %v5881
    %5883 = vdwg.mxu0
    %5884 = vmatpush.bf16.msra.mxu0 %v3371
    %5885 = vmatpush.bf16.msra.mxu0 %v3367
    %5886 = vmatpush.bf16.msra.mxu0 %v3363
    %5887 = vmatpush.bf16.msra.mxu0 %v3359
    %5888 = vmatpush.bf16.msra.mxu0 %v3355
    %5889 = vmatpush.bf16.msra.mxu0 %v3351
    %5890 = vmatpush.bf16.msra.mxu0 %v3347
    %5891 = vmatpush.bf16.msra.mxu0 %v3343
    %5892 = vmatmul.bf16.gmra.mxu0 %v988
    %v5893 = vpop.f32.mrf.mxu0
    %v5894 = vadd.f32 %v911, %v5893
    %v5895 = vpop.f32.mrf.mxu0
    %v5896 = vadd.f32 %v911, %v5895
    %5897 = vdwg.mxu0
    %5898 = vmatpush.bf16.msra.mxu0 %v3403
    %5899 = vmatpush.bf16.msra.mxu0 %v3399
    %5900 = vmatpush.bf16.msra.mxu0 %v3395
    %5901 = vmatpush.bf16.msra.mxu0 %v3391
    %5902 = vmatpush.bf16.msra.mxu0 %v3387
    %5903 = vmatpush.bf16.msra.mxu0 %v3383
    %5904 = vmatpush.bf16.msra.mxu0 %v3379
    %5905 = vmatpush.bf16.msra.mxu0 %v3375
    %5906 = vmatmul.bf16.gmra.mxu0 %v989
    %v5907 = vpop.f32.mrf.mxu0
    %v5908 = vadd.f32 %v5894, %v5907
    %v5909 = vpop.f32.mrf.mxu0
    %v5910 = vadd.f32 %v5896, %v5909
    %5911 = vdwg.mxu0
    %5912 = vmatpush.bf16.msra.mxu0 %v3435
    %5913 = vmatpush.bf16.msra.mxu0 %v3431
    %5914 = vmatpush.bf16.msra.mxu0 %v3427
    %5915 = vmatpush.bf16.msra.mxu0 %v3423
    %5916 = vmatpush.bf16.msra.mxu0 %v3419
    %5917 = vmatpush.bf16.msra.mxu0 %v3415
    %5918 = vmatpush.bf16.msra.mxu0 %v3411
    %5919 = vmatpush.bf16.msra.mxu0 %v3407
    %5920 = vmatmul.bf16.gmra.mxu0 %v990
    %v5921 = vpop.f32.mrf.mxu0
    %v5922 = vadd.f32 %v5908, %v5921
    %v5923 = vpop.f32.mrf.mxu0
    %v5924 = vadd.f32 %v5910, %v5923
    %5925 = vdwg.mxu0
    %5926 = vmatpush.bf16.msra.mxu0 %v3467
    %5927 = vmatpush.bf16.msra.mxu0 %v3463
    %5928 = vmatpush.bf16.msra.mxu0 %v3459
    %5929 = vmatpush.bf16.msra.mxu0 %v3455
    %5930 = vmatpush.bf16.msra.mxu0 %v3451
    %5931 = vmatpush.bf16.msra.mxu0 %v3447
    %5932 = vmatpush.bf16.msra.mxu0 %v3443
    %5933 = vmatpush.bf16.msra.mxu0 %v3439
    %5934 = vmatmul.bf16.gmra.mxu0 %v991
    %v5935 = vpop.f32.mrf.mxu0
    %v5936 = vadd.f32 %v5922, %v5935
    %v5937 = vpop.f32.mrf.mxu0
    %v5938 = vadd.f32 %v5924, %v5937
    %5939 = vdwg.mxu0
    %5940 = vmatpush.bf16.msra.mxu0 %v3499
    %5941 = vmatpush.bf16.msra.mxu0 %v3495
    %5942 = vmatpush.bf16.msra.mxu0 %v3491
    %5943 = vmatpush.bf16.msra.mxu0 %v3487
    %5944 = vmatpush.bf16.msra.mxu0 %v3483
    %5945 = vmatpush.bf16.msra.mxu0 %v3479
    %5946 = vmatpush.bf16.msra.mxu0 %v3475
    %5947 = vmatpush.bf16.msra.mxu0 %v3471
    %5948 = vmatmul.bf16.gmra.mxu0 %v992
    %v5949 = vpop.f32.mrf.mxu0
    %v5950 = vadd.f32 %v5936, %v5949
    %v5951 = vpop.f32.mrf.mxu0
    %v5952 = vadd.f32 %v5938, %v5951
    %5953 = vdwg.mxu0
    %5954 = vmatpush.bf16.msra.mxu0 %v3531
    %5955 = vmatpush.bf16.msra.mxu0 %v3527
    %5956 = vmatpush.bf16.msra.mxu0 %v3523
    %5957 = vmatpush.bf16.msra.mxu0 %v3519
    %5958 = vmatpush.bf16.msra.mxu0 %v3515
    %5959 = vmatpush.bf16.msra.mxu0 %v3511
    %5960 = vmatpush.bf16.msra.mxu0 %v3507
    %5961 = vmatpush.bf16.msra.mxu0 %v3503
    %5962 = vmatmul.bf16.gmra.mxu0 %v993
    %v5963 = vpop.f32.mrf.mxu0
    %v5964 = vadd.f32 %v5950, %v5963
    %v5965 = vpop.f32.mrf.mxu0
    %v5966 = vadd.f32 %v5952, %v5965
    %5967 = vdwg.mxu0
    %5968 = vmatpush.bf16.msra.mxu0 %v3563
    %5969 = vmatpush.bf16.msra.mxu0 %v3559
    %5970 = vmatpush.bf16.msra.mxu0 %v3555
    %5971 = vmatpush.bf16.msra.mxu0 %v3551
    %5972 = vmatpush.bf16.msra.mxu0 %v3547
    %5973 = vmatpush.bf16.msra.mxu0 %v3543
    %5974 = vmatpush.bf16.msra.mxu0 %v3539
    %5975 = vmatpush.bf16.msra.mxu0 %v3535
    %5976 = vmatmul.bf16.gmra.mxu0 %v994
    %v5977 = vpop.f32.mrf.mxu0
    %v5978 = vadd.f32 %v5964, %v5977
    %v5979 = vpop.f32.mrf.mxu0
    %v5980 = vadd.f32 %v5966, %v5979
    %5981 = vdwg.mxu0
    %5982 = vmatpush.bf16.msra.mxu0 %v3595
    %5983 = vmatpush.bf16.msra.mxu0 %v3591
    %5984 = vmatpush.bf16.msra.mxu0 %v3587
    %5985 = vmatpush.bf16.msra.mxu0 %v3583
    %5986 = vmatpush.bf16.msra.mxu0 %v3579
    %5987 = vmatpush.bf16.msra.mxu0 %v3575
    %5988 = vmatpush.bf16.msra.mxu0 %v3571
    %5989 = vmatpush.bf16.msra.mxu0 %v3567
    %5990 = vmatmul.bf16.gmra.mxu0 %v995
    %v5991 = vpop.f32.mrf.mxu0
    %v5992 = vadd.f32 %v5978, %v5991
    %v5993 = vpop.f32.mrf.mxu0
    %v5994 = vadd.f32 %v5980, %v5993
    %5995 = vdwg.mxu0
    %5996 = vmatpush.bf16.msra.mxu0 %v3627
    %5997 = vmatpush.bf16.msra.mxu0 %v3623
    %5998 = vmatpush.bf16.msra.mxu0 %v3619
    %5999 = vmatpush.bf16.msra.mxu0 %v3615
    %6000 = vmatpush.bf16.msra.mxu0 %v3611
    %6001 = vmatpush.bf16.msra.mxu0 %v3607
    %6002 = vmatpush.bf16.msra.mxu0 %v3603
    %6003 = vmatpush.bf16.msra.mxu0 %v3599
    %6004 = vmatmul.bf16.gmra.mxu0 %v996
    %v6005 = vpop.f32.mrf.mxu0
    %v6006 = vadd.f32 %v5992, %v6005
    %v6007 = vpop.f32.mrf.mxu0
    %v6008 = vadd.f32 %v5994, %v6007
    %6009 = vdwg.mxu0
    %6010 = vmatpush.bf16.msra.mxu0 %v3659
    %6011 = vmatpush.bf16.msra.mxu0 %v3655
    %6012 = vmatpush.bf16.msra.mxu0 %v3651
    %6013 = vmatpush.bf16.msra.mxu0 %v3647
    %6014 = vmatpush.bf16.msra.mxu0 %v3643
    %6015 = vmatpush.bf16.msra.mxu0 %v3639
    %6016 = vmatpush.bf16.msra.mxu0 %v3635
    %6017 = vmatpush.bf16.msra.mxu0 %v3631
    %6018 = vmatmul.bf16.gmra.mxu0 %v997
    %v6019 = vpop.f32.mrf.mxu0
    %v6020 = vadd.f32 %v6006, %v6019
    %v6021 = vpop.f32.mrf.mxu0
    %v6022 = vadd.f32 %v6008, %v6021
    %6023 = vdwg.mxu0
    %6024 = vmatpush.bf16.msra.mxu0 %v3691
    %6025 = vmatpush.bf16.msra.mxu0 %v3687
    %6026 = vmatpush.bf16.msra.mxu0 %v3683
    %6027 = vmatpush.bf16.msra.mxu0 %v3679
    %6028 = vmatpush.bf16.msra.mxu0 %v3675
    %6029 = vmatpush.bf16.msra.mxu0 %v3671
    %6030 = vmatpush.bf16.msra.mxu0 %v3667
    %6031 = vmatpush.bf16.msra.mxu0 %v3663
    %6032 = vmatmul.bf16.gmra.mxu0 %v998
    %v6033 = vpop.f32.mrf.mxu0
    %v6034 = vadd.f32 %v6020, %v6033
    %v6035 = vpop.f32.mrf.mxu0
    %v6036 = vadd.f32 %v6022, %v6035
    %6037 = vdwg.mxu0
    %6038 = vmatpush.bf16.msra.mxu0 %v3723
    %6039 = vmatpush.bf16.msra.mxu0 %v3719
    %6040 = vmatpush.bf16.msra.mxu0 %v3715
    %6041 = vmatpush.bf16.msra.mxu0 %v3711
    %6042 = vmatpush.bf16.msra.mxu0 %v3707
    %6043 = vmatpush.bf16.msra.mxu0 %v3703
    %6044 = vmatpush.bf16.msra.mxu0 %v3699
    %6045 = vmatpush.bf16.msra.mxu0 %v3695
    %6046 = vmatmul.bf16.gmra.mxu0 %v999
    %v6047 = vpop.f32.mrf.mxu0
    %v6048 = vadd.f32 %v6034, %v6047
    %v6049 = vpop.f32.mrf.mxu0
    %v6050 = vadd.f32 %v6036, %v6049
    %6051 = vdwg.mxu0
    %6052 = vmatpush.bf16.msra.mxu0 %v3755
    %6053 = vmatpush.bf16.msra.mxu0 %v3751
    %6054 = vmatpush.bf16.msra.mxu0 %v3747
    %6055 = vmatpush.bf16.msra.mxu0 %v3743
    %6056 = vmatpush.bf16.msra.mxu0 %v3739
    %6057 = vmatpush.bf16.msra.mxu0 %v3735
    %6058 = vmatpush.bf16.msra.mxu0 %v3731
    %6059 = vmatpush.bf16.msra.mxu0 %v3727
    %6060 = vmatmul.bf16.gmra.mxu0 %v1000
    %v6061 = vpop.f32.mrf.mxu0
    %v6062 = vadd.f32 %v6048, %v6061
    %v6063 = vpop.f32.mrf.mxu0
    %v6064 = vadd.f32 %v6050, %v6063
    %6065 = vdwg.mxu0
    %6066 = vmatpush.bf16.msra.mxu0 %v3787
    %6067 = vmatpush.bf16.msra.mxu0 %v3783
    %6068 = vmatpush.bf16.msra.mxu0 %v3779
    %6069 = vmatpush.bf16.msra.mxu0 %v3775
    %6070 = vmatpush.bf16.msra.mxu0 %v3771
    %6071 = vmatpush.bf16.msra.mxu0 %v3767
    %6072 = vmatpush.bf16.msra.mxu0 %v3763
    %6073 = vmatpush.bf16.msra.mxu0 %v3759
    %6074 = vmatmul.bf16.gmra.mxu0 %v1001
    %v6075 = vpop.f32.mrf.mxu0
    %v6076 = vadd.f32 %v6062, %v6075
    %v6077 = vpop.f32.mrf.mxu0
    %v6078 = vadd.f32 %v6064, %v6077
    %6079 = vdwg.mxu0
    %6080 = vmatpush.bf16.msra.mxu0 %v3819
    %6081 = vmatpush.bf16.msra.mxu0 %v3815
    %6082 = vmatpush.bf16.msra.mxu0 %v3811
    %6083 = vmatpush.bf16.msra.mxu0 %v3807
    %6084 = vmatpush.bf16.msra.mxu0 %v3803
    %6085 = vmatpush.bf16.msra.mxu0 %v3799
    %6086 = vmatpush.bf16.msra.mxu0 %v3795
    %6087 = vmatpush.bf16.msra.mxu0 %v3791
    %6088 = vmatmul.bf16.gmra.mxu0 %v1002
    %v6089 = vpop.f32.mrf.mxu0
    %v6090 = vadd.f32 %v6076, %v6089
    %v6091 = vpop.f32.mrf.mxu0
    %v6092 = vadd.f32 %v6078, %v6091
    %6093 = vdwg.mxu0
    %6094 = vmatpush.bf16.msra.mxu0 %v3851
    %6095 = vmatpush.bf16.msra.mxu0 %v3847
    %6096 = vmatpush.bf16.msra.mxu0 %v3843
    %6097 = vmatpush.bf16.msra.mxu0 %v3839
    %6098 = vmatpush.bf16.msra.mxu0 %v3835
    %6099 = vmatpush.bf16.msra.mxu0 %v3831
    %6100 = vmatpush.bf16.msra.mxu0 %v3827
    %6101 = vmatpush.bf16.msra.mxu0 %v3823
    %6102 = vmatmul.bf16.gmra.mxu0 %v1003
    %v6103 = vpop.f32.mrf.mxu0
    %v6104 = vadd.f32 %v6090, %v6103
    %v6105 = vpop.f32.mrf.mxu0
    %v6106 = vadd.f32 %v6092, %v6105
    %6107 = vdwg.mxu0
    %6108 = vmatpush.bf16.msra.mxu0 %v3883
    %6109 = vmatpush.bf16.msra.mxu0 %v3879
    %6110 = vmatpush.bf16.msra.mxu0 %v3875
    %6111 = vmatpush.bf16.msra.mxu0 %v3871
    %6112 = vmatpush.bf16.msra.mxu0 %v3867
    %6113 = vmatpush.bf16.msra.mxu0 %v3863
    %6114 = vmatpush.bf16.msra.mxu0 %v3859
    %6115 = vmatpush.bf16.msra.mxu0 %v3855
    %6116 = vmatmul.bf16.gmra.mxu0 %v1004
    %v6117 = vpop.f32.mrf.mxu0
    %v6118 = vadd.f32 %v6104, %v6117
    %v6119 = vpop.f32.mrf.mxu0
    %v6120 = vadd.f32 %v6106, %v6119
    %6121 = vdwg.mxu0
    %6122 = vmatpush.bf16.msra.mxu0 %v3915
    %6123 = vmatpush.bf16.msra.mxu0 %v3911
    %6124 = vmatpush.bf16.msra.mxu0 %v3907
    %6125 = vmatpush.bf16.msra.mxu0 %v3903
    %6126 = vmatpush.bf16.msra.mxu0 %v3899
    %6127 = vmatpush.bf16.msra.mxu0 %v3895
    %6128 = vmatpush.bf16.msra.mxu0 %v3891
    %6129 = vmatpush.bf16.msra.mxu0 %v3887
    %6130 = vmatmul.bf16.gmra.mxu0 %v1005
    %v6131 = vpop.f32.mrf.mxu0
    %v6132 = vadd.f32 %v6118, %v6131
    %v6133 = vpop.f32.mrf.mxu0
    %v6134 = vadd.f32 %v6120, %v6133
    %6135 = vdwg.mxu0
    %6136 = vmatpush.bf16.msra.mxu0 %v3947
    %6137 = vmatpush.bf16.msra.mxu0 %v3943
    %6138 = vmatpush.bf16.msra.mxu0 %v3939
    %6139 = vmatpush.bf16.msra.mxu0 %v3935
    %6140 = vmatpush.bf16.msra.mxu0 %v3931
    %6141 = vmatpush.bf16.msra.mxu0 %v3927
    %6142 = vmatpush.bf16.msra.mxu0 %v3923
    %6143 = vmatpush.bf16.msra.mxu0 %v3919
    %6144 = vmatmul.bf16.gmra.mxu0 %v1006
    %v6145 = vpop.f32.mrf.mxu0
    %v6146 = vadd.f32 %v6132, %v6145
    %v6147 = vpop.f32.mrf.mxu0
    %v6148 = vadd.f32 %v6134, %v6147
    %6149 = vdwg.mxu0
    %6150 = vmatpush.bf16.msra.mxu0 %v3979
    %6151 = vmatpush.bf16.msra.mxu0 %v3975
    %6152 = vmatpush.bf16.msra.mxu0 %v3971
    %6153 = vmatpush.bf16.msra.mxu0 %v3967
    %6154 = vmatpush.bf16.msra.mxu0 %v3963
    %6155 = vmatpush.bf16.msra.mxu0 %v3959
    %6156 = vmatpush.bf16.msra.mxu0 %v3955
    %6157 = vmatpush.bf16.msra.mxu0 %v3951
    %6158 = vmatmul.bf16.gmra.mxu0 %v1007
    %v6159 = vpop.f32.mrf.mxu0
    %v6160 = vadd.f32 %v6146, %v6159
    %v6161 = vpop.f32.mrf.mxu0
    %v6162 = vadd.f32 %v6148, %v6161
    %6163 = vdwg.mxu0
    %6164 = vmatpush.bf16.msra.mxu0 %v4011
    %6165 = vmatpush.bf16.msra.mxu0 %v4007
    %6166 = vmatpush.bf16.msra.mxu0 %v4003
    %6167 = vmatpush.bf16.msra.mxu0 %v3999
    %6168 = vmatpush.bf16.msra.mxu0 %v3995
    %6169 = vmatpush.bf16.msra.mxu0 %v3991
    %6170 = vmatpush.bf16.msra.mxu0 %v3987
    %6171 = vmatpush.bf16.msra.mxu0 %v3983
    %6172 = vmatmul.bf16.gmra.mxu0 %v1008
    %v6173 = vpop.f32.mrf.mxu0
    %v6174 = vadd.f32 %v6160, %v6173
    %v6175 = vpop.f32.mrf.mxu0
    %v6176 = vadd.f32 %v6162, %v6175
    %6177 = vdwg.mxu0
    %6178 = vmatpush.bf16.msra.mxu0 %v4043
    %6179 = vmatpush.bf16.msra.mxu0 %v4039
    %6180 = vmatpush.bf16.msra.mxu0 %v4035
    %6181 = vmatpush.bf16.msra.mxu0 %v4031
    %6182 = vmatpush.bf16.msra.mxu0 %v4027
    %6183 = vmatpush.bf16.msra.mxu0 %v4023
    %6184 = vmatpush.bf16.msra.mxu0 %v4019
    %6185 = vmatpush.bf16.msra.mxu0 %v4015
    %6186 = vmatmul.bf16.gmra.mxu0 %v1009
    %v6187 = vpop.f32.mrf.mxu0
    %v6188 = vadd.f32 %v6174, %v6187
    %v6189 = vpop.f32.mrf.mxu0
    %v6190 = vadd.f32 %v6176, %v6189
    %6191 = vdwg.mxu0
    %6192 = vmatpush.bf16.msra.mxu0 %v4075
    %6193 = vmatpush.bf16.msra.mxu0 %v4071
    %6194 = vmatpush.bf16.msra.mxu0 %v4067
    %6195 = vmatpush.bf16.msra.mxu0 %v4063
    %6196 = vmatpush.bf16.msra.mxu0 %v4059
    %6197 = vmatpush.bf16.msra.mxu0 %v4055
    %6198 = vmatpush.bf16.msra.mxu0 %v4051
    %6199 = vmatpush.bf16.msra.mxu0 %v4047
    %6200 = vmatmul.bf16.gmra.mxu0 %v1010
    %v6201 = vpop.f32.mrf.mxu0
    %v6202 = vadd.f32 %v6188, %v6201
    %v6203 = vpop.f32.mrf.mxu0
    %v6204 = vadd.f32 %v6190, %v6203
    %6205 = vdwg.mxu0
    %6206 = vmatpush.bf16.msra.mxu0 %v4107
    %6207 = vmatpush.bf16.msra.mxu0 %v4103
    %6208 = vmatpush.bf16.msra.mxu0 %v4099
    %6209 = vmatpush.bf16.msra.mxu0 %v4095
    %6210 = vmatpush.bf16.msra.mxu0 %v4091
    %6211 = vmatpush.bf16.msra.mxu0 %v4087
    %6212 = vmatpush.bf16.msra.mxu0 %v4083
    %6213 = vmatpush.bf16.msra.mxu0 %v4079
    %6214 = vmatmul.bf16.gmra.mxu0 %v1011
    %v6215 = vpop.f32.mrf.mxu0
    %v6216 = vadd.f32 %v6202, %v6215
    %v6217 = vpop.f32.mrf.mxu0
    %v6218 = vadd.f32 %v6204, %v6217
    %6219 = vdwg.mxu0
    %v6220 = vmax.f32 %v5208, 0.0
    %v6221 = vmax.f32 %v5544, 0.0
    %v6222 = vmax.f32 %v5880, 0.0
    %v6223 = vmax.f32 %v6216, 0.0
    %v6224 = vmax.f32 %v5210, 0.0
    %v6225 = vmax.f32 %v5546, 0.0
    %v6226 = vmax.f32 %v5882, 0.0
    %v6227 = vmax.f32 %v6218, 0.0
    %v6228 = vpack.c.bf16 %v6224, %v6220
    %v6229 = vpack.c.bf16 %v6225, %v6221
    %v6230 = vpack.c.bf16 %v6226, %v6222
    %v6231 = vpack.c.bf16 %v6227, %v6223
    %v6232 = vld [vmem:[#allocation6] sm:$0xff]
    %v6233 = vld [vmem:[#allocation6 + $0x8] sm:$0xff]
    %v6234 = vld [vmem:[#allocation6 + $0x10] sm:$0xff]
    %v6235 = vld [vmem:[#allocation6 + $0x18] sm:$0xff]
    %v6236 = vld [vmem:[#allocation6 + $0x20] sm:$0xff]
    %v6237 = vld [vmem:[#allocation6 + $0x28] sm:$0xff]
    %v6238 = vld [vmem:[#allocation6 + $0x30] sm:$0xff]
    %v6239 = vld [vmem:[#allocation6 + $0x38] sm:$0xff]
    %v6240 = vld [vmem:[#allocation6 + $0x40] sm:$0xff]
    %v6241 = vld [vmem:[#allocation6 + $0x48] sm:$0xff]
    %v6242 = vld [vmem:[#allocation6 + $0x50] sm:$0xff]
    %v6243 = vld [vmem:[#allocation6 + $0x58] sm:$0xff]
    %v6244 = vld [vmem:[#allocation6 + $0x60] sm:$0xff]
    %v6245 = vld [vmem:[#allocation6 + $0x68] sm:$0xff]
    %v6246 = vld [vmem:[#allocation6 + $0x70] sm:$0xff]
    %v6247 = vld [vmem:[#allocation6 + $0x78] sm:$0xff]
    %v6248 = vld [vmem:[#allocation6 + $0x80] sm:$0xff]
    %v6249 = vld [vmem:[#allocation6 + $0x88] sm:$0xff]
    %v6250 = vld [vmem:[#allocation6 + $0x90] sm:$0xff]
    %v6251 = vld [vmem:[#allocation6 + $0x98] sm:$0xff]
    %v6252 = vld [vmem:[#allocation6 + $0xa0] sm:$0xff]
    %v6253 = vld [vmem:[#allocation6 + $0xa8] sm:$0xff]
    %v6254 = vld [vmem:[#allocation6 + $0xb0] sm:$0xff]
    %v6255 = vld [vmem:[#allocation6 + $0xb8] sm:$0xff]
    %v6256 = vld [vmem:[#allocation6 + $0xc0] sm:$0xff]
    %v6257 = vld [vmem:[#allocation6 + $0xc8] sm:$0xff]
    %v6258 = vld [vmem:[#allocation6 + $0xd0] sm:$0xff]
    %v6259 = vld [vmem:[#allocation6 + $0xd8] sm:$0xff]
    %v6260 = vld [vmem:[#allocation6 + $0xe0] sm:$0xff]
    %v6261 = vld [vmem:[#allocation6 + $0xe8] sm:$0xff]
    %v6262 = vld [vmem:[#allocation6 + $0xf0] sm:$0xff]
    %v6263 = vld [vmem:[#allocation6 + $0xf8] sm:$0xff]
    %v6264 = vld [vmem:[#allocation6 + $0x100] sm:$0xff]
    %v6265 = vld [vmem:[#allocation6 + $0x108] sm:$0xff]
    %v6266 = vld [vmem:[#allocation6 + $0x110] sm:$0xff]
    %v6267 = vld [vmem:[#allocation6 + $0x118] sm:$0xff]
    %v6268 = vld [vmem:[#allocation6 + $0x120] sm:$0xff]
    %v6269 = vld [vmem:[#allocation6 + $0x128] sm:$0xff]
    %v6270 = vld [vmem:[#allocation6 + $0x130] sm:$0xff]
    %v6271 = vld [vmem:[#allocation6 + $0x138] sm:$0xff]
    %v6272 = vld [vmem:[#allocation6 + $0x140] sm:$0xff]
    %v6273 = vld [vmem:[#allocation6 + $0x148] sm:$0xff]
    %v6274 = vld [vmem:[#allocation6 + $0x150] sm:$0xff]
    %v6275 = vld [vmem:[#allocation6 + $0x158] sm:$0xff]
    %v6276 = vld [vmem:[#allocation6 + $0x160] sm:$0xff]
    %v6277 = vld [vmem:[#allocation6 + $0x168] sm:$0xff]
    %v6278 = vld [vmem:[#allocation6 + $0x170] sm:$0xff]
    %v6279 = vld [vmem:[#allocation6 + $0x178] sm:$0xff]
    %v6280 = vld [vmem:[#allocation6 + $0x180] sm:$0xff]
    %v6281 = vld [vmem:[#allocation6 + $0x188] sm:$0xff]
    %v6282 = vld [vmem:[#allocation6 + $0x190] sm:$0xff]
    %v6283 = vld [vmem:[#allocation6 + $0x198] sm:$0xff]
    %v6284 = vld [vmem:[#allocation6 + $0x1a0] sm:$0xff]
    %v6285 = vld [vmem:[#allocation6 + $0x1a8] sm:$0xff]
    %v6286 = vld [vmem:[#allocation6 + $0x1b0] sm:$0xff]
    %v6287 = vld [vmem:[#allocation6 + $0x1b8] sm:$0xff]
    %v6288 = vld [vmem:[#allocation6 + $0x1c0] sm:$0xff]
    %v6289 = vld [vmem:[#allocation6 + $0x1c8] sm:$0xff]
    %v6290 = vld [vmem:[#allocation6 + $0x1d0] sm:$0xff]
    %v6291 = vld [vmem:[#allocation6 + $0x1d8] sm:$0xff]
    %v6292 = vld [vmem:[#allocation6 + $0x1e0] sm:$0xff]
    %v6293 = vld [vmem:[#allocation6 + $0x1e8] sm:$0xff]
    %v6294 = vld [vmem:[#allocation6 + $0x1f0] sm:$0xff]
    %v6295 = vld [vmem:[#allocation6 + $0x1f8] sm:$0xff]
    %v6296 = vld [vmem:[#allocation7] sm:$0x3]
    %v6298 = vperm.slane %v6296, 0
    %v6299 = vperm.slane %v6296, 1
    %v6366 = vunpack.c.l.b16 %v6232
    %v6367 = vunpack.c.h.b16 %v6232
    %v6368 = vunpack.c.l.b16 %v6233
    %v6369 = vunpack.c.h.b16 %v6233
    %v6370 = vunpack.c.l.b16 %v6234
    %v6371 = vunpack.c.h.b16 %v6234
    %v6372 = vunpack.c.l.b16 %v6235
    %v6373 = vunpack.c.h.b16 %v6235
    %v6374 = vunpack.c.l.b16 %v6236
    %v6375 = vunpack.c.h.b16 %v6236
    %v6376 = vunpack.c.l.b16 %v6237
    %v6377 = vunpack.c.h.b16 %v6237
    %v6378 = vunpack.c.l.b16 %v6238
    %v6379 = vunpack.c.h.b16 %v6238
    %v6380 = vunpack.c.l.b16 %v6239
    %v6381 = vunpack.c.h.b16 %v6239
    %v6382 = vunpack.c.l.b16 %v6240
    %v6383 = vunpack.c.h.b16 %v6240
    %v6384 = vunpack.c.l.b16 %v6241
    %v6385 = vunpack.c.h.b16 %v6241
    %v6386 = vunpack.c.l.b16 %v6242
    %v6387 = vunpack.c.h.b16 %v6242
    %v6388 = vunpack.c.l.b16 %v6243
    %v6389 = vunpack.c.h.b16 %v6243
    %v6390 = vunpack.c.l.b16 %v6244
    %v6391 = vunpack.c.h.b16 %v6244
    %v6392 = vunpack.c.l.b16 %v6245
    %v6393 = vunpack.c.h.b16 %v6245
    %v6394 = vunpack.c.l.b16 %v6246
    %v6395 = vunpack.c.h.b16 %v6246
    %v6396 = vunpack.c.l.b16 %v6247
    %v6397 = vunpack.c.h.b16 %v6247
    %v6398 = vunpack.c.l.b16 %v6248
    %v6399 = vunpack.c.h.b16 %v6248
    %v6400 = vunpack.c.l.b16 %v6249
    %v6401 = vunpack.c.h.b16 %v6249
    %v6402 = vunpack.c.l.b16 %v6250
    %v6403 = vunpack.c.h.b16 %v6250
    %v6404 = vunpack.c.l.b16 %v6251
    %v6405 = vunpack.c.h.b16 %v6251
    %v6406 = vunpack.c.l.b16 %v6252
    %v6407 = vunpack.c.h.b16 %v6252
    %v6408 = vunpack.c.l.b16 %v6253
    %v6409 = vunpack.c.h.b16 %v6253
    %v6410 = vunpack.c.l.b16 %v6254
    %v6411 = vunpack.c.h.b16 %v6254
    %v6412 = vunpack.c.l.b16 %v6255
    %v6413 = vunpack.c.h.b16 %v6255
    %v6414 = vunpack.c.l.b16 %v6256
    %v6415 = vunpack.c.h.b16 %v6256
    %v6416 = vunpack.c.l.b16 %v6257
    %v6417 = vunpack.c.h.b16 %v6257
    %v6418 = vunpack.c.l.b16 %v6258
    %v6419 = vunpack.c.h.b16 %v6258
    %v6420 = vunpack.c.l.b16 %v6259
    %v6421 = vunpack.c.h.b16 %v6259
    %v6422 = vunpack.c.l.b16 %v6260
    %v6423 = vunpack.c.h.b16 %v6260
    %v6424 = vunpack.c.l.b16 %v6261
    %v6425 = vunpack.c.h.b16 %v6261
    %v6426 = vunpack.c.l.b16 %v6262
    %v6427 = vunpack.c.h.b16 %v6262
    %v6428 = vunpack.c.l.b16 %v6263
    %v6429 = vunpack.c.h.b16 %v6263
    %v6430 = vunpack.c.l.b16 %v6264
    %v6431 = vunpack.c.h.b16 %v6264
    %v6432 = vunpack.c.l.b16 %v6265
    %v6433 = vunpack.c.h.b16 %v6265
    %v6434 = vunpack.c.l.b16 %v6266
    %v6435 = vunpack.c.h.b16 %v6266
    %v6436 = vunpack.c.l.b16 %v6267
    %v6437 = vunpack.c.h.b16 %v6267
    %v6438 = vunpack.c.l.b16 %v6268
    %v6439 = vunpack.c.h.b16 %v6268
    %v6440 = vunpack.c.l.b16 %v6269
    %v6441 = vunpack.c.h.b16 %v6269
    %v6442 = vunpack.c.l.b16 %v6270
    %v6443 = vunpack.c.h.b16 %v6270
    %v6444 = vunpack.c.l.b16 %v6271
    %v6445 = vunpack.c.h.b16 %v6271
    %v6446 = vunpack.c.l.b16 %v6272
    %v6447 = vunpack.c.h.b16 %v6272
    %v6448 = vunpack.c.l.b16 %v6273
    %v6449 = vunpack.c.h.b16 %v6273
    %v6450 = vunpack.c.l.b16 %v6274
    %v6451 = vunpack.c.h.b16 %v6274
    %v6452 = vunpack.c.l.b16 %v6275
    %v6453 = vunpack.c.h.b16 %v6275
    %v6454 = vunpack.c.l.b16 %v6276
    %v6455 = vunpack.c.h.b16 %v6276
    %v6456 = vunpack.c.l.b16 %v6277
    %v6457 = vunpack.c.h.b16 %v6277
    %v6458 = vunpack.c.l.b16 %v6278
    %v6459 = vunpack.c.h.b16 %v6278
    %v6460 = vunpack.c.l.b16 %v6279
    %v6461 = vunpack.c.h.b16 %v6279
    %v6462 = vunpack.c.l.b16 %v6280
    %v6463 = vunpack.c.h.b16 %v6280
    %v6464 = vunpack.c.l.b16 %v6281
    %v6465 = vunpack.c.h.b16 %v6281
    %v6466 = vunpack.c.l.b16 %v6282
    %v6467 = vunpack.c.h.b16 %v6282
    %v6468 = vunpack.c.l.b16 %v6283
    %v6469 = vunpack.c.h.b16 %v6283
    %v6470 = vunpack.c.l.b16 %v6284
    %v6471 = vunpack.c.h.b16 %v6284
    %v6472 = vunpack.c.l.b16 %v6285
    %v6473 = vunpack.c.h.b16 %v6285
    %v6474 = vunpack.c.l.b16 %v6286
    %v6475 = vunpack.c.h.b16 %v6286
    %v6476 = vunpack.c.l.b16 %v6287
    %v6477 = vunpack.c.h.b16 %v6287
    %v6478 = vunpack.c.l.b16 %v6288
    %v6479 = vunpack.c.h.b16 %v6288
    %v6480 = vunpack.c.l.b16 %v6289
    %v6481 = vunpack.c.h.b16 %v6289
    %v6482 = vunpack.c.l.b16 %v6290
    %v6483 = vunpack.c.h.b16 %v6290
    %v6484 = vunpack.c.l.b16 %v6291
    %v6485 = vunpack.c.h.b16 %v6291
    %v6486 = vunpack.c.l.b16 %v6292
    %v6487 = vunpack.c.h.b16 %v6292
    %v6488 = vunpack.c.l.b16 %v6293
    %v6489 = vunpack.c.h.b16 %v6293
    %v6490 = vunpack.c.l.b16 %v6294
    %v6491 = vunpack.c.h.b16 %v6294
    %v6492 = vunpack.c.l.b16 %v6295
    %v6493 = vunpack.c.h.b16 %v6295
    %v6494 = vpack.c.b16 %v6368, %v6366
    %v6495 = vpack.c.b16 %v6369, %v6367
    %v6496 = vpack.c.b16 %v6372, %v6370
    %v6497 = vpack.c.b16 %v6373, %v6371
    %v6498 = vpack.c.b16 %v6376, %v6374
    %v6499 = vpack.c.b16 %v6377, %v6375
    %v6500 = vpack.c.b16 %v6380, %v6378
    %v6501 = vpack.c.b16 %v6381, %v6379
    %v6502 = vpack.c.b16 %v6384, %v6382
    %v6503 = vpack.c.b16 %v6385, %v6383
    %v6504 = vpack.c.b16 %v6388, %v6386
    %v6505 = vpack.c.b16 %v6389, %v6387
    %v6506 = vpack.c.b16 %v6392, %v6390
    %v6507 = vpack.c.b16 %v6393, %v6391
    %v6508 = vpack.c.b16 %v6396, %v6394
    %v6509 = vpack.c.b16 %v6397, %v6395
    %v6510 = vpack.c.b16 %v6400, %v6398
    %v6511 = vpack.c.b16 %v6401, %v6399
    %v6512 = vpack.c.b16 %v6404, %v6402
    %v6513 = vpack.c.b16 %v6405, %v6403
    %v6514 = vpack.c.b16 %v6408, %v6406
    %v6515 = vpack.c.b16 %v6409, %v6407
    %v6516 = vpack.c.b16 %v6412, %v6410
    %v6517 = vpack.c.b16 %v6413, %v6411
    %v6518 = vpack.c.b16 %v6416, %v6414
    %v6519 = vpack.c.b16 %v6417, %v6415
    %v6520 = vpack.c.b16 %v6420, %v6418
    %v6521 = vpack.c.b16 %v6421, %v6419
    %v6522 = vpack.c.b16 %v6424, %v6422
    %v6523 = vpack.c.b16 %v6425, %v6423
    %v6524 = vpack.c.b16 %v6428, %v6426
    %v6525 = vpack.c.b16 %v6429, %v6427
    %v6526 = vpack.c.b16 %v6432, %v6430
    %v6527 = vpack.c.b16 %v6433, %v6431
    %v6528 = vpack.c.b16 %v6436, %v6434
    %v6529 = vpack.c.b16 %v6437, %v6435
    %v6530 = vpack.c.b16 %v6440, %v6438
    %v6531 = vpack.c.b16 %v6441, %v6439
    %v6532 = vpack.c.b16 %v6444, %v6442
    %v6533 = vpack.c.b16 %v6445, %v6443
    %v6534 = vpack.c.b16 %v6448, %v6446
    %v6535 = vpack.c.b16 %v6449, %v6447
    %v6536 = vpack.c.b16 %v6452, %v6450
    %v6537 = vpack.c.b16 %v6453, %v6451
    %v6538 = vpack.c.b16 %v6456, %v6454
    %v6539 = vpack.c.b16 %v6457, %v6455
    %v6540 = vpack.c.b16 %v6460, %v6458
    %v6541 = vpack.c.b16 %v6461, %v6459
    %v6542 = vpack.c.b16 %v6464, %v6462
    %v6543 = vpack.c.b16 %v6465, %v6463
    %v6544 = vpack.c.b16 %v6468, %v6466
    %v6545 = vpack.c.b16 %v6469, %v6467
    %v6546 = vpack.c.b16 %v6472, %v6470
    %v6547 = vpack.c.b16 %v6473, %v6471
    %v6548 = vpack.c.b16 %v6476, %v6474
    %v6549 = vpack.c.b16 %v6477, %v6475
    %v6550 = vpack.c.b16 %v6480, %v6478
    %v6551 = vpack.c.b16 %v6481, %v6479
    %v6552 = vpack.c.b16 %v6484, %v6482
    %v6553 = vpack.c.b16 %v6485, %v6483
    %v6554 = vpack.c.b16 %v6488, %v6486
    %v6555 = vpack.c.b16 %v6489, %v6487
    %v6556 = vpack.c.b16 %v6492, %v6490
    %v6557 = vpack.c.b16 %v6493, %v6491
    %6622 = vmatpush.bf16.msra.mxu0 %v6508
    %6623 = vmatpush.bf16.msra.mxu0 %v6506
    %6624 = vmatpush.bf16.msra.mxu0 %v6504
    %6625 = vmatpush.bf16.msra.mxu0 %v6502
    %6626 = vmatpush.bf16.msra.mxu0 %v6500
    %6627 = vmatpush.bf16.msra.mxu0 %v6498
    %6628 = vmatpush.bf16.msra.mxu0 %v6496
    %6629 = vmatpush.bf16.msra.mxu0 %v6494
    %6630 = vmatmul.bf16.gmra.mxu0 %v6228
    %v6631 = vpop.f32.mrf.mxu0
    %v6632 = vadd.f32 %v6298, %v6631
    %v6633 = vpop.f32.mrf.mxu0
    %v6634 = vadd.f32 %v6298, %v6633
    %6635 = vdwg.mxu0
    %6636 = vmatpush.bf16.msra.mxu0 %v6524
    %6637 = vmatpush.bf16.msra.mxu0 %v6522
    %6638 = vmatpush.bf16.msra.mxu0 %v6520
    %6639 = vmatpush.bf16.msra.mxu0 %v6518
    %6640 = vmatpush.bf16.msra.mxu0 %v6516
    %6641 = vmatpush.bf16.msra.mxu0 %v6514
    %6642 = vmatpush.bf16.msra.mxu0 %v6512
    %6643 = vmatpush.bf16.msra.mxu0 %v6510
    %6644 = vmatmul.bf16.gmra.mxu0 %v6229
    %v6645 = vpop.f32.mrf.mxu0
    %v6646 = vadd.f32 %v6632, %v6645
    %v6647 = vpop.f32.mrf.mxu0
    %v6648 = vadd.f32 %v6634, %v6647
    %6649 = vdwg.mxu0
    %6650 = vmatpush.bf16.msra.mxu0 %v6540
    %6651 = vmatpush.bf16.msra.mxu0 %v6538
    %6652 = vmatpush.bf16.msra.mxu0 %v6536
    %6653 = vmatpush.bf16.msra.mxu0 %v6534
    %6654 = vmatpush.bf16.msra.mxu0 %v6532
    %6655 = vmatpush.bf16.msra.mxu0 %v6530
    %6656 = vmatpush.bf16.msra.mxu0 %v6528
    %6657 = vmatpush.bf16.msra.mxu0 %v6526
    %6658 = vmatmul.bf16.gmra.mxu0 %v6230
    %v6659 = vpop.f32.mrf.mxu0
    %v6660 = vadd.f32 %v6646, %v6659
    %v6661 = vpop.f32.mrf.mxu0
    %v6662 = vadd.f32 %v6648, %v6661
    %6663 = vdwg.mxu0
    %6664 = vmatpush.bf16.msra.mxu0 %v6556
    %6665 = vmatpush.bf16.msra.mxu0 %v6554
    %6666 = vmatpush.bf16.msra.mxu0 %v6552
    %6667 = vmatpush.bf16.msra.mxu0 %v6550
    %6668 = vmatpush.bf16.msra.mxu0 %v6548
    %6669 = vmatpush.bf16.msra.mxu0 %v6546
    %6670 = vmatpush.bf16.msra.mxu0 %v6544
    %6671 = vmatpush.bf16.msra.mxu0 %v6542
    %6672 = vmatmul.bf16.gmra.mxu0 %v6231
    %v6673 = vpop.f32.mrf.mxu0
    %v6674 = vadd.f32 %v6660, %v6673
    %v6675 = vpop.f32.mrf.mxu0
    %v6676 = vadd.f32 %v6662, %v6675
    %6677 = vdwg.mxu0
    %6678 = vmatpush.bf16.msra.mxu0 %v6509
    %6679 = vmatpush.bf16.msra.mxu0 %v6507
    %6680 = vmatpush.bf16.msra.mxu0 %v6505
    %6681 = vmatpush.bf16.msra.mxu0 %v6503
    %6682 = vmatpush.bf16.msra.mxu0 %v6501
    %6683 = vmatpush.bf16.msra.mxu0 %v6499
    %6684 = vmatpush.bf16.msra.mxu0 %v6497
    %6685 = vmatpush.bf16.msra.mxu0 %v6495
    %6686 = vmatmul.bf16.gmra.mxu0 %v6228
    %v6687 = vpop.f32.mrf.mxu0
    %v6688 = vadd.f32 %v6299, %v6687
    %v6689 = vpop.f32.mrf.mxu0
    %v6690 = vadd.f32 %v6299, %v6689
    %6691 = vdwg.mxu0
    %6692 = vmatpush.bf16.msra.mxu0 %v6525
    %6693 = vmatpush.bf16.msra.mxu0 %v6523
    %6694 = vmatpush.bf16.msra.mxu0 %v6521
    %6695 = vmatpush.bf16.msra.mxu0 %v6519
    %6696 = vmatpush.bf16.msra.mxu0 %v6517
    %6697 = vmatpush.bf16.msra.mxu0 %v6515
    %6698 = vmatpush.bf16.msra.mxu0 %v6513
    %6699 = vmatpush.bf16.msra.mxu0 %v6511
    %6700 = vmatmul.bf16.gmra.mxu0 %v6229
    %v6701 = vpop.f32.mrf.mxu0
    %v6702 = vadd.f32 %v6688, %v6701
    %v6703 = vpop.f32.mrf.mxu0
    %v6704 = vadd.f32 %v6690, %v6703
    %6705 = vdwg.mxu0
    %6706 = vmatpush.bf16.msra.mxu0 %v6541
    %6707 = vmatpush.bf16.msra.mxu0 %v6539
    %6708 = vmatpush.bf16.msra.mxu0 %v6537
    %6709 = vmatpush.bf16.msra.mxu0 %v6535
    %6710 = vmatpush.bf16.msra.mxu0 %v6533
    %6711 = vmatpush.bf16.msra.mxu0 %v6531
    %6712 = vmatpush.bf16.msra.mxu0 %v6529
    %6713 = vmatpush.bf16.msra.mxu0 %v6527
    %6714 = vmatmul.bf16.gmra.mxu0 %v6230
    %v6715 = vpop.f32.mrf.mxu0
    %v6716 = vadd.f32 %v6702, %v6715
    %v6717 = vpop.f32.mrf.mxu0
    %v6718 = vadd.f32 %v6704, %v6717
    %6719 = vdwg.mxu0
    %6720 = vmatpush.bf16.msra.mxu0 %v6557
    %6721 = vmatpush.bf16.msra.mxu0 %v6555
    %6722 = vmatpush.bf16.msra.mxu0 %v6553
    %6723 = vmatpush.bf16.msra.mxu0 %v6551
    %6724 = vmatpush.bf16.msra.mxu0 %v6549
    %6725 = vmatpush.bf16.msra.mxu0 %v6547
    %6726 = vmatpush.bf16.msra.mxu0 %v6545
    %6727 = vmatpush.bf16.msra.mxu0 %v6543
    %6728 = vmatmul.bf16.gmra.mxu0 %v6231
    %v6729 = vpop.f32.mrf.mxu0
    %v6730 = vadd.f32 %v6716, %v6729
    %v6731 = vpop.f32.mrf.mxu0
    %v6732 = vadd.f32 %v6718, %v6731
    %6733 = vdwg.mxu0
    %v6734 = vmax.f32 %v6674, 0.0
    %v6735 = vmax.f32 %v6730, 0.0
    %v6736 = vmax.f32 %v6676, 0.0
    %v6737 = vmax.f32 %v6732, 0.0
    %v6738 = vpack.c.bf16 %v6736, %v6734
    %v6739 = vpack.c.bf16 %v6737, %v6735
    %v6740 = vld [vmem:[#allocation9] sm:$0xf]
    %v6741 = vld [vmem:[#allocation9 + $0x4] sm:$0xf]
    %v6742 = vld [vmem:[#allocation9 + $0x8] sm:$0xf]
    %v6743 = vld [vmem:[#allocation9 + $0xc] sm:$0xf]
    %v6744 = vld [vmem:[#allocation9 + $0x10] sm:$0xf]
    %v6745 = vld [vmem:[#allocation9 + $0x14] sm:$0xf]
    %v6746 = vld [vmem:[#allocation9 + $0x18] sm:$0xf]
    %v6747 = vld [vmem:[#allocation9 + $0x1c] sm:$0xf]
    %v6748 = vld [vmem:[#allocation9 + $0x20] sm:$0xf]
    %v6749 = vld [vmem:[#allocation9 + $0x24] sm:$0xf]
    %v6750 = vld [vmem:[#allocation9 + $0x28] sm:$0xf]
    %v6751 = vld [vmem:[#allocation9 + $0x2c] sm:$0xf]
    %v6752 = vld [vmem:[#allocation9 + $0x30] sm:$0xf]
    %v6753 = vld [vmem:[#allocation9 + $0x34] sm:$0xf]
    %v6754 = vld [vmem:[#allocation9 + $0x38] sm:$0xf]
    %v6755 = vld [vmem:[#allocation9 + $0x3c] sm:$0xf]
    %v6756 = vld [vmem:[#allocation9 + $0x40] sm:$0xf]
    %v6757 = vld [vmem:[#allocation9 + $0x44] sm:$0xf]
    %v6758 = vld [vmem:[#allocation9 + $0x48] sm:$0xf]
    %v6759 = vld [vmem:[#allocation9 + $0x4c] sm:$0xf]
    %v6760 = vld [vmem:[#allocation9 + $0x50] sm:$0xf]
    %v6761 = vld [vmem:[#allocation9 + $0x54] sm:$0xf]
    %v6762 = vld [vmem:[#allocation9 + $0x58] sm:$0xf]
    %v6763 = vld [vmem:[#allocation9 + $0x5c] sm:$0xf]
    %v6764 = vld [vmem:[#allocation9 + $0x60] sm:$0xf]
    %v6765 = vld [vmem:[#allocation9 + $0x64] sm:$0xf]
    %v6766 = vld [vmem:[#allocation9 + $0x68] sm:$0xf]
    %v6767 = vld [vmem:[#allocation9 + $0x6c] sm:$0xf]
    %v6768 = vld [vmem:[#allocation9 + $0x70] sm:$0xf]
    %v6769 = vld [vmem:[#allocation9 + $0x74] sm:$0xf]
    %v6770 = vld [vmem:[#allocation9 + $0x78] sm:$0xf]
    %v6771 = vld [vmem:[#allocation9 + $0x7c] sm:$0xf]
    %v6772 = vld [vmem:[#allocation10] sm:$0x1]
    %v6774 = vperm.slane %v6772, 0
    %v6808 = vunpack.c.l.b16 %v6740
    %v6809 = vunpack.c.l.b16 %v6741
    %v6810 = vunpack.c.l.b16 %v6742
    %v6811 = vunpack.c.l.b16 %v6743
    %v6812 = vunpack.c.l.b16 %v6744
    %v6813 = vunpack.c.l.b16 %v6745
    %v6814 = vunpack.c.l.b16 %v6746
    %v6815 = vunpack.c.l.b16 %v6747
    %v6816 = vunpack.c.l.b16 %v6748
    %v6817 = vunpack.c.l.b16 %v6749
    %v6818 = vunpack.c.l.b16 %v6750
    %v6819 = vunpack.c.l.b16 %v6751
    %v6820 = vunpack.c.l.b16 %v6752
    %v6821 = vunpack.c.l.b16 %v6753
    %v6822 = vunpack.c.l.b16 %v6754
    %v6823 = vunpack.c.l.b16 %v6755
    %v6824 = vunpack.c.l.b16 %v6756
    %v6825 = vunpack.c.l.b16 %v6757
    %v6826 = vunpack.c.l.b16 %v6758
    %v6827 = vunpack.c.l.b16 %v6759
    %v6828 = vunpack.c.l.b16 %v6760
    %v6829 = vunpack.c.l.b16 %v6761
    %v6830 = vunpack.c.l.b16 %v6762
    %v6831 = vunpack.c.l.b16 %v6763
    %v6832 = vunpack.c.l.b16 %v6764
    %v6833 = vunpack.c.l.b16 %v6765
    %v6834 = vunpack.c.l.b16 %v6766
    %v6835 = vunpack.c.l.b16 %v6767
    %v6836 = vunpack.c.l.b16 %v6768
    %v6837 = vunpack.c.l.b16 %v6769
    %v6838 = vunpack.c.l.b16 %v6770
    %v6839 = vunpack.c.l.b16 %v6771
    %v6840 = vpack.c.b16 %v6809, %v6808
    %v6841 = vpack.c.b16 %v6811, %v6810
    %v6842 = vpack.c.b16 %v6813, %v6812
    %v6843 = vpack.c.b16 %v6815, %v6814
    %v6844 = vpack.c.b16 %v6817, %v6816
    %v6845 = vpack.c.b16 %v6819, %v6818
    %v6846 = vpack.c.b16 %v6821, %v6820
    %v6847 = vpack.c.b16 %v6823, %v6822
    %v6848 = vpack.c.b16 %v6825, %v6824
    %v6849 = vpack.c.b16 %v6827, %v6826
    %v6850 = vpack.c.b16 %v6829, %v6828
    %v6851 = vpack.c.b16 %v6831, %v6830
    %v6852 = vpack.c.b16 %v6833, %v6832
    %v6853 = vpack.c.b16 %v6835, %v6834
    %v6854 = vpack.c.b16 %v6837, %v6836
    %v6855 = vpack.c.b16 %v6839, %v6838
    %6872 = vmatpush.bf16.msra.mxu0 %v6847
    %6873 = vmatpush.bf16.msra.mxu0 %v6846
    %6874 = vmatpush.bf16.msra.mxu0 %v6845
    %6875 = vmatpush.bf16.msra.mxu0 %v6844
    %6876 = vmatpush.bf16.msra.mxu0 %v6843
    %6877 = vmatpush.bf16.msra.mxu0 %v6842
    %6878 = vmatpush.bf16.msra.mxu0 %v6841
    %6879 = vmatpush.bf16.msra.mxu0 %v6840
    %6880 = vmatmul.bf16.gmra.mxu0 %v6738
    %v6881 = vpop.f32.mrf.mxu0
    %v6882 = vadd.f32 %v6774, %v6881
    %v6883 = vpop.f32.mrf.mxu0
    %v6884 = vadd.f32 %v6774, %v6883
    %6885 = vdwg.mxu0
    %6886 = vmatpush.bf16.msra.mxu0 %v6855
    %6887 = vmatpush.bf16.msra.mxu0 %v6854
    %6888 = vmatpush.bf16.msra.mxu0 %v6853
    %6889 = vmatpush.bf16.msra.mxu0 %v6852
    %6890 = vmatpush.bf16.msra.mxu0 %v6851
    %6891 = vmatpush.bf16.msra.mxu0 %v6850
    %6892 = vmatpush.bf16.msra.mxu0 %v6849
    %6893 = vmatpush.bf16.msra.mxu0 %v6848
    %6894 = vmatmul.bf16.gmra.mxu0 %v6739
    %v6895 = vpop.f32.mrf.mxu0
    %v6896 = vadd.f32 %v6882, %v6895
    %v6897 = vpop.f32.mrf.mxu0
    %v6898 = vadd.f32 %v6884, %v6897
    %6899 = vdwg.mxu0
    %6900 = vst [vmem:[%s7] sm:$0xff] %v6896
    %6901 = vst [vmem:[%s7 + $0x8] sm:$0xff] %v6898
    // Predicated region
    $region54: #{mlp_forward.1} parent=1 // pred_check
      _
    $region55: #{mlp_forward.1} parent=1 // pred_check_branch
      %6903 = sbr.rel (0) target = $region57
    $region56: #{mlp_forward.1} parent=1 // pred_region
      _
    $region57: #{mlp_forward.1} parent=1 // pred_fallthru
      _
    // Predicated region
    $region58: #{mlp_forward.1} parent=1 // pred_check
      _
    $region59: #{mlp_forward.1} parent=1 // pred_check_branch
      %6905 = sbr.rel (0) target = $region61
    $region60: #{mlp_forward.1} parent=1 // pred_region
      _
    $region61: #{mlp_forward.1} parent=1 // pred_fallthru
      _
    %6906 = vsyncpa [#allocation3], 1
    %6907 = vsyncpa [#allocation5], 1
    %6908 = vsyncpa [#allocation8], 1
    %6909 = vsyncpa [#allocation11], 1

</llo_original>
